<compile_context>
chip_gen: v7x
topology: tpu7x:2x2x1
jax: 0.10.0
libtpu: 0.0.40
codegen_flags: <defaults>
</compile_context>

<pallas_src>
import jax
import jax.numpy as jnp
from jax.experimental import pallas as pl
from jax.experimental.pallas import tpu as pltpu

KS = 3   # kernel_size
PAD = 1  # padding


def _convlstm_kernel(x_ref, h_ref, c_ref, w_ref, b_ref,
                     h_out_ref, c_out_ref, slab_ref):
    # x_ref   : (1, H, W, Cin)      f32   input for one batch element
    # h_ref   : (1, H, W, Ch)       f32   previous hidden state
    # c_ref   : (1, H, W, Ch)       f32   previous cell state
    # w_ref   : (3, 3, Ct, 4*Ch)    bf16  fused [f|i|o|c] conv weights (HWIO)
    # b_ref   : (1, 4*Ch)           f32   fused biases
    # slab_ref: (H+2, W+2, Ct)      bf16  VMEM scratch: zero-padded [x ; h]
    _, H, W, Ch = c_ref.shape
    Cin = x_ref.shape[-1]
    Ct = Cin + Ch
    C4 = 4 * Ch
    M = H * W

    # --- assemble the zero-padded bf16 [x ; h] slab in VMEM ------------------
    # (full zero fill is ~6 vregs of stores; cheaper/simpler than border-only)
    slab_ref[...] = jnp.zeros_like(slab_ref)
    slab_ref[pl.ds(PAD, H), pl.ds(PAD, W), pl.ds(0, Cin)] = (
        x_ref[0].astype(jnp.bfloat16))
    slab_ref[pl.ds(PAD, H), pl.ds(PAD, W), pl.ds(Cin, Ch)] = (
        h_ref[0].astype(jnp.bfloat16))

    # --- fused conv: one (M, Ct) @ (Ct, 4*Ch) bf16 matmul per tap ------------
    acc = jnp.broadcast_to(b_ref[...], (M, C4)).astype(jnp.float32)  # bias once
    for ky in range(KS):
        for kx in range(KS):
            win = slab_ref[pl.ds(ky, H), pl.ds(kx, W), :]            # (H, W, Ct) bf16
            win = win.reshape(M, Ct)
            acc = acc + jnp.dot(win, w_ref[ky, kx],
                                preferred_element_type=jnp.float32)

    # --- gates: one sigmoid over [f|i|o], one tanh over c~ (f32) -------------
    fio = jax.nn.sigmoid(acc[:, : 3 * Ch])
    f_t = fio[:, 0 * Ch: 1 * Ch]
    i_t = fio[:, 1 * Ch: 2 * Ch]
    o_t = fio[:, 2 * Ch: 3 * Ch]
    c_tilde = jnp.tanh(acc[:, 3 * Ch:])

    c_prev = c_ref[0].reshape(M, Ch)
    c_t = f_t * c_prev + i_t * c_tilde
    h_t = o_t * jnp.tanh(c_t)

    h_out_ref[0] = h_t.reshape(H, W, Ch)
    c_out_ref[0] = c_t.reshape(H, W, Ch)


@jax.jit
def unit_conv_lstm_nhwc(x, h_prev, c_prev, params):
    """ConvLSTM cell in NHWC.  Returns (h_t, c_t) in NHWC, f32."""
    B, H, W, Cin = x.shape
    Ch = h_prev.shape[-1]
    Ct = Cin + Ch
    C4 = 4 * Ch

    def w_hwio(w):  # nn.Conv2d OIHW (Ch, Ct, 3, 3) -> HWIO (3, 3, Ct, Ch)
        return jnp.transpose(w, (2, 3, 1, 0))

    # Fuse the four gate convs along the output-channel axis: N = 4*Ch = 128.
    w_all = jnp.concatenate(
        [w_hwio(params['wf']), w_hwio(params['wi']),
         w_hwio(params['wo']), w_hwio(params['wc'])],
        axis=-1).astype(jnp.bfloat16)                       # (3, 3, Ct, 4*Ch)
    b_all = jnp.concatenate(
        [params['bf'], params['bi'], params['bo'], params['bc']]
    ).reshape(1, C4).astype(jnp.float32)                    # (1, 4*Ch)

    x_spec = pl.BlockSpec((1, H, W, Cin), lambda b: (b, 0, 0, 0))
    h_spec = pl.BlockSpec((1, H, W, Ch), lambda b: (b, 0, 0, 0))
    c_spec = pl.BlockSpec((1, H, W, Ch), lambda b: (b, 0, 0, 0))
    w_spec = pl.BlockSpec((KS, KS, Ct, C4), lambda b: (0, 0, 0, 0))
    b_spec = pl.BlockSpec((1, C4), lambda b: (0, 0))
    out_spec = pl.BlockSpec((1, H, W, Ch), lambda b: (b, 0, 0, 0))

    h_t, c_t = pl.pallas_call(
        _convlstm_kernel,
        out_shape=(jax.ShapeDtypeStruct((B, H, W, Ch), jnp.float32),
                   jax.ShapeDtypeStruct((B, H, W, Ch), jnp.float32)),
        grid_spec=pltpu.PrefetchScalarGridSpec(
            num_scalar_prefetch=0,
            grid=(B,),
            in_specs=[x_spec, h_spec, c_spec, w_spec, b_spec],
            out_specs=[out_spec, out_spec],
            scratch_shapes=[
                pltpu.VMEM((H + 2 * PAD, W + 2 * PAD, Ct), jnp.bfloat16)],
        ),
        compiler_params=pltpu.CompilerParams(
            dimension_semantics=("parallel",)),
    )(x.astype(jnp.float32), h_prev.astype(jnp.float32),
      c_prev.astype(jnp.float32), w_all, b_all)
    return h_t, c_t


@jax.jit
def unit_conv_lstm(x_nchw, hidden, params):
    """Drop-in NCHW adapter matching unitConvLSTM.forward(x, (h, c))."""
    h_prev_nchw, c_prev_nchw = hidden
    x = jnp.transpose(x_nchw, (0, 2, 3, 1))
    h = jnp.transpose(h_prev_nchw, (0, 2, 3, 1))
    c = jnp.transpose(c_prev_nchw, (0, 2, 3, 1))
    h_t, c_t = unit_conv_lstm_nhwc(x, h, c, params)
    h_t = jnp.transpose(h_t, (0, 3, 1, 2))
    c_t = jnp.transpose(c_t, (0, 3, 1, 2))
    return h_t, (h_t, c_t)


def _reference(x, h_prev, c_prev, params):
    """Pure-JAX f32 reference (lax.conv) for correctness checking (NCHW)."""
    combined = jnp.concatenate([x, h_prev], axis=1)

    def conv(w, b):
        y = jax.lax.conv_general_dilated(
            combined, w, window_strides=(1, 1),
            padding=((PAD, PAD), (PAD, PAD)),
            dimension_numbers=('NCHW', 'OIHW', 'NCHW'))
        return y + b[None, :, None, None]

    f_t = jax.nn.sigmoid(conv(params['wf'], params['bf']))
    i_t = jax.nn.sigmoid(conv(params['wi'], params['bi']))
    o_t = jax.nn.sigmoid(conv(params['wo'], params['bo']))
    c_tilde = jnp.tanh(conv(params['wc'], params['bc']))
    c_t = f_t * c_prev + i_t * c_tilde
    h_t = o_t * jnp.tanh(c_t)
    return h_t, c_t


if __name__ == "__main__":
    B, C_in, C_hid, H, W = 2, 4, 32, 16, 16
    Ct = C_in + C_hid

    key = jax.random.PRNGKey(0)
    ks = jax.random.split(key, 11)
    x = jax.random.normal(ks[0], (B, C_in, H, W), jnp.float32)
    h_prev = jax.random.normal(ks[1], (B, C_hid, H, W), jnp.float32)
    c_prev = jax.random.normal(ks[2], (B, C_hid, H, W), jnp.float32)

    scale = 1.0 / jnp.sqrt(Ct * KS * KS)  # ~ nn.Conv2d default init scale
    params = {
        'wf': scale * jax.random.normal(ks[3], (C_hid, Ct, KS, KS), jnp.float32),
        'wi': scale * jax.random.normal(ks[4], (C_hid, Ct, KS, KS), jnp.float32),
        'wo': scale * jax.random.normal(ks[5], (C_hid, Ct, KS, KS), jnp.float32),
        'wc': scale * jax.random.normal(ks[6], (C_hid, Ct, KS, KS), jnp.float32),
        'bf': scale * jax.random.normal(ks[7], (C_hid,), jnp.float32),
        'bi': scale * jax.random.normal(ks[8], (C_hid,), jnp.float32),
        'bo': scale * jax.random.normal(ks[9], (C_hid,), jnp.float32),
        'bc': scale * jax.random.normal(ks[10], (C_hid,), jnp.float32),
    }

    h_t, (h_t2, c_t) = unit_conv_lstm(x, (h_prev, c_prev), params)
    jax.block_until_ready((h_t, c_t))

    h_ref, c_ref = _reference(x, h_prev, c_prev, params)
    # bf16 MXU operands -> slightly looser tolerance than pure-f32.
    assert jnp.allclose(h_t, h_ref, atol=2e-2, rtol=2e-2), \
        f"h mismatch, max abs diff {jnp.max(jnp.abs(h_t - h_ref))}"
    assert jnp.allclose(c_t, c_ref, atol=2e-2, rtol=2e-2), \
        f"c mismatch, max abs diff {jnp.max(jnp.abs(c_t - c_ref))}"

    print("KERNEL_OK")
</pallas_src>

<mosaic_0001>
module attributes {stable_mosaic.version = 11 : i64} {
  func.func @_convlstm_kernel(%arg0: i32, %arg1: memref<1x16x16x4xf32, #tpu.memory_space<vmem>>, %arg2: memref<1x16x16x32xf32, #tpu.memory_space<vmem>>, %arg3: memref<1x16x16x32xf32, #tpu.memory_space<vmem>>, %arg4: memref<3x3x36x128xbf16, #tpu.memory_space<vmem>>, %arg5: memref<1x128xf32, #tpu.memory_space<vmem>>, %arg6: memref<1x16x16x32xf32, #tpu.memory_space<vmem>>, %arg7: memref<1x16x16x32xf32, #tpu.memory_space<vmem>>, %arg8: memref<18x18x36xbf16, #tpu.memory_space<vmem>>) attributes {dimension_semantics = [#tpu.dimension_semantics<parallel>], iteration_bounds = array<i64: 2>, scalar_prefetch = 0 : i64, scratch_operands = 1 : i64, tpu.core_type = #tpu.core_type<tc>, window_params = [{transform_indices = @transform_0, window_bounds = array<i64: 1, 16, 16, 4>}, {transform_indices = @transform_1, window_bounds = array<i64: 1, 16, 16, 32>}, {transform_indices = @transform_2, window_bounds = array<i64: 1, 16, 16, 32>}, {pipeline_mode = #tpu.pipeline_mode<synchronous>, transform_indices = @transform_3, window_bounds = array<i64: 3, 3, 36, 128>}, {pipeline_mode = #tpu.pipeline_mode<synchronous>, transform_indices = @transform_4, window_bounds = array<i64: 1, 128>}, {transform_indices = @transform_5, window_bounds = array<i64: 1, 16, 16, 32>}, {transform_indices = @transform_6, window_bounds = array<i64: 1, 16, 16, 32>}]} {
    %cst = arith.constant 0.000000e+00 : bf16
    %0 = vector.broadcast %cst : bf16 to vector<18x18x36xbf16>
    %c0 = arith.constant 0 : index
    %c0_0 = arith.constant 0 : index
    %c0_1 = arith.constant 0 : index
    %1 = vector.load %arg8[%c0, %c0_0, %c0_1] : memref<18x18x36xbf16, #tpu.memory_space<vmem>>, vector<18x18x36xbf16>
    tpu.vector_store %arg8[%c0, %c0_0, %c0_1], %0 {strides = array<i32>} : memref<18x18x36xbf16, #tpu.memory_space<vmem>>, vector<18x18x36xbf16>,
    %c0_2 = arith.constant 0 : index
    %c0_3 = arith.constant 0 : index
    %c0_4 = arith.constant 0 : index
    %c0_5 = arith.constant 0 : index
    %2 = vector.load %arg1[%c0_2, %c0_3, %c0_4, %c0_5] : memref<1x16x16x4xf32, #tpu.memory_space<vmem>>, vector<1x16x16x4xf32>
    %3 = vector.shape_cast %2 : vector<1x16x16x4xf32> to vector<16x16x4xf32>
    %4 = arith.truncf %3 : vector<16x16x4xf32> to vector<16x16x4xbf16>
    %c1 = arith.constant 1 : index
    %c1_6 = arith.constant 1 : index
    %c0_7 = arith.constant 0 : index
    %5 = vector.load %arg8[%c1, %c1_6, %c0_7] : memref<18x18x36xbf16, #tpu.memory_space<vmem>>, vector<16x16x4xbf16>
    tpu.vector_store %arg8[%c1, %c1_6, %c0_7], %4 {strides = array<i32>} : memref<18x18x36xbf16, #tpu.memory_space<vmem>>, vector<16x16x4xbf16>,
    %c0_8 = arith.constant 0 : index
    %c0_9 = arith.constant 0 : index
    %c0_10 = arith.constant 0 : index
    %c0_11 = arith.constant 0 : index
    %6 = vector.load %arg2[%c0_8, %c0_9, %c0_10, %c0_11] : memref<1x16x16x32xf32, #tpu.memory_space<vmem>>, vector<1x16x16x32xf32>
    %7 = vector.shape_cast %6 : vector<1x16x16x32xf32> to vector<16x16x32xf32>
    %8 = arith.truncf %7 : vector<16x16x32xf32> to vector<16x16x32xbf16>
    %c1_12 = arith.constant 1 : index
    %c1_13 = arith.constant 1 : index
    %c4 = arith.constant 4 : index
    %9 = vector.load %arg8[%c1_12, %c1_13, %c4] : memref<18x18x36xbf16, #tpu.memory_space<vmem>>, vector<16x16x32xbf16>
    tpu.vector_store %arg8[%c1_12, %c1_13, %c4], %8 {strides = array<i32>} : memref<18x18x36xbf16, #tpu.memory_space<vmem>>, vector<16x16x32xbf16>,
    %c0_14 = arith.constant 0 : index
    %c0_15 = arith.constant 0 : index
    %10 = vector.load %arg5[%c0_14, %c0_15] : memref<1x128xf32, #tpu.memory_space<vmem>>, vector<1x128xf32>
    %11 = vector.shape_cast %10 : vector<1x128xf32> to vector<1x128xf32>
    %12 = vector.broadcast %11 : vector<1x128xf32> to vector<256x128xf32>
    %c0_16 = arith.constant 0 : index
    %c0_17 = arith.constant 0 : index
    %c0_18 = arith.constant 0 : index
    %13 = vector.load %arg8[%c0_16, %c0_17, %c0_18] : memref<18x18x36xbf16, #tpu.memory_space<vmem>>, vector<16x16x36xbf16>
    %14 = vector.shape_cast %13 : vector<16x16x36xbf16> to vector<256x36xbf16>
    %c0_19 = arith.constant 0 : index
    %c0_20 = arith.constant 0 : index
    %c0_21 = arith.constant 0 : index
    %c0_22 = arith.constant 0 : index
    %15 = vector.load %arg4[%c0_19, %c0_20, %c0_21, %c0_22] : memref<3x3x36x128xbf16, #tpu.memory_space<vmem>>, vector<1x1x36x128xbf16>
    %16 = vector.shape_cast %15 : vector<1x1x36x128xbf16> to vector<36x128xbf16>
    %cst_23 = arith.constant dense<0.000000e+00> : vector<256x128xf32>
    %17 = tpu.matmul %14, %16, %cst_23 {dimension_numbers = #tpu.dot_dimension_numbers<[1], [0], [0], [1], [0, 0, 1, 1], [], []>} : vector<256x36xbf16>, vector<36x128xbf16>, vector<256x128xf32> -> vector<256x128xf32>
    %18 = arith.addf %12, %17 : vector<256x128xf32>
    %c0_24 = arith.constant 0 : index
    %c1_25 = arith.constant 1 : index
    %c0_26 = arith.constant 0 : index
    %19 = vector.load %arg8[%c0_24, %c1_25, %c0_26] : memref<18x18x36xbf16, #tpu.memory_space<vmem>>, vector<16x16x36xbf16>
    %20 = vector.shape_cast %19 : vector<16x16x36xbf16> to vector<256x36xbf16>
    %c0_27 = arith.constant 0 : index
    %c1_28 = arith.constant 1 : index
    %c0_29 = arith.constant 0 : index
    %c0_30 = arith.constant 0 : index
    %21 = vector.load %arg4[%c0_27, %c1_28, %c0_29, %c0_30] : memref<3x3x36x128xbf16, #tpu.memory_space<vmem>>, vector<1x1x36x128xbf16>
    %22 = vector.shape_cast %21 : vector<1x1x36x128xbf16> to vector<36x128xbf16>
    %cst_31 = arith.constant dense<0.000000e+00> : vector<256x128xf32>
    %23 = tpu.matmul %20, %22, %cst_31 {dimension_numbers = #tpu.dot_dimension_numbers<[1], [0], [0], [1], [0, 0, 1, 1], [], []>} : vector<256x36xbf16>, vector<36x128xbf16>, vector<256x128xf32> -> vector<256x128xf32>
    %24 = arith.addf %18, %23 : vector<256x128xf32>
    %c0_32 = arith.constant 0 : index
    %c2 = arith.constant 2 : index
    %c0_33 = arith.constant 0 : index
    %25 = vector.load %arg8[%c0_32, %c2, %c0_33] : memref<18x18x36xbf16, #tpu.memory_space<vmem>>, vector<16x16x36xbf16>
    %26 = vector.shape_cast %25 : vector<16x16x36xbf16> to vector<256x36xbf16>
    %c0_34 = arith.constant 0 : index
    %c2_35 = arith.constant 2 : index
    %c0_36 = arith.constant 0 : index
    %c0_37 = arith.constant 0 : index
    %27 = vector.load %arg4[%c0_34, %c2_35, %c0_36, %c0_37] : memref<3x3x36x128xbf16, #tpu.memory_space<vmem>>, vector<1x1x36x128xbf16>
    %28 = vector.shape_cast %27 : vector<1x1x36x128xbf16> to vector<36x128xbf16>
    %cst_38 = arith.constant dense<0.000000e+00> : vector<256x128xf32>
    %29 = tpu.matmul %26, %28, %cst_38 {dimension_numbers = #tpu.dot_dimension_numbers<[1], [0], [0], [1], [0, 0, 1, 1], [], []>} : vector<256x36xbf16>, vector<36x128xbf16>, vector<256x128xf32> -> vector<256x128xf32>
    %30 = arith.addf %24, %29 : vector<256x128xf32>
    %c1_39 = arith.constant 1 : index
    %c0_40 = arith.constant 0 : index
    %c0_41 = arith.constant 0 : index
    %31 = vector.load %arg8[%c1_39, %c0_40, %c0_41] : memref<18x18x36xbf16, #tpu.memory_space<vmem>>, vector<16x16x36xbf16>
    %32 = vector.shape_cast %31 : vector<16x16x36xbf16> to vector<256x36xbf16>
    %c1_42 = arith.constant 1 : index
    %c0_43 = arith.constant 0 : index
    %c0_44 = arith.constant 0 : index
    %c0_45 = arith.constant 0 : index
    %33 = vector.load %arg4[%c1_42, %c0_43, %c0_44, %c0_45] : memref<3x3x36x128xbf16, #tpu.memory_space<vmem>>, vector<1x1x36x128xbf16>
    %34 = vector.shape_cast %33 : vector<1x1x36x128xbf16> to vector<36x128xbf16>
    %cst_46 = arith.constant dense<0.000000e+00> : vector<256x128xf32>
    %35 = tpu.matmul %32, %34, %cst_46 {dimension_numbers = #tpu.dot_dimension_numbers<[1], [0], [0], [1], [0, 0, 1, 1], [], []>} : vector<256x36xbf16>, vector<36x128xbf16>, vector<256x128xf32> -> vector<256x128xf32>
    %36 = arith.addf %30, %35 : vector<256x128xf32>
    %c1_47 = arith.constant 1 : index
    %c1_48 = arith.constant 1 : index
    %c0_49 = arith.constant 0 : index
    %37 = vector.load %arg8[%c1_47, %c1_48, %c0_49] : memref<18x18x36xbf16, #tpu.memory_space<vmem>>, vector<16x16x36xbf16>
    %38 = vector.shape_cast %37 : vector<16x16x36xbf16> to vector<256x36xbf16>
    %c1_50 = arith.constant 1 : index
    %c1_51 = arith.constant 1 : index
    %c0_52 = arith.constant 0 : index
    %c0_53 = arith.constant 0 : index
    %39 = vector.load %arg4[%c1_50, %c1_51, %c0_52, %c0_53] : memref<3x3x36x128xbf16, #tpu.memory_space<vmem>>, vector<1x1x36x128xbf16>
    %40 = vector.shape_cast %39 : vector<1x1x36x128xbf16> to vector<36x128xbf16>
    %cst_54 = arith.constant dense<0.000000e+00> : vector<256x128xf32>
    %41 = tpu.matmul %38, %40, %cst_54 {dimension_numbers = #tpu.dot_dimension_numbers<[1], [0], [0], [1], [0, 0, 1, 1], [], []>} : vector<256x36xbf16>, vector<36x128xbf16>, vector<256x128xf32> -> vector<256x128xf32>
    %42 = arith.addf %36, %41 : vector<256x128xf32>
    %c1_55 = arith.constant 1 : index
    %c2_56 = arith.constant 2 : index
    %c0_57 = arith.constant 0 : index
    %43 = vector.load %arg8[%c1_55, %c2_56, %c0_57] : memref<18x18x36xbf16, #tpu.memory_space<vmem>>, vector<16x16x36xbf16>
    %44 = vector.shape_cast %43 : vector<16x16x36xbf16> to vector<256x36xbf16>
    %c1_58 = arith.constant 1 : index
    %c2_59 = arith.constant 2 : index
    %c0_60 = arith.constant 0 : index
    %c0_61 = arith.constant 0 : index
    %45 = vector.load %arg4[%c1_58, %c2_59, %c0_60, %c0_61] : memref<3x3x36x128xbf16, #tpu.memory_space<vmem>>, vector<1x1x36x128xbf16>
    %46 = vector.shape_cast %45 : vector<1x1x36x128xbf16> to vector<36x128xbf16>
    %cst_62 = arith.constant dense<0.000000e+00> : vector<256x128xf32>
    %47 = tpu.matmul %44, %46, %cst_62 {dimension_numbers = #tpu.dot_dimension_numbers<[1], [0], [0], [1], [0, 0, 1, 1], [], []>} : vector<256x36xbf16>, vector<36x128xbf16>, vector<256x128xf32> -> vector<256x128xf32>
    %48 = arith.addf %42, %47 : vector<256x128xf32>
    %c2_63 = arith.constant 2 : index
    %c0_64 = arith.constant 0 : index
    %c0_65 = arith.constant 0 : index
    %49 = vector.load %arg8[%c2_63, %c0_64, %c0_65] : memref<18x18x36xbf16, #tpu.memory_space<vmem>>, vector<16x16x36xbf16>
    %50 = vector.shape_cast %49 : vector<16x16x36xbf16> to vector<256x36xbf16>
    %c2_66 = arith.constant 2 : index
    %c0_67 = arith.constant 0 : index
    %c0_68 = arith.constant 0 : index
    %c0_69 = arith.constant 0 : index
    %51 = vector.load %arg4[%c2_66, %c0_67, %c0_68, %c0_69] : memref<3x3x36x128xbf16, #tpu.memory_space<vmem>>, vector<1x1x36x128xbf16>
    %52 = vector.shape_cast %51 : vector<1x1x36x128xbf16> to vector<36x128xbf16>
    %cst_70 = arith.constant dense<0.000000e+00> : vector<256x128xf32>
    %53 = tpu.matmul %50, %52, %cst_70 {dimension_numbers = #tpu.dot_dimension_numbers<[1], [0], [0], [1], [0, 0, 1, 1], [], []>} : vector<256x36xbf16>, vector<36x128xbf16>, vector<256x128xf32> -> vector<256x128xf32>
    %54 = arith.addf %48, %53 : vector<256x128xf32>
    %c2_71 = arith.constant 2 : index
    %c1_72 = arith.constant 1 : index
    %c0_73 = arith.constant 0 : index
    %55 = vector.load %arg8[%c2_71, %c1_72, %c0_73] : memref<18x18x36xbf16, #tpu.memory_space<vmem>>, vector<16x16x36xbf16>
    %56 = vector.shape_cast %55 : vector<16x16x36xbf16> to vector<256x36xbf16>
    %c2_74 = arith.constant 2 : index
    %c1_75 = arith.constant 1 : index
    %c0_76 = arith.constant 0 : index
    %c0_77 = arith.constant 0 : index
    %57 = vector.load %arg4[%c2_74, %c1_75, %c0_76, %c0_77] : memref<3x3x36x128xbf16, #tpu.memory_space<vmem>>, vector<1x1x36x128xbf16>
    %58 = vector.shape_cast %57 : vector<1x1x36x128xbf16> to vector<36x128xbf16>
    %cst_78 = arith.constant dense<0.000000e+00> : vector<256x128xf32>
    %59 = tpu.matmul %56, %58, %cst_78 {dimension_numbers = #tpu.dot_dimension_numbers<[1], [0], [0], [1], [0, 0, 1, 1], [], []>} : vector<256x36xbf16>, vector<36x128xbf16>, vector<256x128xf32> -> vector<256x128xf32>
    %60 = arith.addf %54, %59 : vector<256x128xf32>
    %c2_79 = arith.constant 2 : index
    %c2_80 = arith.constant 2 : index
    %c0_81 = arith.constant 0 : index
    %61 = vector.load %arg8[%c2_79, %c2_80, %c0_81] : memref<18x18x36xbf16, #tpu.memory_space<vmem>>, vector<16x16x36xbf16>
    %62 = vector.shape_cast %61 : vector<16x16x36xbf16> to vector<256x36xbf16>
    %c2_82 = arith.constant 2 : index
    %c2_83 = arith.constant 2 : index
    %c0_84 = arith.constant 0 : index
    %c0_85 = arith.constant 0 : index
    %63 = vector.load %arg4[%c2_82, %c2_83, %c0_84, %c0_85] : memref<3x3x36x128xbf16, #tpu.memory_space<vmem>>, vector<1x1x36x128xbf16>
    %64 = vector.shape_cast %63 : vector<1x1x36x128xbf16> to vector<36x128xbf16>
    %cst_86 = arith.constant dense<0.000000e+00> : vector<256x128xf32>
    %65 = tpu.matmul %62, %64, %cst_86 {dimension_numbers = #tpu.dot_dimension_numbers<[1], [0], [0], [1], [0, 0, 1, 1], [], []>} : vector<256x36xbf16>, vector<36x128xbf16>, vector<256x128xf32> -> vector<256x128xf32>
    %66 = arith.addf %60, %65 : vector<256x128xf32>
    %67 = vector.extract_strided_slice %66 {offsets = [0, 0], sizes = [256, 96], strides = [1, 1]} : vector<256x128xf32> to vector<256x96xf32>
    %68 = arith.negf %67 : vector<256x96xf32>
    %69 = math.exp %68 : vector<256x96xf32>
    %cst_87 = arith.constant 1.000000e+00 : f32
    %70 = vector.broadcast %cst_87 : f32 to vector<256x96xf32>
    %71 = arith.addf %70, %69 : vector<256x96xf32>
    %72 = arith.divf %70, %71 : vector<256x96xf32>
    %73 = vector.extract_strided_slice %72 {offsets = [0, 0], sizes = [256, 32], strides = [1, 1]} : vector<256x96xf32> to vector<256x32xf32>
    %74 = vector.extract_strided_slice %72 {offsets = [0, 32], sizes = [256, 32], strides = [1, 1]} : vector<256x96xf32> to vector<256x32xf32>
    %75 = vector.extract_strided_slice %72 {offsets = [0, 64], sizes = [256, 32], strides = [1, 1]} : vector<256x96xf32> to vector<256x32xf32>
    %76 = vector.extract_strided_slice %66 {offsets = [0, 96], sizes = [256, 32], strides = [1, 1]} : vector<256x128xf32> to vector<256x32xf32>
    %77 = math.tanh %76 : vector<256x32xf32>
    %c0_88 = arith.constant 0 : index
    %c0_89 = arith.constant 0 : index
    %c0_90 = arith.constant 0 : index
    %c0_91 = arith.constant 0 : index
    %78 = vector.load %arg3[%c0_88, %c0_89, %c0_90, %c0_91] : memref<1x16x16x32xf32, #tpu.memory_space<vmem>>, vector<1x16x16x32xf32>
    %79 = vector.shape_cast %78 : vector<1x16x16x32xf32> to vector<16x16x32xf32>
    %80 = vector.shape_cast %79 : vector<16x16x32xf32> to vector<256x32xf32>
    %81 = arith.mulf %73, %80 : vector<256x32xf32>
    %82 = arith.mulf %74, %77 : vector<256x32xf32>
    %83 = arith.addf %81, %82 : vector<256x32xf32>
    %84 = math.tanh %83 : vector<256x32xf32>
    %85 = arith.mulf %75, %84 : vector<256x32xf32>
    %86 = vector.shape_cast %85 : vector<256x32xf32> to vector<16x16x32xf32>
    %c0_92 = arith.constant 0 : index
    %c0_93 = arith.constant 0 : index
    %c0_94 = arith.constant 0 : index
    %c0_95 = arith.constant 0 : index
    %87 = vector.load %arg6[%c0_92, %c0_93, %c0_94, %c0_95] : memref<1x16x16x32xf32, #tpu.memory_space<vmem>>, vector<1x16x16x32xf32>
    %88 = vector.shape_cast %87 : vector<1x16x16x32xf32> to vector<16x16x32xf32>
    %89 = vector.shape_cast %86 : vector<16x16x32xf32> to vector<1x16x16x32xf32>
    tpu.vector_store %arg6[%c0_92, %c0_93, %c0_94, %c0_95], %89 {strides = array<i32>} : memref<1x16x16x32xf32, #tpu.memory_space<vmem>>, vector<1x16x16x32xf32>,
    %90 = vector.shape_cast %83 : vector<256x32xf32> to vector<16x16x32xf32>
    %c0_96 = arith.constant 0 : index
    %c0_97 = arith.constant 0 : index
    %c0_98 = arith.constant 0 : index
    %c0_99 = arith.constant 0 : index
    %91 = vector.load %arg7[%c0_96, %c0_97, %c0_98, %c0_99] : memref<1x16x16x32xf32, #tpu.memory_space<vmem>>, vector<1x16x16x32xf32>
    %92 = vector.shape_cast %91 : vector<1x16x16x32xf32> to vector<16x16x32xf32>
    %93 = vector.shape_cast %90 : vector<16x16x32xf32> to vector<1x16x16x32xf32>
    tpu.vector_store %arg7[%c0_96, %c0_97, %c0_98, %c0_99], %93 {strides = array<i32>} : memref<1x16x16x32xf32, #tpu.memory_space<vmem>>, vector<1x16x16x32xf32>,
    return
  }
  func.func @transform_0(%arg0: i32) -> (i32, i32, i32, i32) {
    %c0_i32 = arith.constant 0 : i32
    %c0_i32_0 = arith.constant 0 : i32
    %c0_i32_1 = arith.constant 0 : i32
    %c0_i32_2 = arith.constant 0 : i32
    return %arg0, %c0_i32, %c0_i32_0, %c0_i32_1 : i32, i32, i32, i32
  }
  func.func @transform_1(%arg0: i32) -> (i32, i32, i32, i32) {
    %c0_i32 = arith.constant 0 : i32
    %c0_i32_0 = arith.constant 0 : i32
    %c0_i32_1 = arith.constant 0 : i32
    %c0_i32_2 = arith.constant 0 : i32
    return %arg0, %c0_i32, %c0_i32_0, %c0_i32_1 : i32, i32, i32, i32
  }
  func.func @transform_2(%arg0: i32) -> (i32, i32, i32, i32) {
    %c0_i32 = arith.constant 0 : i32
    %c0_i32_0 = arith.constant 0 : i32
    %c0_i32_1 = arith.constant 0 : i32
    %c0_i32_2 = arith.constant 0 : i32
    return %arg0, %c0_i32, %c0_i32_0, %c0_i32_1 : i32, i32, i32, i32
  }
  func.func @transform_3(%arg0: i32) -> (i32, i32, i32, i32) {
    %c0_i32 = arith.constant 0 : i32
    %c0_i32_0 = arith.constant 0 : i32
    %c0_i32_1 = arith.constant 0 : i32
    %c0_i32_2 = arith.constant 0 : i32
    %c0_i32_3 = arith.constant 0 : i32
    return %c0_i32, %c0_i32_0, %c0_i32_1, %c0_i32_2 : i32, i32, i32, i32
  }
  func.func @transform_4(%arg0: i32) -> (i32, i32) {
    %c0_i32 = arith.constant 0 : i32
    %c0_i32_0 = arith.constant 0 : i32
    %c0_i32_1 = arith.constant 0 : i32
    return %c0_i32, %c0_i32_0 : i32, i32
  }
  func.func @transform_5(%arg0: i32) -> (i32, i32, i32, i32) {
    %c0_i32 = arith.constant 0 : i32
    %c0_i32_0 = arith.constant 0 : i32
    %c0_i32_1 = arith.constant 0 : i32
    %c0_i32_2 = arith.constant 0 : i32
    return %arg0, %c0_i32, %c0_i32_0, %c0_i32_1 : i32, i32, i32, i32
  }
  func.func @transform_6(%arg0: i32) -> (i32, i32, i32, i32) {
    %c0_i32 = arith.constant 0 : i32
    %c0_i32_0 = arith.constant 0 : i32
    %c0_i32_1 = arith.constant 0 : i32
    %c0_i32_2 = arith.constant 0 : i32
    return %arg0, %c0_i32, %c0_i32_0, %c0_i32_1 : i32, i32, i32, i32
  }
}

</mosaic_0001>

<llo_original>
// kernel: unit_conv_lstm_nhwc.1
$region0: #{unit_conv_lstm_nhwc.1}
  #allocation0 [shape = 'u32[]', space=smem, size = 0x4, offset = 0x4, fixed_abs, tag = 'smem constant byte address 0x4 - core index']
  #allocation1 [shape = 'u32[144,128]{1,0:T(1,128)}', space=vmem, size = 0x12000, scoped, tag = 'internal scratch']
  #allocation2 [shape = 'bf16[18,18,36]{2,1,0:T(8,128)(2,1)}', space=vmem, size = 0x1b000, scoped, tag = 'scratch operand']
  %s0 = inlined_call_operand.vmem [shape: f32[2,16,16,4], index: 0, kind: input, shape index: {}]
  %s1 = inlined_call_operand.vmem [shape: f32[2,16,16,32], index: 1, kind: input, shape index: {}]
  %s2 = inlined_call_operand.vmem [shape: f32[2,16,16,32], index: 2, kind: input, shape index: {}]
  %s3 = inlined_call_operand.vmem [shape: bf16[3,3,36,128], index: 3, kind: input, shape index: {}]
  %s4 = inlined_call_operand.vmem [shape: f32[1,128], index: 4, kind: input, shape index: {}]
  %s5 = inlined_call_operand.hbm [shape: f32[2,16,16,32], index: 5, kind: output, shape index: {0}]
  %s6 = inlined_call_operand.hbm [shape: f32[2,16,16,32], index: 6, kind: output, shape index: {1}]
  %7 = xla_tuple %s5, %s6
  %s8 = sld [smem:[#allocation0]]
  $region61: #{unit_conv_lstm_nhwc.1} parent=0
    _
  %s10 = ssub.s32 1, %s8
  %s11 = scalar_select 0, %s10, %s8
  $region1: #{unit_conv_lstm_nhwc.1} parent=0
    #allocation3 [shape = 'u8[262144]{0}', space=vmem, size = 0x40000, scoped, tag = 'output window, operand 0']
    #allocation4 [shape = 's32[2]{0}', space=sflag, size = 0x8, scoped, tag = 'scoped memory for unit_conv_lstm_nhwc.1']
    #allocation5 [shape = 'u8[262144]{0}', space=vmem, size = 0x40000, scoped, tag = 'output window, operand 1']
    #allocation6 [shape = 's32[2]{0}', space=sflag, size = 0x8, scoped, tag = 'scoped memory for unit_conv_lstm_nhwc.1']
    %12 = vsyncpa [#allocation4], 0
    %s13 = scalar_lea.sflag [#allocation4], 1
    %14 = vsyncpa %s13, 0
    %15 = vsyncpa [#allocation6], 0
    %s16 = scalar_lea.sflag [#allocation6], 1
    %17 = vsyncpa %s16, 0
    loop: start=0, step=1, limit=4
    $region2: #{unit_conv_lstm_nhwc.1} parent=1 // loop_pre_header
      _
    $region3: #{unit_conv_lstm_nhwc.1} parent=1 // loop_header
      %s19 = sphi 0, %s23
      %p20 = scmp.ge.s32.totalorder %s19, 4
      %s29 = sphi 0, %s31
      %s32 = sphi 0, %s29
      %s33 = sphi 0, %s32
      %s49 = sphi 0, %s33
      %s55 = sphi 0, %s57
      %s58 = sphi 0, %s55
      %s59 = sphi 0, %s58
      %s75 = sphi 0, %s59
      %s81 = sphi 0, %s83
      %s84 = sphi 0, %s81
      %s85 = sphi 0, %s84
      %s101 = sphi 0, %s85
      %s105 = sphi 0, %s105
      %s107 = sphi 0, %s105
      %s108 = sphi 0, %s107
      %s122 = sphi 0, %s108
      %s126 = sphi 0, %s126
      %s128 = sphi 0, %s126
      %s129 = sphi 0, %s128
      %s143 = sphi 0, %s129
      %s149 = sphi 0, %s151
      %s152 = sphi 0, %s149
      %s153 = sphi 0, %s152
      %s169 = sphi 0, %s153
      %s175 = sphi 0, %s177
      %s178 = sphi 0, %s175
      %s179 = sphi 0, %s178
      %s195 = sphi 0, %s179
    $region4: #{unit_conv_lstm_nhwc.1} parent=1 // loop_header_branch
      %22 = sbr.rel (%p20) target = $region8
    $region5: #{unit_conv_lstm_nhwc.1} parent=1 // loop_body
      %s24 = ssub.s32 %s19, 1
      %s25 = ssub.s32 %s19, 2
      %s26 = sadd.s32 %s19, 1
      %s27 = ssub.s32 %s19, %s26
      %p28 = scmp.eq.s32.totalorder %s27, 0
      %s30 = sadd.s32 %s29, 1
      %s31 = scalar_select %p28, %s29, %s30
      %p34 = pneg %p28
      %p35 = scmp.eq.s32.totalorder %s19, 1
      %p36 = por %p34, %p35
      %p37 = scmp.ne.s32.totalorder %s29, %s32
      %p38 = scmp.eq.s32.totalorder %s19, 0
      %p39 = por %p37, %p38
      %p40 = scmp.ne.s32.totalorder %s29, %s32
      %p41 = scmp.eq.s32.totalorder %s24, 1
      %p42 = por %p40, %p41
      %p43 = scmp.ne.s32.totalorder %s32, %s33
      %p44 = scmp.eq.s32.totalorder %s24, 0
      %p45 = por %p43, %p44
      %p46 = scmp.ne.s32.totalorder %s32, %s33
      %p47 = scmp.eq.s32.totalorder %s25, 1
      %p48 = por %p46, %p47
      %p50 = scmp.ne.s32.totalorder %s33, %s49
      %p51 = scmp.eq.s32.totalorder %s25, 0
      %p52 = por %p50, %p51
      %s53 = ssub.s32 %s19, %s26
      %p54 = scmp.eq.s32.totalorder %s53, 0
      %s56 = sadd.s32 %s55, 1
      %s57 = scalar_select %p54, %s55, %s56
      %p60 = pneg %p54
      %p61 = scmp.eq.s32.totalorder %s19, 1
      %p62 = por %p60, %p61
      %p63 = scmp.ne.s32.totalorder %s55, %s58
      %p64 = scmp.eq.s32.totalorder %s19, 0
      %p65 = por %p63, %p64
      %p66 = scmp.ne.s32.totalorder %s55, %s58
      %p67 = scmp.eq.s32.totalorder %s24, 1
      %p68 = por %p66, %p67
      %p69 = scmp.ne.s32.totalorder %s58, %s59
      %p70 = scmp.eq.s32.totalorder %s24, 0
      %p71 = por %p69, %p70
      %p72 = scmp.ne.s32.totalorder %s58, %s59
      %p73 = scmp.eq.s32.totalorder %s25, 1
      %p74 = por %p72, %p73
      %p76 = scmp.ne.s32.totalorder %s59, %s75
      %p77 = scmp.eq.s32.totalorder %s25, 0
      %p78 = por %p76, %p77
      %s79 = ssub.s32 %s19, %s26
      %p80 = scmp.eq.s32.totalorder %s79, 0
      %s82 = sadd.s32 %s81, 1
      %s83 = scalar_select %p80, %s81, %s82
      %p86 = pneg %p80
      %p87 = scmp.eq.s32.totalorder %s19, 1
      %p88 = por %p86, %p87
      %p89 = scmp.ne.s32.totalorder %s81, %s84
      %p90 = scmp.eq.s32.totalorder %s19, 0
      %p91 = por %p89, %p90
      %p92 = scmp.ne.s32.totalorder %s81, %s84
      %p93 = scmp.eq.s32.totalorder %s24, 1
      %p94 = por %p92, %p93
      %p95 = scmp.ne.s32.totalorder %s84, %s85
      %p96 = scmp.eq.s32.totalorder %s24, 0
      %p97 = por %p95, %p96
      %p98 = scmp.ne.s32.totalorder %s84, %s85
      %p99 = scmp.eq.s32.totalorder %s25, 1
      %p100 = por %p98, %p99
      %p102 = scmp.ne.s32.totalorder %s85, %s101
      %p103 = scmp.eq.s32.totalorder %s25, 0
      %p104 = por %p102, %p103
      %s106 = sadd.s32 %s105, 1
      %p109 = scmp.eq.s32.totalorder %s19, 1
      %p110 = scmp.ne.s32.totalorder %s105, %s107
      %p111 = scmp.eq.s32.totalorder %s19, 0
      %p112 = por %p110, %p111
      %p113 = scmp.ne.s32.totalorder %s105, %s107
      %p114 = scmp.eq.s32.totalorder %s24, 1
      %p115 = por %p113, %p114
      %p116 = scmp.ne.s32.totalorder %s107, %s108
      %p117 = scmp.eq.s32.totalorder %s24, 0
      %p118 = por %p116, %p117
      %p119 = scmp.ne.s32.totalorder %s107, %s108
      %p120 = scmp.eq.s32.totalorder %s25, 1
      %p121 = por %p119, %p120
      %p123 = scmp.ne.s32.totalorder %s108, %s122
      %p124 = scmp.eq.s32.totalorder %s25, 0
      %p125 = por %p123, %p124
      %s127 = sadd.s32 %s126, 1
      %p130 = scmp.eq.s32.totalorder %s19, 1
      %p131 = scmp.ne.s32.totalorder %s126, %s128
      %p132 = scmp.eq.s32.totalorder %s19, 0
      %p133 = por %p131, %p132
      %p134 = scmp.ne.s32.totalorder %s126, %s128
      %p135 = scmp.eq.s32.totalorder %s24, 1
      %p136 = por %p134, %p135
      %p137 = scmp.ne.s32.totalorder %s128, %s129
      %p138 = scmp.eq.s32.totalorder %s24, 0
      %p139 = por %p137, %p138
      %p140 = scmp.ne.s32.totalorder %s128, %s129
      %p141 = scmp.eq.s32.totalorder %s25, 1
      %p142 = por %p140, %p141
      %p144 = scmp.ne.s32.totalorder %s129, %s143
      %p145 = scmp.eq.s32.totalorder %s25, 0
      %p146 = por %p144, %p145
      %s147 = ssub.s32 %s19, %s26
      %p148 = scmp.eq.s32.totalorder %s147, 0
      %s150 = sadd.s32 %s149, 1
      %s151 = scalar_select %p148, %s149, %s150
      %p154 = pneg %p148
      %p155 = scmp.eq.s32.totalorder %s19, 1
      %p156 = por %p154, %p155
      %p157 = scmp.ne.s32.totalorder %s149, %s152
      %p158 = scmp.eq.s32.totalorder %s19, 0
      %p159 = por %p157, %p158
      %p160 = scmp.ne.s32.totalorder %s149, %s152
      %p161 = scmp.eq.s32.totalorder %s24, 1
      %p162 = por %p160, %p161
      %p163 = scmp.ne.s32.totalorder %s152, %s153
      %p164 = scmp.eq.s32.totalorder %s24, 0
      %p165 = por %p163, %p164
      %p166 = scmp.ne.s32.totalorder %s152, %s153
      %p167 = scmp.eq.s32.totalorder %s25, 1
      %p168 = por %p166, %p167
      %p170 = scmp.ne.s32.totalorder %s153, %s169
      %p171 = scmp.eq.s32.totalorder %s25, 0
      %p172 = por %p170, %p171
      %s173 = ssub.s32 %s19, %s26
      %p174 = scmp.eq.s32.totalorder %s173, 0
      %s176 = sadd.s32 %s175, 1
      %s177 = scalar_select %p174, %s175, %s176
      %p180 = pneg %p174
      %p181 = scmp.eq.s32.totalorder %s19, 1
      %p182 = por %p180, %p181
      %p183 = scmp.ne.s32.totalorder %s175, %s178
      %p184 = scmp.eq.s32.totalorder %s19, 0
      %p185 = por %p183, %p184
      %p186 = scmp.ne.s32.totalorder %s175, %s178
      %p187 = scmp.eq.s32.totalorder %s24, 1
      %p188 = por %p186, %p187
      %p189 = scmp.ne.s32.totalorder %s178, %s179
      %p190 = scmp.eq.s32.totalorder %s24, 0
      %p191 = por %p189, %p190
      %p192 = scmp.ne.s32.totalorder %s178, %s179
      %p193 = scmp.eq.s32.totalorder %s25, 1
      %p194 = por %p192, %p193
      %p196 = scmp.ne.s32.totalorder %s179, %s195
      %p197 = scmp.eq.s32.totalorder %s25, 0
      %p198 = por %p196, %p197
      %p199 = scmp.le.s32.totalorder 1, %s19
      %p200 = scmp.lt.s32.totalorder %s19, 3
      %p201 = pnand %p199, %p200
      %p202 = pneg %p201
      // Predicated region
      $region9: #{unit_conv_lstm_nhwc.1} parent=5 // pred_check
        _
      $region10: #{unit_conv_lstm_nhwc.1} parent=5 // pred_check_branch
        %204 = sbr.rel (%p201) target = $region12
      $region11: #{unit_conv_lstm_nhwc.1} parent=5 // pred_region
        %s205 = ssub.s32 %s19, 1
        // Predicated region
        $region13: #{unit_conv_lstm_nhwc.1} parent=11 // pred_check
          %p206 = pneg %p118
        $region14: #{unit_conv_lstm_nhwc.1} parent=11 // pred_check_branch
          %208 = sbr.rel (%p206) target = $region16
        $region15: #{unit_conv_lstm_nhwc.1} parent=11 // pred_region
          _
        $region16: #{unit_conv_lstm_nhwc.1} parent=11 // pred_fallthru
          _
        // Predicated region
        $region17: #{unit_conv_lstm_nhwc.1} parent=11 // pred_check
          %p209 = pneg %p139
        $region18: #{unit_conv_lstm_nhwc.1} parent=11 // pred_check_branch
          %211 = sbr.rel (%p209) target = $region20
        $region19: #{unit_conv_lstm_nhwc.1} parent=11 // pred_region
          _
        $region20: #{unit_conv_lstm_nhwc.1} parent=11 // pred_fallthru
          _
      $region12: #{unit_conv_lstm_nhwc.1} parent=5 // pred_fallthru
        _
      %p212 = scmp.lt.s32.totalorder %s19, 2
      // Predicated region
      $region21: #{unit_conv_lstm_nhwc.1} parent=5 // pred_check
        %p213 = pneg %p212
      $region22: #{unit_conv_lstm_nhwc.1} parent=5 // pred_check_branch
        %215 = sbr.rel (%p213) target = $region24
      $region23: #{unit_conv_lstm_nhwc.1} parent=5 // pred_region
        // Predicated region
        $region25: #{unit_conv_lstm_nhwc.1} parent=23 // pred_check
          %p216 = pneg %p39
        $region26: #{unit_conv_lstm_nhwc.1} parent=23 // pred_check_branch
          %218 = sbr.rel (%p216) target = $region28
        $region27: #{unit_conv_lstm_nhwc.1} parent=23 // pred_region
          %p219 = scmp.lt.s32.totalorder %s19, 1
          %s220 = scalar_select %p219, %s19, 1
          %s221 = smul.addr %s220, 32
          %s222 = smul.addr %s221, 8
          %s223 = scalar_lea.vmem %s0, %s222
        $region28: #{unit_conv_lstm_nhwc.1} parent=23 // pred_fallthru
          _
        // Predicated region
        $region29: #{unit_conv_lstm_nhwc.1} parent=23 // pred_check
          %p224 = pneg %p65
        $region30: #{unit_conv_lstm_nhwc.1} parent=23 // pred_check_branch
          %226 = sbr.rel (%p224) target = $region32
        $region31: #{unit_conv_lstm_nhwc.1} parent=23 // pred_region
          %p227 = scmp.lt.s32.totalorder %s19, 1
          %s228 = scalar_select %p227, %s19, 1
          %s229 = smul.addr %s228, 32
          %s230 = smul.addr %s229, 8
          %s231 = scalar_lea.vmem %s1, %s230
        $region32: #{unit_conv_lstm_nhwc.1} parent=23 // pred_fallthru
          _
        // Predicated region
        $region33: #{unit_conv_lstm_nhwc.1} parent=23 // pred_check
          %p232 = pneg %p91
        $region34: #{unit_conv_lstm_nhwc.1} parent=23 // pred_check_branch
          %234 = sbr.rel (%p232) target = $region36
        $region35: #{unit_conv_lstm_nhwc.1} parent=23 // pred_region
          %p235 = scmp.lt.s32.totalorder %s19, 1
          %s236 = scalar_select %p235, %s19, 1
          %s237 = smul.addr %s236, 32
          %s238 = smul.addr %s237, 8
          %s239 = scalar_lea.vmem %s2, %s238
        $region36: #{unit_conv_lstm_nhwc.1} parent=23 // pred_fallthru
          _
      $region24: #{unit_conv_lstm_nhwc.1} parent=5 // pred_fallthru
        _
      %p240 = scmp.le.s32.totalorder 1, %s19
      %p241 = scmp.lt.s32.totalorder %s19, 3
      %p242 = pnand %p240, %p241
      %p243 = pneg %p242
      // Predicated region
      $region37: #{unit_conv_lstm_nhwc.1} parent=5 // pred_check
        _
      $region38: #{unit_conv_lstm_nhwc.1} parent=5 // pred_check_branch
        %245 = sbr.rel (%p242) target = $region40
      $region39: #{unit_conv_lstm_nhwc.1} parent=5 // pred_region
        %s246 = ssub.s32 %s19, 1
        %p247 = scmp.lt.s32.totalorder %s24, 1
        %s248 = scalar_select %p247, %s24, 1
        %s249 = smul.addr %s248, 32
        %s250 = smul.addr %s249, 8
        %s251 = scalar_lea.vmem %s0, %s250
        %p252 = pneg %p45
        %p253 = pneg %p42
        %p254 = scmp.lt.s32.totalorder %s24, 1
        %s255 = scalar_select %p254, %s24, 1
        %s256 = smul.addr %s255, 32
        %s257 = smul.addr %s256, 8
        %s258 = scalar_lea.vmem %s1, %s257
        %p259 = pneg %p71
        %p260 = pneg %p68
        %p261 = scmp.lt.s32.totalorder %s24, 1
        %s262 = scalar_select %p261, %s24, 1
        %s263 = smul.addr %s262, 32
        %s264 = smul.addr %s263, 8
        %s265 = scalar_lea.vmem %s2, %s264
        %p266 = pneg %p97
        %p267 = pneg %p94
        %p268 = pneg %p118
        %p269 = pneg %p115
        %p270 = pneg %p139
        %p271 = pneg %p136
        %p272 = pneg %p165
        %p273 = pneg %p162
        %s274 = sand.u32 %s152, 1
        %s275 = scalar_lea.sflag [#allocation4], %s274
        %s276 = sand.u32 %s152, 1
        %s277 = smul.addr %s276, 256
        %s278 = scalar_lea.vmem [#allocation3], %s277
        %p279 = pneg %p191
        %p280 = pneg %p188
        %s281 = sand.u32 %s178, 1
        %s282 = scalar_lea.sflag [#allocation6], %s281
        %s283 = sand.u32 %s178, 1
        %s284 = smul.addr %s283, 256
        %s285 = scalar_lea.vmem [#allocation5], %s284
        %p286 = scmp.lt.s32.totalorder %s24, 1
        %s287 = scalar_select %p286, %s24, 1
        %s288 = smul.addr %s287, 32
        %s289 = smul.addr %s288, 8
        %s290 = scalar_lea.vmem %s0, %s289
        %p291 = scmp.lt.s32.totalorder %s24, 1
        %s292 = scalar_select %p291, %s24, 1
        %s293 = smul.addr %s292, 32
        %s294 = smul.addr %s293, 8
        %s295 = scalar_lea.vmem %s1, %s294
        %p296 = scmp.lt.s32.totalorder %s24, 1
        %s297 = scalar_select %p296, %s24, 1
        %s298 = smul.addr %s297, 32
        %s299 = smul.addr %s298, 8
        %s300 = scalar_lea.vmem %s2, %s299
        %vm302 = vcmask 289792
        %303 = vst.msk [vmem:[#allocation2] sm:$0xf] %vm302, 0
        %304 = vst.msk [vmem:[#allocation2 + $0x4] sm:$0xf] %vm302, 0
        %vm305 = vcmask 286720
        %306 = vst.msk [vmem:[#allocation2 + $0x8] sm:$0x1] %vm305, 0
        %307 = vst.msk [vmem:[#allocation2 + $0xc] sm:$0xf] %vm302, 0
        %308 = vst.msk [vmem:[#allocation2 + $0x10] sm:$0xf] %vm302, 0
        %309 = vst.msk [vmem:[#allocation2 + $0x14] sm:$0x1] %vm305, 0
        %310 = vst.msk [vmem:[#allocation2 + $0x18] sm:$0xf] %vm302, 0
        %311 = vst.msk [vmem:[#allocation2 + $0x1c] sm:$0xf] %vm302, 0
        %312 = vst.msk [vmem:[#allocation2 + $0x20] sm:$0x1] %vm305, 0
        %313 = vst.msk [vmem:[#allocation2 + $0x24] sm:$0xf] %vm302, 0
        %314 = vst.msk [vmem:[#allocation2 + $0x28] sm:$0xf] %vm302, 0
        %315 = vst.msk [vmem:[#allocation2 + $0x2c] sm:$0x1] %vm305, 0
        %316 = vst.msk [vmem:[#allocation2 + $0x30] sm:$0xf] %vm302, 0
        %317 = vst.msk [vmem:[#allocation2 + $0x34] sm:$0xf] %vm302, 0
        %318 = vst.msk [vmem:[#allocation2 + $0x38] sm:$0x1] %vm305, 0
        %319 = vst.msk [vmem:[#allocation2 + $0x3c] sm:$0xf] %vm302, 0
        %320 = vst.msk [vmem:[#allocation2 + $0x40] sm:$0xf] %vm302, 0
        %321 = vst.msk [vmem:[#allocation2 + $0x44] sm:$0x1] %vm305, 0
        %322 = vst.msk [vmem:[#allocation2 + $0x48] sm:$0xf] %vm302, 0
        %323 = vst.msk [vmem:[#allocation2 + $0x4c] sm:$0xf] %vm302, 0
        %324 = vst.msk [vmem:[#allocation2 + $0x50] sm:$0x1] %vm305, 0
        %325 = vst.msk [vmem:[#allocation2 + $0x54] sm:$0xf] %vm302, 0
        %326 = vst.msk [vmem:[#allocation2 + $0x58] sm:$0xf] %vm302, 0
        %327 = vst.msk [vmem:[#allocation2 + $0x5c] sm:$0x1] %vm305, 0
        %328 = vst.msk [vmem:[#allocation2 + $0x60] sm:$0xf] %vm302, 0
        %329 = vst.msk [vmem:[#allocation2 + $0x64] sm:$0xf] %vm302, 0
        %330 = vst.msk [vmem:[#allocation2 + $0x68] sm:$0x1] %vm305, 0
        %331 = vst.msk [vmem:[#allocation2 + $0x6c] sm:$0xf] %vm302, 0
        %332 = vst.msk [vmem:[#allocation2 + $0x70] sm:$0xf] %vm302, 0
        %333 = vst.msk [vmem:[#allocation2 + $0x74] sm:$0x1] %vm305, 0
        %334 = vst.msk [vmem:[#allocation2 + $0x78] sm:$0xf] %vm302, 0
        %335 = vst.msk [vmem:[#allocation2 + $0x7c] sm:$0xf] %vm302, 0
        %336 = vst.msk [vmem:[#allocation2 + $0x80] sm:$0x1] %vm305, 0
        %337 = vst.msk [vmem:[#allocation2 + $0x84] sm:$0xf] %vm302, 0
        %338 = vst.msk [vmem:[#allocation2 + $0x88] sm:$0xf] %vm302, 0
        %339 = vst.msk [vmem:[#allocation2 + $0x8c] sm:$0x1] %vm305, 0
        %340 = vst.msk [vmem:[#allocation2 + $0x90] sm:$0xf] %vm302, 0
        %341 = vst.msk [vmem:[#allocation2 + $0x94] sm:$0xf] %vm302, 0
        %342 = vst.msk [vmem:[#allocation2 + $0x98] sm:$0x1] %vm305, 0
        %343 = vst.msk [vmem:[#allocation2 + $0x9c] sm:$0xf] %vm302, 0
        %344 = vst.msk [vmem:[#allocation2 + $0xa0] sm:$0xf] %vm302, 0
        %345 = vst.msk [vmem:[#allocation2 + $0xa4] sm:$0x1] %vm305, 0
        %346 = vst.msk [vmem:[#allocation2 + $0xa8] sm:$0xf] %vm302, 0
        %347 = vst.msk [vmem:[#allocation2 + $0xac] sm:$0xf] %vm302, 0
        %348 = vst.msk [vmem:[#allocation2 + $0xb0] sm:$0x1] %vm305, 0
        %349 = vst.msk [vmem:[#allocation2 + $0xb4] sm:$0xf] %vm302, 0
        %350 = vst.msk [vmem:[#allocation2 + $0xb8] sm:$0xf] %vm302, 0
        %351 = vst.msk [vmem:[#allocation2 + $0xbc] sm:$0x1] %vm305, 0
        %352 = vst.msk [vmem:[#allocation2 + $0xc0] sm:$0xf] %vm302, 0
        %353 = vst.msk [vmem:[#allocation2 + $0xc4] sm:$0xf] %vm302, 0
        %354 = vst.msk [vmem:[#allocation2 + $0xc8] sm:$0x1] %vm305, 0
        %355 = vst.msk [vmem:[#allocation2 + $0xcc] sm:$0xf] %vm302, 0
        %356 = vst.msk [vmem:[#allocation2 + $0xd0] sm:$0xf] %vm302, 0
        %357 = vst.msk [vmem:[#allocation2 + $0xd4] sm:$0x1] %vm305, 0
        %v358 = vld [vmem:[%s290] sm:$0xff]
        %v359 = vld [vmem:[%s290 + $0x8] sm:$0xff]
        %v360 = vld [vmem:[%s290 + $0x10] sm:$0xff]
        %v361 = vld [vmem:[%s290 + $0x18] sm:$0xff]
        %v362 = vld [vmem:[%s290 + $0x20] sm:$0xff]
        %v363 = vld [vmem:[%s290 + $0x28] sm:$0xff]
        %v364 = vld [vmem:[%s290 + $0x30] sm:$0xff]
        %v365 = vld [vmem:[%s290 + $0x38] sm:$0xff]
        %v366 = vld [vmem:[%s290 + $0x40] sm:$0xff]
        %v367 = vld [vmem:[%s290 + $0x48] sm:$0xff]
        %v368 = vld [vmem:[%s290 + $0x50] sm:$0xff]
        %v369 = vld [vmem:[%s290 + $0x58] sm:$0xff]
        %v370 = vld [vmem:[%s290 + $0x60] sm:$0xff]
        %v371 = vld [vmem:[%s290 + $0x68] sm:$0xff]
        %v372 = vld [vmem:[%s290 + $0x70] sm:$0xff]
        %v373 = vld [vmem:[%s290 + $0x78] sm:$0xff]
        %v374 = vld [vmem:[%s290 + $0x80] sm:$0xff]
        %v375 = vld [vmem:[%s290 + $0x88] sm:$0xff]
        %v376 = vld [vmem:[%s290 + $0x90] sm:$0xff]
        %v377 = vld [vmem:[%s290 + $0x98] sm:$0xff]
        %v378 = vld [vmem:[%s290 + $0xa0] sm:$0xff]
        %v379 = vld [vmem:[%s290 + $0xa8] sm:$0xff]
        %v380 = vld [vmem:[%s290 + $0xb0] sm:$0xff]
        %v381 = vld [vmem:[%s290 + $0xb8] sm:$0xff]
        %v382 = vld [vmem:[%s290 + $0xc0] sm:$0xff]
        %v383 = vld [vmem:[%s290 + $0xc8] sm:$0xff]
        %v384 = vld [vmem:[%s290 + $0xd0] sm:$0xff]
        %v385 = vld [vmem:[%s290 + $0xd8] sm:$0xff]
        %v386 = vld [vmem:[%s290 + $0xe0] sm:$0xff]
        %v387 = vld [vmem:[%s290 + $0xe8] sm:$0xff]
        %v388 = vld [vmem:[%s290 + $0xf0] sm:$0xff]
        %v389 = vld [vmem:[%s290 + $0xf8] sm:$0xff]
        %v390 = vpack.c.bf16 %v359, %v358
        %v391 = vpack.c.bf16 %v361, %v360
        %v392 = vpack.c.bf16 %v363, %v362
        %v393 = vpack.c.bf16 %v365, %v364
        %v394 = vpack.c.bf16 %v367, %v366
        %v395 = vpack.c.bf16 %v369, %v368
        %v396 = vpack.c.bf16 %v371, %v370
        %v397 = vpack.c.bf16 %v373, %v372
        %v398 = vpack.c.bf16 %v375, %v374
        %v399 = vpack.c.bf16 %v377, %v376
        %v400 = vpack.c.bf16 %v379, %v378
        %v401 = vpack.c.bf16 %v381, %v380
        %v402 = vpack.c.bf16 %v383, %v382
        %v403 = vpack.c.bf16 %v385, %v384
        %v404 = vpack.c.bf16 %v387, %v386
        %v405 = vpack.c.bf16 %v389, %v388
        %v422 = vunpack.c.l.b16 %v390
        %v423 = vunpack.c.h.b16 %v390
        %v424 = vunpack.c.l.b16 %v391
        %v425 = vunpack.c.h.b16 %v391
        %v426 = vunpack.c.l.b16 %v392
        %v427 = vunpack.c.h.b16 %v392
        %v428 = vunpack.c.l.b16 %v393
        %v429 = vunpack.c.h.b16 %v393
        %v430 = vunpack.c.l.b16 %v394
        %v431 = vunpack.c.h.b16 %v394
        %v432 = vunpack.c.l.b16 %v395
        %v433 = vunpack.c.h.b16 %v395
        %v434 = vunpack.c.l.b16 %v396
        %v435 = vunpack.c.h.b16 %v396
        %v436 = vunpack.c.l.b16 %v397
        %v437 = vunpack.c.h.b16 %v397
        %v438 = vunpack.c.l.b16 %v398
        %v439 = vunpack.c.h.b16 %v398
        %v440 = vunpack.c.l.b16 %v399
        %v441 = vunpack.c.h.b16 %v399
        %v442 = vunpack.c.l.b16 %v400
        %v443 = vunpack.c.h.b16 %v400
        %v444 = vunpack.c.l.b16 %v401
        %v445 = vunpack.c.h.b16 %v401
        %v446 = vunpack.c.l.b16 %v402
        %v447 = vunpack.c.h.b16 %v402
        %v448 = vunpack.c.l.b16 %v403
        %v449 = vunpack.c.h.b16 %v403
        %v450 = vunpack.c.l.b16 %v404
        %v451 = vunpack.c.h.b16 %v404
        %v452 = vunpack.c.l.b16 %v405
        %v453 = vunpack.c.h.b16 %v405
        %v454 = vpack.c.b16 %v422, %v422
        %v455 = vpack.c.b16 %v423, %v423
        %v456 = vpack.c.b16 %v424, %v424
        %v457 = vpack.c.b16 %v425, %v425
        %v458 = vpack.c.b16 %v426, %v426
        %v459 = vpack.c.b16 %v427, %v427
        %v460 = vpack.c.b16 %v428, %v428
        %v461 = vpack.c.b16 %v429, %v429
        %v462 = vpack.c.b16 %v430, %v430
        %v463 = vpack.c.b16 %v431, %v431
        %v464 = vpack.c.b16 %v432, %v432
        %v465 = vpack.c.b16 %v433, %v433
        %v466 = vpack.c.b16 %v434, %v434
        %v467 = vpack.c.b16 %v435, %v435
        %v468 = vpack.c.b16 %v436, %v436
        %v469 = vpack.c.b16 %v437, %v437
        %v470 = vpack.c.b16 %v438, %v438
        %v471 = vpack.c.b16 %v439, %v439
        %v472 = vpack.c.b16 %v440, %v440
        %v473 = vpack.c.b16 %v441, %v441
        %v474 = vpack.c.b16 %v442, %v442
        %v475 = vpack.c.b16 %v443, %v443
        %v476 = vpack.c.b16 %v444, %v444
        %v477 = vpack.c.b16 %v445, %v445
        %v478 = vpack.c.b16 %v446, %v446
        %v479 = vpack.c.b16 %v447, %v447
        %v480 = vpack.c.b16 %v448, %v448
        %v481 = vpack.c.b16 %v449, %v449
        %v482 = vpack.c.b16 %v450, %v450
        %v483 = vpack.c.b16 %v451, %v451
        %v484 = vpack.c.b16 %v452, %v452
        %v485 = vpack.c.b16 %v453, %v453
        %vm486 = vsmask.f32 256
        %vm487 = vsmask.f32 4368
        %vm488 = vmor %vm486, %vm487
        %v490 = vshrl.u32 %v454, 16
        %v492 = vrot.slane %v490, 7
        %v493 = vshll.u32 %v454, 16
        %v495 = vor.u32 %v492, %v493
        %v496 = vrot.slane %v492, 4
        %v498 = vshrl.u32 %v455, 16
        %v500 = vrot.slane %v498, 7
        %v501 = vshll.u32 %v455, 16
        %v503 = vor.u32 %v500, %v501
        %v504 = vsel %vm488, %v496, %v503
        %v505 = vrot.slane %v500, 4
        %v507 = vshrl.u32 %v456, 16
        %v509 = vrot.slane %v507, 7
        %v510 = vshll.u32 %v456, 16
        %v512 = vor.u32 %v509, %v510
        %v513 = vrot.slane %v509, 4
        %v515 = vshrl.u32 %v457, 16
        %v517 = vrot.slane %v515, 7
        %v518 = vshll.u32 %v457, 16
        %v520 = vor.u32 %v517, %v518
        %v521 = vsel %vm488, %v513, %v520
        %v522 = vrot.slane %v517, 4
        %v524 = vshrl.u32 %v458, 16
        %v526 = vrot.slane %v524, 7
        %v527 = vshll.u32 %v458, 16
        %v529 = vor.u32 %v526, %v527
        %v530 = vrot.slane %v526, 4
        %v532 = vshrl.u32 %v459, 16
        %v534 = vrot.slane %v532, 7
        %v535 = vshll.u32 %v459, 16
        %v537 = vor.u32 %v534, %v535
        %v538 = vsel %vm488, %v530, %v537
        %v539 = vrot.slane %v534, 4
        %v541 = vshrl.u32 %v460, 16
        %v543 = vrot.slane %v541, 7
        %v544 = vshll.u32 %v460, 16
        %v546 = vor.u32 %v543, %v544
        %v547 = vrot.slane %v543, 4
        %v549 = vshrl.u32 %v461, 16
        %v551 = vrot.slane %v549, 7
        %v552 = vshll.u32 %v461, 16
        %v554 = vor.u32 %v551, %v552
        %v555 = vsel %vm488, %v547, %v554
        %v556 = vrot.slane %v551, 4
        %v558 = vshrl.u32 %v462, 16
        %v560 = vrot.slane %v558, 7
        %v561 = vshll.u32 %v462, 16
        %v563 = vor.u32 %v560, %v561
        %v564 = vrot.slane %v560, 4
        %v566 = vshrl.u32 %v463, 16
        %v568 = vrot.slane %v566, 7
        %v569 = vshll.u32 %v463, 16
        %v571 = vor.u32 %v568, %v569
        %v572 = vsel %vm488, %v564, %v571
        %v573 = vrot.slane %v568, 4
        %v575 = vshrl.u32 %v464, 16
        %v577 = vrot.slane %v575, 7
        %v578 = vshll.u32 %v464, 16
        %v580 = vor.u32 %v577, %v578
        %v581 = vrot.slane %v577, 4
        %v583 = vshrl.u32 %v465, 16
        %v585 = vrot.slane %v583, 7
        %v586 = vshll.u32 %v465, 16
        %v588 = vor.u32 %v585, %v586
        %v589 = vsel %vm488, %v581, %v588
        %v590 = vrot.slane %v585, 4
        %v592 = vshrl.u32 %v466, 16
        %v594 = vrot.slane %v592, 7
        %v595 = vshll.u32 %v466, 16
        %v597 = vor.u32 %v594, %v595
        %v598 = vrot.slane %v594, 4
        %v600 = vshrl.u32 %v467, 16
        %v602 = vrot.slane %v600, 7
        %v603 = vshll.u32 %v467, 16
        %v605 = vor.u32 %v602, %v603
        %v606 = vsel %vm488, %v598, %v605
        %v607 = vrot.slane %v602, 4
        %v609 = vshrl.u32 %v468, 16
        %v611 = vrot.slane %v609, 7
        %v612 = vshll.u32 %v468, 16
        %v614 = vor.u32 %v611, %v612
        %v615 = vrot.slane %v611, 4
        %v617 = vshrl.u32 %v469, 16
        %v619 = vrot.slane %v617, 7
        %v620 = vshll.u32 %v469, 16
        %v622 = vor.u32 %v619, %v620
        %v623 = vsel %vm488, %v615, %v622
        %v624 = vrot.slane %v619, 4
        %v626 = vshrl.u32 %v470, 16
        %v628 = vrot.slane %v626, 7
        %v629 = vshll.u32 %v470, 16
        %v631 = vor.u32 %v628, %v629
        %v632 = vrot.slane %v628, 4
        %v634 = vshrl.u32 %v471, 16
        %v636 = vrot.slane %v634, 7
        %v637 = vshll.u32 %v471, 16
        %v639 = vor.u32 %v636, %v637
        %v640 = vsel %vm488, %v632, %v639
        %v641 = vrot.slane %v636, 4
        %v643 = vshrl.u32 %v472, 16
        %v645 = vrot.slane %v643, 7
        %v646 = vshll.u32 %v472, 16
        %v648 = vor.u32 %v645, %v646
        %v649 = vrot.slane %v645, 4
        %v651 = vshrl.u32 %v473, 16
        %v653 = vrot.slane %v651, 7
        %v654 = vshll.u32 %v473, 16
        %v656 = vor.u32 %v653, %v654
        %v657 = vsel %vm488, %v649, %v656
        %v658 = vrot.slane %v653, 4
        %v660 = vshrl.u32 %v474, 16
        %v662 = vrot.slane %v660, 7
        %v663 = vshll.u32 %v474, 16
        %v665 = vor.u32 %v662, %v663
        %v666 = vrot.slane %v662, 4
        %v668 = vshrl.u32 %v475, 16
        %v670 = vrot.slane %v668, 7
        %v671 = vshll.u32 %v475, 16
        %v673 = vor.u32 %v670, %v671
        %v674 = vsel %vm488, %v666, %v673
        %v675 = vrot.slane %v670, 4
        %v677 = vshrl.u32 %v476, 16
        %v679 = vrot.slane %v677, 7
        %v680 = vshll.u32 %v476, 16
        %v682 = vor.u32 %v679, %v680
        %v683 = vrot.slane %v679, 4
        %v685 = vshrl.u32 %v477, 16
        %v687 = vrot.slane %v685, 7
        %v688 = vshll.u32 %v477, 16
        %v690 = vor.u32 %v687, %v688
        %v691 = vsel %vm488, %v683, %v690
        %v692 = vrot.slane %v687, 4
        %v694 = vshrl.u32 %v478, 16
        %v696 = vrot.slane %v694, 7
        %v697 = vshll.u32 %v478, 16
        %v699 = vor.u32 %v696, %v697
        %v700 = vrot.slane %v696, 4
        %v702 = vshrl.u32 %v479, 16
        %v704 = vrot.slane %v702, 7
        %v705 = vshll.u32 %v479, 16
        %v707 = vor.u32 %v704, %v705
        %v708 = vsel %vm488, %v700, %v707
        %v709 = vrot.slane %v704, 4
        %v711 = vshrl.u32 %v480, 16
        %v713 = vrot.slane %v711, 7
        %v714 = vshll.u32 %v480, 16
        %v716 = vor.u32 %v713, %v714
        %v717 = vrot.slane %v713, 4
        %v719 = vshrl.u32 %v481, 16
        %v721 = vrot.slane %v719, 7
        %v722 = vshll.u32 %v481, 16
        %v724 = vor.u32 %v721, %v722
        %v725 = vsel %vm488, %v717, %v724
        %v726 = vrot.slane %v721, 4
        %v728 = vshrl.u32 %v482, 16
        %v730 = vrot.slane %v728, 7
        %v731 = vshll.u32 %v482, 16
        %v733 = vor.u32 %v730, %v731
        %v734 = vrot.slane %v730, 4
        %v736 = vshrl.u32 %v483, 16
        %v738 = vrot.slane %v736, 7
        %v739 = vshll.u32 %v483, 16
        %v741 = vor.u32 %v738, %v739
        %v742 = vsel %vm488, %v734, %v741
        %v743 = vrot.slane %v738, 4
        %v745 = vshrl.u32 %v484, 16
        %v747 = vrot.slane %v745, 7
        %v748 = vshll.u32 %v484, 16
        %v750 = vor.u32 %v747, %v748
        %v751 = vrot.slane %v747, 4
        %v753 = vshrl.u32 %v485, 16
        %v755 = vrot.slane %v753, 7
        %v756 = vshll.u32 %v485, 16
        %v758 = vor.u32 %v755, %v756
        %v759 = vsel %vm488, %v751, %v758
        %v760 = vrot.slane %v755, 4
        %s809 = scalar_lea.vmem [#allocation2], 12
        %vm810 = vcmask 27648
        %vm811 = vsmask.f32 7938
        %vm812 = vmand %vm810, %vm811
        %v813 = vld [vmem:[%s809] sm:$0xf]
        %v814 = vsel %vm812, %v495, %v813
        %815 = vst [vmem:[%s809] sm:$0xf] %v814
        %vm816 = vcmask 27648
        %817 = vst.msk [vmem:[%s809 + $0x4] sm:$0xf] %vm816, %v504
        %vm818 = vcmask 24576
        %vm819 = vmand %vm818, %vm486
        %v820 = vld [vmem:[%s809 + $0x8] sm:$0x1]
        %v821 = vsel %vm819, %v505, %v820
        %822 = vst [vmem:[%s809 + $0x8] sm:$0x1] %v821
        %v823 = vld [vmem:[%s809 + $0xc] sm:$0xf]
        %v824 = vsel %vm812, %v512, %v823
        %825 = vst [vmem:[%s809 + $0xc] sm:$0xf] %v824
        %826 = vst.msk [vmem:[%s809 + $0x10] sm:$0xf] %vm816, %v521
        %v827 = vld [vmem:[%s809 + $0x14] sm:$0x1]
        %v828 = vsel %vm819, %v522, %v827
        %829 = vst [vmem:[%s809 + $0x14] sm:$0x1] %v828
        %v830 = vld [vmem:[%s809 + $0x18] sm:$0xf]
        %v831 = vsel %vm812, %v529, %v830
        %832 = vst [vmem:[%s809 + $0x18] sm:$0xf] %v831
        %833 = vst.msk [vmem:[%s809 + $0x1c] sm:$0xf] %vm816, %v538
        %v834 = vld [vmem:[%s809 + $0x20] sm:$0x1]
        %v835 = vsel %vm819, %v539, %v834
        %836 = vst [vmem:[%s809 + $0x20] sm:$0x1] %v835
        %v837 = vld [vmem:[%s809 + $0x24] sm:$0xf]
        %v838 = vsel %vm812, %v546, %v837
        %839 = vst [vmem:[%s809 + $0x24] sm:$0xf] %v838
        %840 = vst.msk [vmem:[%s809 + $0x28] sm:$0xf] %vm816, %v555
        %v841 = vld [vmem:[%s809 + $0x2c] sm:$0x1]
        %v842 = vsel %vm819, %v556, %v841
        %843 = vst [vmem:[%s809 + $0x2c] sm:$0x1] %v842
        %v844 = vld [vmem:[%s809 + $0x30] sm:$0xf]
        %v845 = vsel %vm812, %v563, %v844
        %846 = vst [vmem:[%s809 + $0x30] sm:$0xf] %v845
        %847 = vst.msk [vmem:[%s809 + $0x34] sm:$0xf] %vm816, %v572
        %v848 = vld [vmem:[%s809 + $0x38] sm:$0x1]
        %v849 = vsel %vm819, %v573, %v848
        %850 = vst [vmem:[%s809 + $0x38] sm:$0x1] %v849
        %v851 = vld [vmem:[%s809 + $0x3c] sm:$0xf]
        %v852 = vsel %vm812, %v580, %v851
        %853 = vst [vmem:[%s809 + $0x3c] sm:$0xf] %v852
        %854 = vst.msk [vmem:[%s809 + $0x40] sm:$0xf] %vm816, %v589
        %v855 = vld [vmem:[%s809 + $0x44] sm:$0x1]
        %v856 = vsel %vm819, %v590, %v855
        %857 = vst [vmem:[%s809 + $0x44] sm:$0x1] %v856
        %v858 = vld [vmem:[%s809 + $0x48] sm:$0xf]
        %v859 = vsel %vm812, %v597, %v858
        %860 = vst [vmem:[%s809 + $0x48] sm:$0xf] %v859
        %861 = vst.msk [vmem:[%s809 + $0x4c] sm:$0xf] %vm816, %v606
        %v862 = vld [vmem:[%s809 + $0x50] sm:$0x1]
        %v863 = vsel %vm819, %v607, %v862
        %864 = vst [vmem:[%s809 + $0x50] sm:$0x1] %v863
        %v865 = vld [vmem:[%s809 + $0x54] sm:$0xf]
        %v866 = vsel %vm812, %v614, %v865
        %867 = vst [vmem:[%s809 + $0x54] sm:$0xf] %v866
        %868 = vst.msk [vmem:[%s809 + $0x58] sm:$0xf] %vm816, %v623
        %v869 = vld [vmem:[%s809 + $0x5c] sm:$0x1]
        %v870 = vsel %vm819, %v624, %v869
        %871 = vst [vmem:[%s809 + $0x5c] sm:$0x1] %v870
        %v872 = vld [vmem:[%s809 + $0x60] sm:$0xf]
        %v873 = vsel %vm812, %v631, %v872
        %874 = vst [vmem:[%s809 + $0x60] sm:$0xf] %v873
        %875 = vst.msk [vmem:[%s809 + $0x64] sm:$0xf] %vm816, %v640
        %v876 = vld [vmem:[%s809 + $0x68] sm:$0x1]
        %v877 = vsel %vm819, %v641, %v876
        %878 = vst [vmem:[%s809 + $0x68] sm:$0x1] %v877
        %v879 = vld [vmem:[%s809 + $0x6c] sm:$0xf]
        %v880 = vsel %vm812, %v648, %v879
        %881 = vst [vmem:[%s809 + $0x6c] sm:$0xf] %v880
        %882 = vst.msk [vmem:[%s809 + $0x70] sm:$0xf] %vm816, %v657
        %v883 = vld [vmem:[%s809 + $0x74] sm:$0x1]
        %v884 = vsel %vm819, %v658, %v883
        %885 = vst [vmem:[%s809 + $0x74] sm:$0x1] %v884
        %v886 = vld [vmem:[%s809 + $0x78] sm:$0xf]
        %v887 = vsel %vm812, %v665, %v886
        %888 = vst [vmem:[%s809 + $0x78] sm:$0xf] %v887
        %889 = vst.msk [vmem:[%s809 + $0x7c] sm:$0xf] %vm816, %v674
        %v890 = vld [vmem:[%s809 + $0x80] sm:$0x1]
        %v891 = vsel %vm819, %v675, %v890
        %892 = vst [vmem:[%s809 + $0x80] sm:$0x1] %v891
        %v893 = vld [vmem:[%s809 + $0x84] sm:$0xf]
        %v894 = vsel %vm812, %v682, %v893
        %895 = vst [vmem:[%s809 + $0x84] sm:$0xf] %v894
        %896 = vst.msk [vmem:[%s809 + $0x88] sm:$0xf] %vm816, %v691
        %v897 = vld [vmem:[%s809 + $0x8c] sm:$0x1]
        %v898 = vsel %vm819, %v692, %v897
        %899 = vst [vmem:[%s809 + $0x8c] sm:$0x1] %v898
        %v900 = vld [vmem:[%s809 + $0x90] sm:$0xf]
        %v901 = vsel %vm812, %v699, %v900
        %902 = vst [vmem:[%s809 + $0x90] sm:$0xf] %v901
        %903 = vst.msk [vmem:[%s809 + $0x94] sm:$0xf] %vm816, %v708
        %v904 = vld [vmem:[%s809 + $0x98] sm:$0x1]
        %v905 = vsel %vm819, %v709, %v904
        %906 = vst [vmem:[%s809 + $0x98] sm:$0x1] %v905
        %v907 = vld [vmem:[%s809 + $0x9c] sm:$0xf]
        %v908 = vsel %vm812, %v716, %v907
        %909 = vst [vmem:[%s809 + $0x9c] sm:$0xf] %v908
        %910 = vst.msk [vmem:[%s809 + $0xa0] sm:$0xf] %vm816, %v725
        %v911 = vld [vmem:[%s809 + $0xa4] sm:$0x1]
        %v912 = vsel %vm819, %v726, %v911
        %913 = vst [vmem:[%s809 + $0xa4] sm:$0x1] %v912
        %v914 = vld [vmem:[%s809 + $0xa8] sm:$0xf]
        %v915 = vsel %vm812, %v733, %v914
        %916 = vst [vmem:[%s809 + $0xa8] sm:$0xf] %v915
        %917 = vst.msk [vmem:[%s809 + $0xac] sm:$0xf] %vm816, %v742
        %v918 = vld [vmem:[%s809 + $0xb0] sm:$0x1]
        %v919 = vsel %vm819, %v743, %v918
        %920 = vst [vmem:[%s809 + $0xb0] sm:$0x1] %v919
        %v921 = vld [vmem:[%s809 + $0xb4] sm:$0xf]
        %v922 = vsel %vm812, %v750, %v921
        %923 = vst [vmem:[%s809 + $0xb4] sm:$0xf] %v922
        %924 = vst.msk [vmem:[%s809 + $0xb8] sm:$0xf] %vm816, %v759
        %v925 = vld [vmem:[%s809 + $0xbc] sm:$0x1]
        %v926 = vsel %vm819, %v760, %v925
        %927 = vst [vmem:[%s809 + $0xbc] sm:$0x1] %v926
        %v928 = vld [vmem:[%s295] sm:$0xff]
        %v929 = vld [vmem:[%s295 + $0x8] sm:$0xff]
        %v930 = vld [vmem:[%s295 + $0x10] sm:$0xff]
        %v931 = vld [vmem:[%s295 + $0x18] sm:$0xff]
        %v932 = vld [vmem:[%s295 + $0x20] sm:$0xff]
        %v933 = vld [vmem:[%s295 + $0x28] sm:$0xff]
        %v934 = vld [vmem:[%s295 + $0x30] sm:$0xff]
        %v935 = vld [vmem:[%s295 + $0x38] sm:$0xff]
        %v936 = vld [vmem:[%s295 + $0x40] sm:$0xff]
        %v937 = vld [vmem:[%s295 + $0x48] sm:$0xff]
        %v938 = vld [vmem:[%s295 + $0x50] sm:$0xff]
        %v939 = vld [vmem:[%s295 + $0x58] sm:$0xff]
        %v940 = vld [vmem:[%s295 + $0x60] sm:$0xff]
        %v941 = vld [vmem:[%s295 + $0x68] sm:$0xff]
        %v942 = vld [vmem:[%s295 + $0x70] sm:$0xff]
        %v943 = vld [vmem:[%s295 + $0x78] sm:$0xff]
        %v944 = vld [vmem:[%s295 + $0x80] sm:$0xff]
        %v945 = vld [vmem:[%s295 + $0x88] sm:$0xff]
        %v946 = vld [vmem:[%s295 + $0x90] sm:$0xff]
        %v947 = vld [vmem:[%s295 + $0x98] sm:$0xff]
        %v948 = vld [vmem:[%s295 + $0xa0] sm:$0xff]
        %v949 = vld [vmem:[%s295 + $0xa8] sm:$0xff]
        %v950 = vld [vmem:[%s295 + $0xb0] sm:$0xff]
        %v951 = vld [vmem:[%s295 + $0xb8] sm:$0xff]
        %v952 = vld [vmem:[%s295 + $0xc0] sm:$0xff]
        %v953 = vld [vmem:[%s295 + $0xc8] sm:$0xff]
        %v954 = vld [vmem:[%s295 + $0xd0] sm:$0xff]
        %v955 = vld [vmem:[%s295 + $0xd8] sm:$0xff]
        %v956 = vld [vmem:[%s295 + $0xe0] sm:$0xff]
        %v957 = vld [vmem:[%s295 + $0xe8] sm:$0xff]
        %v958 = vld [vmem:[%s295 + $0xf0] sm:$0xff]
        %v959 = vld [vmem:[%s295 + $0xf8] sm:$0xff]
        %v960 = vpack.c.bf16 %v929, %v928
        %v961 = vpack.c.bf16 %v931, %v930
        %v962 = vpack.c.bf16 %v933, %v932
        %v963 = vpack.c.bf16 %v935, %v934
        %v964 = vpack.c.bf16 %v937, %v936
        %v965 = vpack.c.bf16 %v939, %v938
        %v966 = vpack.c.bf16 %v941, %v940
        %v967 = vpack.c.bf16 %v943, %v942
        %v968 = vpack.c.bf16 %v945, %v944
        %v969 = vpack.c.bf16 %v947, %v946
        %v970 = vpack.c.bf16 %v949, %v948
        %v971 = vpack.c.bf16 %v951, %v950
        %v972 = vpack.c.bf16 %v953, %v952
        %v973 = vpack.c.bf16 %v955, %v954
        %v974 = vpack.c.bf16 %v957, %v956
        %v975 = vpack.c.bf16 %v959, %v958
        %v992 = vunpack.c.l.b16 %v960
        %v993 = vunpack.c.h.b16 %v960
        %v994 = vunpack.c.l.b16 %v961
        %v995 = vunpack.c.h.b16 %v961
        %v996 = vunpack.c.l.b16 %v962
        %v997 = vunpack.c.h.b16 %v962
        %v998 = vunpack.c.l.b16 %v963
        %v999 = vunpack.c.h.b16 %v963
        %v1000 = vunpack.c.l.b16 %v964
        %v1001 = vunpack.c.h.b16 %v964
        %v1002 = vunpack.c.l.b16 %v965
        %v1003 = vunpack.c.h.b16 %v965
        %v1004 = vunpack.c.l.b16 %v966
        %v1005 = vunpack.c.h.b16 %v966
        %v1006 = vunpack.c.l.b16 %v967
        %v1007 = vunpack.c.h.b16 %v967
        %v1008 = vunpack.c.l.b16 %v968
        %v1009 = vunpack.c.h.b16 %v968
        %v1010 = vunpack.c.l.b16 %v969
        %v1011 = vunpack.c.h.b16 %v969
        %v1012 = vunpack.c.l.b16 %v970
        %v1013 = vunpack.c.h.b16 %v970
        %v1014 = vunpack.c.l.b16 %v971
        %v1015 = vunpack.c.h.b16 %v971
        %v1016 = vunpack.c.l.b16 %v972
        %v1017 = vunpack.c.h.b16 %v972
        %v1018 = vunpack.c.l.b16 %v973
        %v1019 = vunpack.c.h.b16 %v973
        %v1020 = vunpack.c.l.b16 %v974
        %v1021 = vunpack.c.h.b16 %v974
        %v1022 = vunpack.c.l.b16 %v975
        %v1023 = vunpack.c.h.b16 %v975
        %v1024 = vpack.c.b16 %v992, %v992
        %v1025 = vpack.c.b16 %v993, %v993
        %v1026 = vpack.c.b16 %v994, %v994
        %v1027 = vpack.c.b16 %v995, %v995
        %v1028 = vpack.c.b16 %v996, %v996
        %v1029 = vpack.c.b16 %v997, %v997
        %v1030 = vpack.c.b16 %v998, %v998
        %v1031 = vpack.c.b16 %v999, %v999
        %v1032 = vpack.c.b16 %v1000, %v1000
        %v1033 = vpack.c.b16 %v1001, %v1001
        %v1034 = vpack.c.b16 %v1002, %v1002
        %v1035 = vpack.c.b16 %v1003, %v1003
        %v1036 = vpack.c.b16 %v1004, %v1004
        %v1037 = vpack.c.b16 %v1005, %v1005
        %v1038 = vpack.c.b16 %v1006, %v1006
        %v1039 = vpack.c.b16 %v1007, %v1007
        %v1040 = vpack.c.b16 %v1008, %v1008
        %v1041 = vpack.c.b16 %v1009, %v1009
        %v1042 = vpack.c.b16 %v1010, %v1010
        %v1043 = vpack.c.b16 %v1011, %v1011
        %v1044 = vpack.c.b16 %v1012, %v1012
        %v1045 = vpack.c.b16 %v1013, %v1013
        %v1046 = vpack.c.b16 %v1014, %v1014
        %v1047 = vpack.c.b16 %v1015, %v1015
        %v1048 = vpack.c.b16 %v1016, %v1016
        %v1049 = vpack.c.b16 %v1017, %v1017
        %v1050 = vpack.c.b16 %v1018, %v1018
        %v1051 = vpack.c.b16 %v1019, %v1019
        %v1052 = vpack.c.b16 %v1020, %v1020
        %v1053 = vpack.c.b16 %v1021, %v1021
        %v1054 = vpack.c.b16 %v1022, %v1022
        %v1055 = vpack.c.b16 %v1023, %v1023
        %v1057 = vshrl.u32 %v1024, 16
        %v1059 = vrot.slane %v1057, 7
        %v1060 = vshll.u32 %v1024, 16
        %v1062 = vor.u32 %v1059, %v1060
        %v1063 = vrot.slane %v1059, 4
        %v1065 = vshrl.u32 %v1025, 16
        %v1067 = vrot.slane %v1065, 7
        %v1068 = vshll.u32 %v1025, 16
        %v1070 = vor.u32 %v1067, %v1068
        %v1071 = vsel %vm488, %v1063, %v1070
        %v1072 = vrot.slane %v1067, 4
        %v1074 = vshrl.u32 %v1026, 16
        %v1076 = vrot.slane %v1074, 7
        %v1077 = vshll.u32 %v1026, 16
        %v1079 = vor.u32 %v1076, %v1077
        %v1080 = vrot.slane %v1076, 4
        %v1082 = vshrl.u32 %v1027, 16
        %v1084 = vrot.slane %v1082, 7
        %v1085 = vshll.u32 %v1027, 16
        %v1087 = vor.u32 %v1084, %v1085
        %v1088 = vsel %vm488, %v1080, %v1087
        %v1089 = vrot.slane %v1084, 4
        %v1091 = vshrl.u32 %v1028, 16
        %v1093 = vrot.slane %v1091, 7
        %v1094 = vshll.u32 %v1028, 16
        %v1096 = vor.u32 %v1093, %v1094
        %v1097 = vrot.slane %v1093, 4
        %v1099 = vshrl.u32 %v1029, 16
        %v1101 = vrot.slane %v1099, 7
        %v1102 = vshll.u32 %v1029, 16
        %v1104 = vor.u32 %v1101, %v1102
        %v1105 = vsel %vm488, %v1097, %v1104
        %v1106 = vrot.slane %v1101, 4
        %v1108 = vshrl.u32 %v1030, 16
        %v1110 = vrot.slane %v1108, 7
        %v1111 = vshll.u32 %v1030, 16
        %v1113 = vor.u32 %v1110, %v1111
        %v1114 = vrot.slane %v1110, 4
        %v1116 = vshrl.u32 %v1031, 16
        %v1118 = vrot.slane %v1116, 7
        %v1119 = vshll.u32 %v1031, 16
        %v1121 = vor.u32 %v1118, %v1119
        %v1122 = vsel %vm488, %v1114, %v1121
        %v1123 = vrot.slane %v1118, 4
        %v1125 = vshrl.u32 %v1032, 16
        %v1127 = vrot.slane %v1125, 7
        %v1128 = vshll.u32 %v1032, 16
        %v1130 = vor.u32 %v1127, %v1128
        %v1131 = vrot.slane %v1127, 4
        %v1133 = vshrl.u32 %v1033, 16
        %v1135 = vrot.slane %v1133, 7
        %v1136 = vshll.u32 %v1033, 16
        %v1138 = vor.u32 %v1135, %v1136
        %v1139 = vsel %vm488, %v1131, %v1138
        %v1140 = vrot.slane %v1135, 4
        %v1142 = vshrl.u32 %v1034, 16
        %v1144 = vrot.slane %v1142, 7
        %v1145 = vshll.u32 %v1034, 16
        %v1147 = vor.u32 %v1144, %v1145
        %v1148 = vrot.slane %v1144, 4
        %v1150 = vshrl.u32 %v1035, 16
        %v1152 = vrot.slane %v1150, 7
        %v1153 = vshll.u32 %v1035, 16
        %v1155 = vor.u32 %v1152, %v1153
        %v1156 = vsel %vm488, %v1148, %v1155
        %v1157 = vrot.slane %v1152, 4
        %v1159 = vshrl.u32 %v1036, 16
        %v1161 = vrot.slane %v1159, 7
        %v1162 = vshll.u32 %v1036, 16
        %v1164 = vor.u32 %v1161, %v1162
        %v1165 = vrot.slane %v1161, 4
        %v1167 = vshrl.u32 %v1037, 16
        %v1169 = vrot.slane %v1167, 7
        %v1170 = vshll.u32 %v1037, 16
        %v1172 = vor.u32 %v1169, %v1170
        %v1173 = vsel %vm488, %v1165, %v1172
        %v1174 = vrot.slane %v1169, 4
        %v1176 = vshrl.u32 %v1038, 16
        %v1178 = vrot.slane %v1176, 7
        %v1179 = vshll.u32 %v1038, 16
        %v1181 = vor.u32 %v1178, %v1179
        %v1182 = vrot.slane %v1178, 4
        %v1184 = vshrl.u32 %v1039, 16
        %v1186 = vrot.slane %v1184, 7
        %v1187 = vshll.u32 %v1039, 16
        %v1189 = vor.u32 %v1186, %v1187
        %v1190 = vsel %vm488, %v1182, %v1189
        %v1191 = vrot.slane %v1186, 4
        %v1193 = vshrl.u32 %v1040, 16
        %v1195 = vrot.slane %v1193, 7
        %v1196 = vshll.u32 %v1040, 16
        %v1198 = vor.u32 %v1195, %v1196
        %v1199 = vrot.slane %v1195, 4
        %v1201 = vshrl.u32 %v1041, 16
        %v1203 = vrot.slane %v1201, 7
        %v1204 = vshll.u32 %v1041, 16
        %v1206 = vor.u32 %v1203, %v1204
        %v1207 = vsel %vm488, %v1199, %v1206
        %v1208 = vrot.slane %v1203, 4
        %v1210 = vshrl.u32 %v1042, 16
        %v1212 = vrot.slane %v1210, 7
        %v1213 = vshll.u32 %v1042, 16
        %v1215 = vor.u32 %v1212, %v1213
        %v1216 = vrot.slane %v1212, 4
        %v1218 = vshrl.u32 %v1043, 16
        %v1220 = vrot.slane %v1218, 7
        %v1221 = vshll.u32 %v1043, 16
        %v1223 = vor.u32 %v1220, %v1221
        %v1224 = vsel %vm488, %v1216, %v1223
        %v1225 = vrot.slane %v1220, 4
        %v1227 = vshrl.u32 %v1044, 16
        %v1229 = vrot.slane %v1227, 7
        %v1230 = vshll.u32 %v1044, 16
        %v1232 = vor.u32 %v1229, %v1230
        %v1233 = vrot.slane %v1229, 4
        %v1235 = vshrl.u32 %v1045, 16
        %v1237 = vrot.slane %v1235, 7
        %v1238 = vshll.u32 %v1045, 16
        %v1240 = vor.u32 %v1237, %v1238
        %v1241 = vsel %vm488, %v1233, %v1240
        %v1242 = vrot.slane %v1237, 4
        %v1244 = vshrl.u32 %v1046, 16
        %v1246 = vrot.slane %v1244, 7
        %v1247 = vshll.u32 %v1046, 16
        %v1249 = vor.u32 %v1246, %v1247
        %v1250 = vrot.slane %v1246, 4
        %v1252 = vshrl.u32 %v1047, 16
        %v1254 = vrot.slane %v1252, 7
        %v1255 = vshll.u32 %v1047, 16
        %v1257 = vor.u32 %v1254, %v1255
        %v1258 = vsel %vm488, %v1250, %v1257
        %v1259 = vrot.slane %v1254, 4
        %v1261 = vshrl.u32 %v1048, 16
        %v1263 = vrot.slane %v1261, 7
        %v1264 = vshll.u32 %v1048, 16
        %v1266 = vor.u32 %v1263, %v1264
        %v1267 = vrot.slane %v1263, 4
        %v1269 = vshrl.u32 %v1049, 16
        %v1271 = vrot.slane %v1269, 7
        %v1272 = vshll.u32 %v1049, 16
        %v1274 = vor.u32 %v1271, %v1272
        %v1275 = vsel %vm488, %v1267, %v1274
        %v1276 = vrot.slane %v1271, 4
        %v1278 = vshrl.u32 %v1050, 16
        %v1280 = vrot.slane %v1278, 7
        %v1281 = vshll.u32 %v1050, 16
        %v1283 = vor.u32 %v1280, %v1281
        %v1284 = vrot.slane %v1280, 4
        %v1286 = vshrl.u32 %v1051, 16
        %v1288 = vrot.slane %v1286, 7
        %v1289 = vshll.u32 %v1051, 16
        %v1291 = vor.u32 %v1288, %v1289
        %v1292 = vsel %vm488, %v1284, %v1291
        %v1293 = vrot.slane %v1288, 4
        %v1295 = vshrl.u32 %v1052, 16
        %v1297 = vrot.slane %v1295, 7
        %v1298 = vshll.u32 %v1052, 16
        %v1300 = vor.u32 %v1297, %v1298
        %v1301 = vrot.slane %v1297, 4
        %v1303 = vshrl.u32 %v1053, 16
        %v1305 = vrot.slane %v1303, 7
        %v1306 = vshll.u32 %v1053, 16
        %v1308 = vor.u32 %v1305, %v1306
        %v1309 = vsel %vm488, %v1301, %v1308
        %v1310 = vrot.slane %v1305, 4
        %v1312 = vshrl.u32 %v1054, 16
        %v1314 = vrot.slane %v1312, 7
        %v1315 = vshll.u32 %v1054, 16
        %v1317 = vor.u32 %v1314, %v1315
        %v1318 = vrot.slane %v1314, 4
        %v1320 = vshrl.u32 %v1055, 16
        %v1322 = vrot.slane %v1320, 7
        %v1323 = vshll.u32 %v1055, 16
        %v1325 = vor.u32 %v1322, %v1323
        %v1326 = vsel %vm488, %v1318, %v1325
        %v1327 = vrot.slane %v1322, 4
        %1328 = vrot.lane.b32.xlu0 %v1062, 4
        %v1329 = vpop.permute.xlu0 %1328
        %1330 = vrot.lane.b32.xlu0 %v1071, 4
        %v1331 = vpop.permute.xlu0 %1330
        %1332 = vrot.lane.b32.xlu0 %v1072, 4
        %v1333 = vpop.permute.xlu0 %1332
        %1334 = vrot.lane.b32.xlu0 %v1079, 4
        %v1335 = vpop.permute.xlu0 %1334
        %1336 = vrot.lane.b32.xlu0 %v1088, 4
        %v1337 = vpop.permute.xlu0 %1336
        %1338 = vrot.lane.b32.xlu0 %v1089, 4
        %v1339 = vpop.permute.xlu0 %1338
        %1340 = vrot.lane.b32.xlu0 %v1096, 4
        %v1341 = vpop.permute.xlu0 %1340
        %1342 = vrot.lane.b32.xlu0 %v1105, 4
        %v1343 = vpop.permute.xlu0 %1342
        %1344 = vrot.lane.b32.xlu0 %v1106, 4
        %v1345 = vpop.permute.xlu0 %1344
        %1346 = vrot.lane.b32.xlu0 %v1113, 4
        %v1347 = vpop.permute.xlu0 %1346
        %1348 = vrot.lane.b32.xlu0 %v1122, 4
        %v1349 = vpop.permute.xlu0 %1348
        %1350 = vrot.lane.b32.xlu0 %v1123, 4
        %v1351 = vpop.permute.xlu0 %1350
        %1352 = vrot.lane.b32.xlu0 %v1130, 4
        %v1353 = vpop.permute.xlu0 %1352
        %1354 = vrot.lane.b32.xlu0 %v1139, 4
        %v1355 = vpop.permute.xlu0 %1354
        %1356 = vrot.lane.b32.xlu0 %v1140, 4
        %v1357 = vpop.permute.xlu0 %1356
        %1358 = vrot.lane.b32.xlu0 %v1147, 4
        %v1359 = vpop.permute.xlu0 %1358
        %1360 = vrot.lane.b32.xlu0 %v1156, 4
        %v1361 = vpop.permute.xlu0 %1360
        %1362 = vrot.lane.b32.xlu0 %v1157, 4
        %v1363 = vpop.permute.xlu0 %1362
        %1364 = vrot.lane.b32.xlu0 %v1164, 4
        %v1365 = vpop.permute.xlu0 %1364
        %1366 = vrot.lane.b32.xlu0 %v1173, 4
        %v1367 = vpop.permute.xlu0 %1366
        %1368 = vrot.lane.b32.xlu0 %v1174, 4
        %v1369 = vpop.permute.xlu0 %1368
        %1370 = vrot.lane.b32.xlu0 %v1181, 4
        %v1371 = vpop.permute.xlu0 %1370
        %1372 = vrot.lane.b32.xlu0 %v1190, 4
        %v1373 = vpop.permute.xlu0 %1372
        %1374 = vrot.lane.b32.xlu0 %v1191, 4
        %v1375 = vpop.permute.xlu0 %1374
        %1376 = vrot.lane.b32.xlu0 %v1198, 4
        %v1377 = vpop.permute.xlu0 %1376
        %1378 = vrot.lane.b32.xlu0 %v1207, 4
        %v1379 = vpop.permute.xlu0 %1378
        %1380 = vrot.lane.b32.xlu0 %v1208, 4
        %v1381 = vpop.permute.xlu0 %1380
        %1382 = vrot.lane.b32.xlu0 %v1215, 4
        %v1383 = vpop.permute.xlu0 %1382
        %1384 = vrot.lane.b32.xlu0 %v1224, 4
        %v1385 = vpop.permute.xlu0 %1384
        %1386 = vrot.lane.b32.xlu0 %v1225, 4
        %v1387 = vpop.permute.xlu0 %1386
        %1388 = vrot.lane.b32.xlu0 %v1232, 4
        %v1389 = vpop.permute.xlu0 %1388
        %1390 = vrot.lane.b32.xlu0 %v1241, 4
        %v1391 = vpop.permute.xlu0 %1390
        %1392 = vrot.lane.b32.xlu0 %v1242, 4
        %v1393 = vpop.permute.xlu0 %1392
        %1394 = vrot.lane.b32.xlu0 %v1249, 4
        %v1395 = vpop.permute.xlu0 %1394
        %1396 = vrot.lane.b32.xlu0 %v1258, 4
        %v1397 = vpop.permute.xlu0 %1396
        %1398 = vrot.lane.b32.xlu0 %v1259, 4
        %v1399 = vpop.permute.xlu0 %1398
        %1400 = vrot.lane.b32.xlu0 %v1266, 4
        %v1401 = vpop.permute.xlu0 %1400
        %1402 = vrot.lane.b32.xlu0 %v1275, 4
        %v1403 = vpop.permute.xlu0 %1402
        %1404 = vrot.lane.b32.xlu0 %v1276, 4
        %v1405 = vpop.permute.xlu0 %1404
        %1406 = vrot.lane.b32.xlu0 %v1283, 4
        %v1407 = vpop.permute.xlu0 %1406
        %1408 = vrot.lane.b32.xlu0 %v1292, 4
        %v1409 = vpop.permute.xlu0 %1408
        %1410 = vrot.lane.b32.xlu0 %v1293, 4
        %v1411 = vpop.permute.xlu0 %1410
        %1412 = vrot.lane.b32.xlu0 %v1300, 4
        %v1413 = vpop.permute.xlu0 %1412
        %1414 = vrot.lane.b32.xlu0 %v1309, 4
        %v1415 = vpop.permute.xlu0 %1414
        %1416 = vrot.lane.b32.xlu0 %v1310, 4
        %v1417 = vpop.permute.xlu0 %1416
        %1418 = vrot.lane.b32.xlu0 %v1317, 4
        %v1419 = vpop.permute.xlu0 %1418
        %1420 = vrot.lane.b32.xlu0 %v1326, 4
        %v1421 = vpop.permute.xlu0 %1420
        %1422 = vrot.lane.b32.xlu0 %v1327, 4
        %v1423 = vpop.permute.xlu0 %1422
        %vm1472 = vcmask 289824
        %vm1473 = vmand %vm1472, %vm811
        %v1474 = vld [vmem:[%s809] sm:$0xf]
        %v1475 = vsel %vm1473, %v1329, %v1474
        %1476 = vst [vmem:[%s809] sm:$0xf] %v1475
        %vm1477 = vcmask 289824
        %1478 = vst.msk [vmem:[%s809 + $0x4] sm:$0xf] %vm1477, %v1331
        %vm1479 = vcmask 286752
        %vm1480 = vmand %vm1479, %vm486
        %v1481 = vld [vmem:[%s809 + $0x8] sm:$0x1]
        %v1482 = vsel %vm1480, %v1333, %v1481
        %1483 = vst [vmem:[%s809 + $0x8] sm:$0x1] %v1482
        %v1484 = vld [vmem:[%s809 + $0xc] sm:$0xf]
        %v1485 = vsel %vm1473, %v1335, %v1484
        %1486 = vst [vmem:[%s809 + $0xc] sm:$0xf] %v1485
        %1487 = vst.msk [vmem:[%s809 + $0x10] sm:$0xf] %vm1477, %v1337
        %v1488 = vld [vmem:[%s809 + $0x14] sm:$0x1]
        %v1489 = vsel %vm1480, %v1339, %v1488
        %1490 = vst [vmem:[%s809 + $0x14] sm:$0x1] %v1489
        %v1491 = vld [vmem:[%s809 + $0x18] sm:$0xf]
        %v1492 = vsel %vm1473, %v1341, %v1491
        %1493 = vst [vmem:[%s809 + $0x18] sm:$0xf] %v1492
        %1494 = vst.msk [vmem:[%s809 + $0x1c] sm:$0xf] %vm1477, %v1343
        %v1495 = vld [vmem:[%s809 + $0x20] sm:$0x1]
        %v1496 = vsel %vm1480, %v1345, %v1495
        %1497 = vst [vmem:[%s809 + $0x20] sm:$0x1] %v1496
        %v1498 = vld [vmem:[%s809 + $0x24] sm:$0xf]
        %v1499 = vsel %vm1473, %v1347, %v1498
        %1500 = vst [vmem:[%s809 + $0x24] sm:$0xf] %v1499
        %1501 = vst.msk [vmem:[%s809 + $0x28] sm:$0xf] %vm1477, %v1349
        %v1502 = vld [vmem:[%s809 + $0x2c] sm:$0x1]
        %v1503 = vsel %vm1480, %v1351, %v1502
        %1504 = vst [vmem:[%s809 + $0x2c] sm:$0x1] %v1503
        %v1505 = vld [vmem:[%s809 + $0x30] sm:$0xf]
        %v1506 = vsel %vm1473, %v1353, %v1505
        %1507 = vst [vmem:[%s809 + $0x30] sm:$0xf] %v1506
        %1508 = vst.msk [vmem:[%s809 + $0x34] sm:$0xf] %vm1477, %v1355
        %v1509 = vld [vmem:[%s809 + $0x38] sm:$0x1]
        %v1510 = vsel %vm1480, %v1357, %v1509
        %1511 = vst [vmem:[%s809 + $0x38] sm:$0x1] %v1510
        %v1512 = vld [vmem:[%s809 + $0x3c] sm:$0xf]
        %v1513 = vsel %vm1473, %v1359, %v1512
        %1514 = vst [vmem:[%s809 + $0x3c] sm:$0xf] %v1513
        %1515 = vst.msk [vmem:[%s809 + $0x40] sm:$0xf] %vm1477, %v1361
        %v1516 = vld [vmem:[%s809 + $0x44] sm:$0x1]
        %v1517 = vsel %vm1480, %v1363, %v1516
        %1518 = vst [vmem:[%s809 + $0x44] sm:$0x1] %v1517
        %v1519 = vld [vmem:[%s809 + $0x48] sm:$0xf]
        %v1520 = vsel %vm1473, %v1365, %v1519
        %1521 = vst [vmem:[%s809 + $0x48] sm:$0xf] %v1520
        %1522 = vst.msk [vmem:[%s809 + $0x4c] sm:$0xf] %vm1477, %v1367
        %v1523 = vld [vmem:[%s809 + $0x50] sm:$0x1]
        %v1524 = vsel %vm1480, %v1369, %v1523
        %1525 = vst [vmem:[%s809 + $0x50] sm:$0x1] %v1524
        %v1526 = vld [vmem:[%s809 + $0x54] sm:$0xf]
        %v1527 = vsel %vm1473, %v1371, %v1526
        %1528 = vst [vmem:[%s809 + $0x54] sm:$0xf] %v1527
        %1529 = vst.msk [vmem:[%s809 + $0x58] sm:$0xf] %vm1477, %v1373
        %v1530 = vld [vmem:[%s809 + $0x5c] sm:$0x1]
        %v1531 = vsel %vm1480, %v1375, %v1530
        %1532 = vst [vmem:[%s809 + $0x5c] sm:$0x1] %v1531
        %v1533 = vld [vmem:[%s809 + $0x60] sm:$0xf]
        %v1534 = vsel %vm1473, %v1377, %v1533
        %1535 = vst [vmem:[%s809 + $0x60] sm:$0xf] %v1534
        %1536 = vst.msk [vmem:[%s809 + $0x64] sm:$0xf] %vm1477, %v1379
        %v1537 = vld [vmem:[%s809 + $0x68] sm:$0x1]
        %v1538 = vsel %vm1480, %v1381, %v1537
        %1539 = vst [vmem:[%s809 + $0x68] sm:$0x1] %v1538
        %v1540 = vld [vmem:[%s809 + $0x6c] sm:$0xf]
        %v1541 = vsel %vm1473, %v1383, %v1540
        %1542 = vst [vmem:[%s809 + $0x6c] sm:$0xf] %v1541
        %1543 = vst.msk [vmem:[%s809 + $0x70] sm:$0xf] %vm1477, %v1385
        %v1544 = vld [vmem:[%s809 + $0x74] sm:$0x1]
        %v1545 = vsel %vm1480, %v1387, %v1544
        %1546 = vst [vmem:[%s809 + $0x74] sm:$0x1] %v1545
        %v1547 = vld [vmem:[%s809 + $0x78] sm:$0xf]
        %v1548 = vsel %vm1473, %v1389, %v1547
        %1549 = vst [vmem:[%s809 + $0x78] sm:$0xf] %v1548
        %1550 = vst.msk [vmem:[%s809 + $0x7c] sm:$0xf] %vm1477, %v1391
        %v1551 = vld [vmem:[%s809 + $0x80] sm:$0x1]
        %v1552 = vsel %vm1480, %v1393, %v1551
        %1553 = vst [vmem:[%s809 + $0x80] sm:$0x1] %v1552
        %v1554 = vld [vmem:[%s809 + $0x84] sm:$0xf]
        %v1555 = vsel %vm1473, %v1395, %v1554
        %1556 = vst [vmem:[%s809 + $0x84] sm:$0xf] %v1555
        %1557 = vst.msk [vmem:[%s809 + $0x88] sm:$0xf] %vm1477, %v1397
        %v1558 = vld [vmem:[%s809 + $0x8c] sm:$0x1]
        %v1559 = vsel %vm1480, %v1399, %v1558
        %1560 = vst [vmem:[%s809 + $0x8c] sm:$0x1] %v1559
        %v1561 = vld [vmem:[%s809 + $0x90] sm:$0xf]
        %v1562 = vsel %vm1473, %v1401, %v1561
        %1563 = vst [vmem:[%s809 + $0x90] sm:$0xf] %v1562
        %1564 = vst.msk [vmem:[%s809 + $0x94] sm:$0xf] %vm1477, %v1403
        %v1565 = vld [vmem:[%s809 + $0x98] sm:$0x1]
        %v1566 = vsel %vm1480, %v1405, %v1565
        %1567 = vst [vmem:[%s809 + $0x98] sm:$0x1] %v1566
        %v1568 = vld [vmem:[%s809 + $0x9c] sm:$0xf]
        %v1569 = vsel %vm1473, %v1407, %v1568
        %1570 = vst [vmem:[%s809 + $0x9c] sm:$0xf] %v1569
        %1571 = vst.msk [vmem:[%s809 + $0xa0] sm:$0xf] %vm1477, %v1409
        %v1572 = vld [vmem:[%s809 + $0xa4] sm:$0x1]
        %v1573 = vsel %vm1480, %v1411, %v1572
        %1574 = vst [vmem:[%s809 + $0xa4] sm:$0x1] %v1573
        %v1575 = vld [vmem:[%s809 + $0xa8] sm:$0xf]
        %v1576 = vsel %vm1473, %v1413, %v1575
        %1577 = vst [vmem:[%s809 + $0xa8] sm:$0xf] %v1576
        %1578 = vst.msk [vmem:[%s809 + $0xac] sm:$0xf] %vm1477, %v1415
        %v1579 = vld [vmem:[%s809 + $0xb0] sm:$0x1]
        %v1580 = vsel %vm1480, %v1417, %v1579
        %1581 = vst [vmem:[%s809 + $0xb0] sm:$0x1] %v1580
        %v1582 = vld [vmem:[%s809 + $0xb4] sm:$0xf]
        %v1583 = vsel %vm1473, %v1419, %v1582
        %1584 = vst [vmem:[%s809 + $0xb4] sm:$0xf] %v1583
        %1585 = vst.msk [vmem:[%s809 + $0xb8] sm:$0xf] %vm1477, %v1421
        %v1586 = vld [vmem:[%s809 + $0xbc] sm:$0x1]
        %v1587 = vsel %vm1480, %v1423, %v1586
        %1588 = vst [vmem:[%s809 + $0xbc] sm:$0x1] %v1587
        %v1589 = vld [vmem:[%s4] sm:$0x1]
        %v1591 = vlaneseq
        %v1592 = vshrl.u32 %v1591, 7
        %v1593 = vsub.s32 0, %v1592
        %v1594 = vrot.slane %v1589, %v1593
        %v1596 = vld [vmem:[#allocation2] sm:$0xf]
        %v1597 = vld [vmem:[#allocation2 + $0x4] sm:$0xf]
        %v1598 = vld [vmem:[#allocation2 + $0xc] sm:$0xf]
        %v1599 = vld [vmem:[#allocation2 + $0x10] sm:$0xf]
        %v1600 = vld [vmem:[#allocation2 + $0x18] sm:$0xf]
        %v1601 = vld [vmem:[#allocation2 + $0x1c] sm:$0xf]
        %v1602 = vld [vmem:[#allocation2 + $0x24] sm:$0xf]
        %v1603 = vld [vmem:[#allocation2 + $0x28] sm:$0xf]
        %v1604 = vld [vmem:[#allocation2 + $0x30] sm:$0xf]
        %v1605 = vld [vmem:[#allocation2 + $0x34] sm:$0xf]
        %v1606 = vld [vmem:[#allocation2 + $0x3c] sm:$0xf]
        %v1607 = vld [vmem:[#allocation2 + $0x40] sm:$0xf]
        %v1608 = vld [vmem:[#allocation2 + $0x48] sm:$0xf]
        %v1609 = vld [vmem:[#allocation2 + $0x4c] sm:$0xf]
        %v1610 = vld [vmem:[#allocation2 + $0x54] sm:$0xf]
        %v1611 = vld [vmem:[#allocation2 + $0x58] sm:$0xf]
        %v1612 = vld [vmem:[#allocation2 + $0x60] sm:$0xf]
        %v1613 = vld [vmem:[#allocation2 + $0x64] sm:$0xf]
        %v1614 = vld [vmem:[#allocation2 + $0x6c] sm:$0xf]
        %v1615 = vld [vmem:[#allocation2 + $0x70] sm:$0xf]
        %v1616 = vld [vmem:[#allocation2 + $0x78] sm:$0xf]
        %v1617 = vld [vmem:[#allocation2 + $0x7c] sm:$0xf]
        %v1618 = vld [vmem:[#allocation2 + $0x84] sm:$0xf]
        %v1619 = vld [vmem:[#allocation2 + $0x88] sm:$0xf]
        %v1620 = vld [vmem:[#allocation2 + $0x90] sm:$0xf]
        %v1621 = vld [vmem:[#allocation2 + $0x94] sm:$0xf]
        %v1622 = vld [vmem:[#allocation2 + $0x9c] sm:$0xf]
        %v1623 = vld [vmem:[#allocation2 + $0xa0] sm:$0xf]
        %v1624 = vld [vmem:[#allocation2 + $0xa8] sm:$0xf]
        %v1625 = vld [vmem:[#allocation2 + $0xac] sm:$0xf]
        %v1626 = vld [vmem:[#allocation2 + $0xb4] sm:$0xf]
        %v1627 = vld [vmem:[#allocation2 + $0xb8] sm:$0xf]
        %v1628 = vld [vmem:[%s3] sm:$0xf]
        %v1629 = vld [vmem:[%s3 + $0x4] sm:$0xf]
        %v1630 = vld [vmem:[%s3 + $0x8] sm:$0xf]
        %v1631 = vld [vmem:[%s3 + $0xc] sm:$0xf]
        %v1632 = vld [vmem:[%s3 + $0x10] sm:$0x3]
        %v1665 = vunpack.c.l.b16 %v1596
        %v1666 = vunpack.c.l.b16 %v1597
        %v1667 = vunpack.c.l.b16 %v1598
        %v1668 = vunpack.c.l.b16 %v1599
        %v1669 = vunpack.c.l.b16 %v1600
        %v1670 = vunpack.c.l.b16 %v1601
        %v1671 = vunpack.c.l.b16 %v1602
        %v1672 = vunpack.c.l.b16 %v1603
        %v1673 = vunpack.c.l.b16 %v1604
        %v1674 = vunpack.c.l.b16 %v1605
        %v1675 = vunpack.c.l.b16 %v1606
        %v1676 = vunpack.c.l.b16 %v1607
        %v1677 = vunpack.c.l.b16 %v1608
        %v1678 = vunpack.c.l.b16 %v1609
        %v1679 = vunpack.c.l.b16 %v1610
        %v1680 = vunpack.c.l.b16 %v1611
        %v1681 = vunpack.c.l.b16 %v1612
        %v1682 = vunpack.c.l.b16 %v1613
        %v1683 = vunpack.c.l.b16 %v1614
        %v1684 = vunpack.c.l.b16 %v1615
        %v1685 = vunpack.c.l.b16 %v1616
        %v1686 = vunpack.c.l.b16 %v1617
        %v1687 = vunpack.c.l.b16 %v1618
        %v1688 = vunpack.c.l.b16 %v1619
        %v1689 = vunpack.c.l.b16 %v1620
        %v1690 = vunpack.c.l.b16 %v1621
        %v1691 = vunpack.c.l.b16 %v1622
        %v1692 = vunpack.c.l.b16 %v1623
        %v1693 = vunpack.c.l.b16 %v1624
        %v1694 = vunpack.c.l.b16 %v1625
        %v1695 = vunpack.c.l.b16 %v1626
        %v1696 = vunpack.c.l.b16 %v1627
        %v1697 = vpack.c.b16 %v1666, %v1665
        %v1698 = vpack.c.b16 %v1668, %v1667
        %v1699 = vpack.c.b16 %v1670, %v1669
        %v1700 = vpack.c.b16 %v1672, %v1671
        %v1701 = vpack.c.b16 %v1674, %v1673
        %v1702 = vpack.c.b16 %v1676, %v1675
        %v1703 = vpack.c.b16 %v1678, %v1677
        %v1704 = vpack.c.b16 %v1680, %v1679
        %v1705 = vpack.c.b16 %v1682, %v1681
        %v1706 = vpack.c.b16 %v1684, %v1683
        %v1707 = vpack.c.b16 %v1686, %v1685
        %v1708 = vpack.c.b16 %v1688, %v1687
        %v1709 = vpack.c.b16 %v1690, %v1689
        %v1710 = vpack.c.b16 %v1692, %v1691
        %v1711 = vpack.c.b16 %v1694, %v1693
        %v1712 = vpack.c.b16 %v1696, %v1695
        %v1718 = vunpack.c.l.b16 %v1628
        %v1719 = vunpack.c.l.b16 %v1629
        %v1720 = vunpack.c.l.b16 %v1630
        %v1721 = vunpack.c.l.b16 %v1631
        %v1722 = vunpack.c.l.b16 %v1632
        %v1723 = vpack.c.b16 %v1719, %v1718
        %v1724 = vpack.c.b16 %v1721, %v1720
        %v1725 = vpack.c.b16 %v1722, %v1722
        %vm1728 = vcmask 293888
        %v1730 = vsel %vm1728, %v1697, 0
        %v1733 = vsel %vm1728, %v1698, 0
        %v1736 = vsel %vm1728, %v1699, 0
        %v1739 = vsel %vm1728, %v1700, 0
        %v1742 = vsel %vm1728, %v1701, 0
        %v1745 = vsel %vm1728, %v1702, 0
        %v1748 = vsel %vm1728, %v1703, 0
        %v1751 = vsel %vm1728, %v1704, 0
        %v1754 = vsel %vm1728, %v1705, 0
        %v1757 = vsel %vm1728, %v1706, 0
        %v1760 = vsel %vm1728, %v1707, 0
        %v1763 = vsel %vm1728, %v1708, 0
        %v1766 = vsel %vm1728, %v1709, 0
        %v1769 = vsel %vm1728, %v1710, 0
        %v1772 = vsel %vm1728, %v1711, 0
        %v1775 = vsel %vm1728, %v1712, 0
        %vm1777 = vcmask 1041408
        %v1779 = vsel %vm1777, %v1725, 0
        %1781 = vmatprep.subr.bf16.mxu0 0
        %1782 = vmatpush1.bf16.msra.mxu0 %v1723
        %1783 = vmatprep.subr.bf16.mxu0 0
        %1784 = vmatpush1.bf16.msra.mxu0 %v1724
        %1785 = vmatprep.subr.bf16.mxu0 0
        %1786 = vmatpush1.bf16.msra.mxu0 %v1779
        %1787 = vmatprep.subr.bf16.mxu0 0
        %1788 = vmatpush1.bf16.msra.mxu0 0
        %1789 = vmatprep.subr.bf16.mxu0 0
        %1790 = vmatpush1.bf16.msra.mxu0 0
        %1791 = vmatprep.subr.bf16.mxu0 0
        %1792 = vmatpush1.bf16.msra.mxu0 0
        %1793 = vmatprep.subr.bf16.mxu0 0
        %1794 = vmatpush1.bf16.msra.mxu0 0
        %1795 = vmatprep.subr.bf16.mxu0 0
        %1796 = vmatpush1.bf16.msra.mxu0 0
        %1797 = vmatprep.subr.bf16.mxu0 0
        %1798 = vmatpush1.bf16.msra.mxu0 0
        %1799 = vmatprep.subr.bf16.mxu0 0
        %1800 = vmatpush1.bf16.msra.mxu0 0
        %1801 = vmatprep.subr.bf16.mxu0 0
        %1802 = vmatpush1.bf16.msra.mxu0 0
        %1803 = vmatprep.subr.bf16.mxu0 0
        %1804 = vmatpush1.bf16.msra.mxu0 0
        %1805 = vmatprep.subr.bf16.mxu0 0
        %1806 = vmatpush1.bf16.msra.mxu0 0
        %1807 = vmatprep.subr.bf16.mxu0 0
        %1808 = vmatpush1.bf16.msra.mxu0 0
        %1809 = vmatprep.subr.bf16.mxu0 0
        %1810 = vmatpush1.bf16.msra.mxu0 0
        %1811 = vmatprep.subr.bf16.mxu0 0
        %1812 = vmatpush1.bf16.msra.mxu0 0
        %1813 = vmatprep.mubr.bf16.mxu0 0
        %1814 = vmatmul.mubr.bf16.gmra.mrb[0].mxu0 %v1730
        %v1815 = vpop.f32.mrb[0].mxu0
        %v1816 = vadd.f32 0.0, %v1815
        %v1817 = vpop.f32.mrb[0].mxu0
        %v1818 = vpop.f32.mrb[0].mxu0
        %v1819 = vadd.f32 0.0, %v1818
        %v1820 = vpop.f32.mrb[0].mxu0
        %1821 = vmatprep.mubr.bf16.mxu0 0
        %1822 = vmatmul.mubr.bf16.gmra.mrb[0].mxu0 %v1733
        %v1823 = vpop.f32.mrb[0].mxu0
        %v1824 = vadd.f32 0.0, %v1823
        %v1825 = vpop.f32.mrb[0].mxu0
        %v1826 = vpop.f32.mrb[0].mxu0
        %v1827 = vadd.f32 0.0, %v1826
        %v1828 = vpop.f32.mrb[0].mxu0
        %1829 = vmatprep.mubr.bf16.mxu0 0
        %1830 = vmatmul.mubr.bf16.gmra.mrb[0].mxu0 %v1736
        %v1831 = vpop.f32.mrb[0].mxu0
        %v1832 = vadd.f32 0.0, %v1831
        %v1833 = vpop.f32.mrb[0].mxu0
        %v1834 = vpop.f32.mrb[0].mxu0
        %v1835 = vadd.f32 0.0, %v1834
        %v1836 = vpop.f32.mrb[0].mxu0
        %1837 = vmatprep.mubr.bf16.mxu0 0
        %1838 = vmatmul.mubr.bf16.gmra.mrb[0].mxu0 %v1739
        %v1839 = vpop.f32.mrb[0].mxu0
        %v1840 = vadd.f32 0.0, %v1839
        %v1841 = vpop.f32.mrb[0].mxu0
        %v1842 = vpop.f32.mrb[0].mxu0
        %v1843 = vadd.f32 0.0, %v1842
        %v1844 = vpop.f32.mrb[0].mxu0
        %1845 = vmatprep.mubr.bf16.mxu0 0
        %1846 = vmatmul.mubr.bf16.gmra.mrb[0].mxu0 %v1742
        %v1847 = vpop.f32.mrb[0].mxu0
        %v1848 = vadd.f32 0.0, %v1847
        %v1849 = vpop.f32.mrb[0].mxu0
        %v1850 = vpop.f32.mrb[0].mxu0
        %v1851 = vadd.f32 0.0, %v1850
        %v1852 = vpop.f32.mrb[0].mxu0
        %1853 = vmatprep.mubr.bf16.mxu0 0
        %1854 = vmatmul.mubr.bf16.gmra.mrb[0].mxu0 %v1745
        %v1855 = vpop.f32.mrb[0].mxu0
        %v1856 = vadd.f32 0.0, %v1855
        %v1857 = vpop.f32.mrb[0].mxu0
        %v1858 = vpop.f32.mrb[0].mxu0
        %v1859 = vadd.f32 0.0, %v1858
        %v1860 = vpop.f32.mrb[0].mxu0
        %1861 = vmatprep.mubr.bf16.mxu0 0
        %1862 = vmatmul.mubr.bf16.gmra.mrb[0].mxu0 %v1748
        %v1863 = vpop.f32.mrb[0].mxu0
        %v1864 = vadd.f32 0.0, %v1863
        %v1865 = vpop.f32.mrb[0].mxu0
        %v1866 = vpop.f32.mrb[0].mxu0
        %v1867 = vadd.f32 0.0, %v1866
        %v1868 = vpop.f32.mrb[0].mxu0
        %1869 = vmatprep.mubr.bf16.mxu0 0
        %1870 = vmatmul.mubr.bf16.gmra.mrb[0].mxu0 %v1751
        %v1871 = vpop.f32.mrb[0].mxu0
        %v1872 = vadd.f32 0.0, %v1871
        %v1873 = vpop.f32.mrb[0].mxu0
        %v1874 = vpop.f32.mrb[0].mxu0
        %v1875 = vadd.f32 0.0, %v1874
        %v1876 = vpop.f32.mrb[0].mxu0
        %1877 = vmatprep.mubr.bf16.mxu0 0
        %1878 = vmatmul.mubr.bf16.gmra.mrb[0].mxu0 %v1754
        %v1879 = vpop.f32.mrb[0].mxu0
        %v1880 = vadd.f32 0.0, %v1879
        %v1881 = vpop.f32.mrb[0].mxu0
        %v1882 = vpop.f32.mrb[0].mxu0
        %v1883 = vadd.f32 0.0, %v1882
        %v1884 = vpop.f32.mrb[0].mxu0
        %1885 = vmatprep.mubr.bf16.mxu0 0
        %1886 = vmatmul.mubr.bf16.gmra.mrb[0].mxu0 %v1757
        %v1887 = vpop.f32.mrb[0].mxu0
        %v1888 = vadd.f32 0.0, %v1887
        %v1889 = vpop.f32.mrb[0].mxu0
        %v1890 = vpop.f32.mrb[0].mxu0
        %v1891 = vadd.f32 0.0, %v1890
        %v1892 = vpop.f32.mrb[0].mxu0
        %1893 = vmatprep.mubr.bf16.mxu0 0
        %1894 = vmatmul.mubr.bf16.gmra.mrb[0].mxu0 %v1760
        %v1895 = vpop.f32.mrb[0].mxu0
        %v1896 = vadd.f32 0.0, %v1895
        %v1897 = vpop.f32.mrb[0].mxu0
        %v1898 = vpop.f32.mrb[0].mxu0
        %v1899 = vadd.f32 0.0, %v1898
        %v1900 = vpop.f32.mrb[0].mxu0
        %1901 = vmatprep.mubr.bf16.mxu0 0
        %1902 = vmatmul.mubr.bf16.gmra.mrb[0].mxu0 %v1763
        %v1903 = vpop.f32.mrb[0].mxu0
        %v1904 = vadd.f32 0.0, %v1903
        %v1905 = vpop.f32.mrb[0].mxu0
        %v1906 = vpop.f32.mrb[0].mxu0
        %v1907 = vadd.f32 0.0, %v1906
        %v1908 = vpop.f32.mrb[0].mxu0
        %1909 = vmatprep.mubr.bf16.mxu0 0
        %1910 = vmatmul.mubr.bf16.gmra.mrb[0].mxu0 %v1766
        %v1911 = vpop.f32.mrb[0].mxu0
        %v1912 = vadd.f32 0.0, %v1911
        %v1913 = vpop.f32.mrb[0].mxu0
        %v1914 = vpop.f32.mrb[0].mxu0
        %v1915 = vadd.f32 0.0, %v1914
        %v1916 = vpop.f32.mrb[0].mxu0
        %1917 = vmatprep.mubr.bf16.mxu0 0
        %1918 = vmatmul.mubr.bf16.gmra.mrb[0].mxu0 %v1769
        %v1919 = vpop.f32.mrb[0].mxu0
        %v1920 = vadd.f32 0.0, %v1919
        %v1921 = vpop.f32.mrb[0].mxu0
        %v1922 = vpop.f32.mrb[0].mxu0
        %v1923 = vadd.f32 0.0, %v1922
        %v1924 = vpop.f32.mrb[0].mxu0
        %1925 = vmatprep.mubr.bf16.mxu0 0
        %1926 = vmatmul.mubr.bf16.gmra.mrb[0].mxu0 %v1772
        %v1927 = vpop.f32.mrb[0].mxu0
        %v1928 = vadd.f32 0.0, %v1927
        %v1929 = vpop.f32.mrb[0].mxu0
        %v1930 = vpop.f32.mrb[0].mxu0
        %v1931 = vadd.f32 0.0, %v1930
        %v1932 = vpop.f32.mrb[0].mxu0
        %1933 = vmatprep.mubr.bf16.mxu0 0
        %1934 = vmatmul.mubr.bf16.gmra.mrb[0].mxu0 %v1775
        %v1935 = vpop.f32.mrb[0].mxu0
        %v1936 = vadd.f32 0.0, %v1935
        %v1937 = vpop.f32.mrb[0].mxu0
        %v1938 = vpop.f32.mrb[0].mxu0
        %v1939 = vadd.f32 0.0, %v1938
        %v1940 = vpop.f32.mrb[0].mxu0
        %1941 = vdwg.mxu0
        %v1942 = vadd.f32 %v1594, %v1816
        %v1943 = vadd.f32 %v1594, %v1819
        %v1944 = vadd.f32 %v1594, %v1824
        %v1945 = vadd.f32 %v1594, %v1827
        %v1946 = vadd.f32 %v1594, %v1832
        %v1947 = vadd.f32 %v1594, %v1835
        %v1948 = vadd.f32 %v1594, %v1840
        %v1949 = vadd.f32 %v1594, %v1843
        %v1950 = vadd.f32 %v1594, %v1848
        %v1951 = vadd.f32 %v1594, %v1851
        %v1952 = vadd.f32 %v1594, %v1856
        %v1953 = vadd.f32 %v1594, %v1859
        %v1954 = vadd.f32 %v1594, %v1864
        %v1955 = vadd.f32 %v1594, %v1867
        %v1956 = vadd.f32 %v1594, %v1872
        %v1957 = vadd.f32 %v1594, %v1875
        %v1958 = vadd.f32 %v1594, %v1880
        %v1959 = vadd.f32 %v1594, %v1883
        %v1960 = vadd.f32 %v1594, %v1888
        %v1961 = vadd.f32 %v1594, %v1891
        %v1962 = vadd.f32 %v1594, %v1896
        %v1963 = vadd.f32 %v1594, %v1899
        %v1964 = vadd.f32 %v1594, %v1904
        %v1965 = vadd.f32 %v1594, %v1907
        %v1966 = vadd.f32 %v1594, %v1912
        %v1967 = vadd.f32 %v1594, %v1915
        %v1968 = vadd.f32 %v1594, %v1920
        %v1969 = vadd.f32 %v1594, %v1923
        %v1970 = vadd.f32 %v1594, %v1928
        %v1971 = vadd.f32 %v1594, %v1931
        %v1972 = vadd.f32 %v1594, %v1936
        %v1973 = vadd.f32 %v1594, %v1939
        %v1974 = vld [vmem:[#allocation2] sm:$0xf]
        %v1975 = vld [vmem:[#allocation2 + $0x4] sm:$0xf]
        %v1976 = vld [vmem:[#allocation2 + $0x8] sm:$0x1]
        %v1977 = vld [vmem:[#allocation2 + $0xc] sm:$0xf]
        %v1978 = vld [vmem:[#allocation2 + $0x10] sm:$0xf]
        %v1979 = vld [vmem:[#allocation2 + $0x14] sm:$0x1]
        %v1980 = vld [vmem:[#allocation2 + $0x18] sm:$0xf]
        %v1981 = vld [vmem:[#allocation2 + $0x1c] sm:$0xf]
        %v1982 = vld [vmem:[#allocation2 + $0x20] sm:$0x1]
        %v1983 = vld [vmem:[#allocation2 + $0x24] sm:$0xf]
        %v1984 = vld [vmem:[#allocation2 + $0x28] sm:$0xf]
        %v1985 = vld [vmem:[#allocation2 + $0x2c] sm:$0x1]
        %v1986 = vld [vmem:[#allocation2 + $0x30] sm:$0xf]
        %v1987 = vld [vmem:[#allocation2 + $0x34] sm:$0xf]
        %v1988 = vld [vmem:[#allocation2 + $0x38] sm:$0x1]
        %v1989 = vld [vmem:[#allocation2 + $0x3c] sm:$0xf]
        %v1990 = vld [vmem:[#allocation2 + $0x40] sm:$0xf]
        %v1991 = vld [vmem:[#allocation2 + $0x44] sm:$0x1]
        %v1992 = vld [vmem:[#allocation2 + $0x48] sm:$0xf]
        %v1993 = vld [vmem:[#allocation2 + $0x4c] sm:$0xf]
        %v1994 = vld [vmem:[#allocation2 + $0x50] sm:$0x1]
        %v1995 = vld [vmem:[#allocation2 + $0x54] sm:$0xf]
        %v1996 = vld [vmem:[#allocation2 + $0x58] sm:$0xf]
        %v1997 = vld [vmem:[#allocation2 + $0x5c] sm:$0x1]
        %v1998 = vld [vmem:[#allocation2 + $0x60] sm:$0xf]
        %v1999 = vld [vmem:[#allocation2 + $0x64] sm:$0xf]
        %v2000 = vld [vmem:[#allocation2 + $0x68] sm:$0x1]
        %v2001 = vld [vmem:[#allocation2 + $0x6c] sm:$0xf]
        %v2002 = vld [vmem:[#allocation2 + $0x70] sm:$0xf]
        %v2003 = vld [vmem:[#allocation2 + $0x74] sm:$0x1]
        %v2004 = vld [vmem:[#allocation2 + $0x78] sm:$0xf]
        %v2005 = vld [vmem:[#allocation2 + $0x7c] sm:$0xf]
        %v2006 = vld [vmem:[#allocation2 + $0x80] sm:$0x1]
        %v2007 = vld [vmem:[#allocation2 + $0x84] sm:$0xf]
        %v2008 = vld [vmem:[#allocation2 + $0x88] sm:$0xf]
        %v2009 = vld [vmem:[#allocation2 + $0x8c] sm:$0x1]
        %v2010 = vld [vmem:[#allocation2 + $0x90] sm:$0xf]
        %v2011 = vld [vmem:[#allocation2 + $0x94] sm:$0xf]
        %v2012 = vld [vmem:[#allocation2 + $0x98] sm:$0x1]
        %v2013 = vld [vmem:[#allocation2 + $0x9c] sm:$0xf]
        %v2014 = vld [vmem:[#allocation2 + $0xa0] sm:$0xf]
        %v2015 = vld [vmem:[#allocation2 + $0xa4] sm:$0x1]
        %v2016 = vld [vmem:[#allocation2 + $0xa8] sm:$0xf]
        %v2017 = vld [vmem:[#allocation2 + $0xac] sm:$0xf]
        %v2018 = vld [vmem:[#allocation2 + $0xb0] sm:$0x1]
        %v2019 = vld [vmem:[#allocation2 + $0xb4] sm:$0xf]
        %v2020 = vld [vmem:[#allocation2 + $0xb8] sm:$0xf]
        %v2021 = vld [vmem:[#allocation2 + $0xbc] sm:$0x1]
        %vm2022 = vsmask.f32 3328
        %vm2023 = vsmask.f32 7440
        %vm2024 = vmor %vm2022, %vm2023
        %v2026 = vshrl.u32 %v1974, 16
        %v2028 = vrot.slane %v2026, 4
        %v2029 = vshll.u32 %v1974, 16
        %v2031 = vrot.slane %v2029, 5
        %v2032 = vor.u32 %v2028, %v2031
        %v2033 = vrot.slane %v2032, 4
        %v2035 = vshll.u32 %v1975, 16
        %v2037 = vrot.slane %v2035, 5
        %v2038 = vsel %vm2024, %v2033, %v2037
        %v2039 = vshrl.u32 %v1975, 16
        %v2041 = vrot.slane %v2039, 4
        %v2042 = vor.u32 %v2041, %v2037
        %v2043 = vrot.slane %v2042, 4
        %v2045 = vshll.u32 %v1976, 16
        %v2047 = vrot.slane %v2045, 5
        %v2048 = vsel %vm2024, %v2043, %v2047
        %v2050 = vshrl.u32 %v1977, 16
        %v2052 = vrot.slane %v2050, 4
        %v2053 = vshll.u32 %v1977, 16
        %v2055 = vrot.slane %v2053, 5
        %v2056 = vor.u32 %v2052, %v2055
        %v2057 = vrot.slane %v2056, 4
        %v2059 = vshll.u32 %v1978, 16
        %v2061 = vrot.slane %v2059, 5
        %v2062 = vsel %vm2024, %v2057, %v2061
        %v2063 = vshrl.u32 %v1978, 16
        %v2065 = vrot.slane %v2063, 4
        %v2066 = vor.u32 %v2065, %v2061
        %v2067 = vrot.slane %v2066, 4
        %v2069 = vshll.u32 %v1979, 16
        %v2071 = vrot.slane %v2069, 5
        %v2072 = vsel %vm2024, %v2067, %v2071
        %v2074 = vshrl.u32 %v1980, 16
        %v2076 = vrot.slane %v2074, 4
        %v2077 = vshll.u32 %v1980, 16
        %v2079 = vrot.slane %v2077, 5
        %v2080 = vor.u32 %v2076, %v2079
        %v2081 = vrot.slane %v2080, 4
        %v2083 = vshll.u32 %v1981, 16
        %v2085 = vrot.slane %v2083, 5
        %v2086 = vsel %vm2024, %v2081, %v2085
        %v2087 = vshrl.u32 %v1981, 16
        %v2089 = vrot.slane %v2087, 4
        %v2090 = vor.u32 %v2089, %v2085
        %v2091 = vrot.slane %v2090, 4
        %v2093 = vshll.u32 %v1982, 16
        %v2095 = vrot.slane %v2093, 5
        %v2096 = vsel %vm2024, %v2091, %v2095
        %v2098 = vshrl.u32 %v1983, 16
        %v2100 = vrot.slane %v2098, 4
        %v2101 = vshll.u32 %v1983, 16
        %v2103 = vrot.slane %v2101, 5
        %v2104 = vor.u32 %v2100, %v2103
        %v2105 = vrot.slane %v2104, 4
        %v2107 = vshll.u32 %v1984, 16
        %v2109 = vrot.slane %v2107, 5
        %v2110 = vsel %vm2024, %v2105, %v2109
        %v2111 = vshrl.u32 %v1984, 16
        %v2113 = vrot.slane %v2111, 4
        %v2114 = vor.u32 %v2113, %v2109
        %v2115 = vrot.slane %v2114, 4
        %v2117 = vshll.u32 %v1985, 16
        %v2119 = vrot.slane %v2117, 5
        %v2120 = vsel %vm2024, %v2115, %v2119
        %v2122 = vshrl.u32 %v1986, 16
        %v2124 = vrot.slane %v2122, 4
        %v2125 = vshll.u32 %v1986, 16
        %v2127 = vrot.slane %v2125, 5
        %v2128 = vor.u32 %v2124, %v2127
        %v2129 = vrot.slane %v2128, 4
        %v2131 = vshll.u32 %v1987, 16
        %v2133 = vrot.slane %v2131, 5
        %v2134 = vsel %vm2024, %v2129, %v2133
        %v2135 = vshrl.u32 %v1987, 16
        %v2137 = vrot.slane %v2135, 4
        %v2138 = vor.u32 %v2137, %v2133
        %v2139 = vrot.slane %v2138, 4
        %v2141 = vshll.u32 %v1988, 16
        %v2143 = vrot.slane %v2141, 5
        %v2144 = vsel %vm2024, %v2139, %v2143
        %v2146 = vshrl.u32 %v1989, 16
        %v2148 = vrot.slane %v2146, 4
        %v2149 = vshll.u32 %v1989, 16
        %v2151 = vrot.slane %v2149, 5
        %v2152 = vor.u32 %v2148, %v2151
        %v2153 = vrot.slane %v2152, 4
        %v2155 = vshll.u32 %v1990, 16
        %v2157 = vrot.slane %v2155, 5
        %v2158 = vsel %vm2024, %v2153, %v2157
        %v2159 = vshrl.u32 %v1990, 16
        %v2161 = vrot.slane %v2159, 4
        %v2162 = vor.u32 %v2161, %v2157
        %v2163 = vrot.slane %v2162, 4
        %v2165 = vshll.u32 %v1991, 16
        %v2167 = vrot.slane %v2165, 5
        %v2168 = vsel %vm2024, %v2163, %v2167
        %v2170 = vshrl.u32 %v1992, 16
        %v2172 = vrot.slane %v2170, 4
        %v2173 = vshll.u32 %v1992, 16
        %v2175 = vrot.slane %v2173, 5
        %v2176 = vor.u32 %v2172, %v2175
        %v2177 = vrot.slane %v2176, 4
        %v2179 = vshll.u32 %v1993, 16
        %v2181 = vrot.slane %v2179, 5
        %v2182 = vsel %vm2024, %v2177, %v2181
        %v2183 = vshrl.u32 %v1993, 16
        %v2185 = vrot.slane %v2183, 4
        %v2186 = vor.u32 %v2185, %v2181
        %v2187 = vrot.slane %v2186, 4
        %v2189 = vshll.u32 %v1994, 16
        %v2191 = vrot.slane %v2189, 5
        %v2192 = vsel %vm2024, %v2187, %v2191
        %v2194 = vshrl.u32 %v1995, 16
        %v2196 = vrot.slane %v2194, 4
        %v2197 = vshll.u32 %v1995, 16
        %v2199 = vrot.slane %v2197, 5
        %v2200 = vor.u32 %v2196, %v2199
        %v2201 = vrot.slane %v2200, 4
        %v2203 = vshll.u32 %v1996, 16
        %v2205 = vrot.slane %v2203, 5
        %v2206 = vsel %vm2024, %v2201, %v2205
        %v2207 = vshrl.u32 %v1996, 16
        %v2209 = vrot.slane %v2207, 4
        %v2210 = vor.u32 %v2209, %v2205
        %v2211 = vrot.slane %v2210, 4
        %v2213 = vshll.u32 %v1997, 16
        %v2215 = vrot.slane %v2213, 5
        %v2216 = vsel %vm2024, %v2211, %v2215
        %v2218 = vshrl.u32 %v1998, 16
        %v2220 = vrot.slane %v2218, 4
        %v2221 = vshll.u32 %v1998, 16
        %v2223 = vrot.slane %v2221, 5
        %v2224 = vor.u32 %v2220, %v2223
        %v2225 = vrot.slane %v2224, 4
        %v2227 = vshll.u32 %v1999, 16
        %v2229 = vrot.slane %v2227, 5
        %v2230 = vsel %vm2024, %v2225, %v2229
        %v2231 = vshrl.u32 %v1999, 16
        %v2233 = vrot.slane %v2231, 4
        %v2234 = vor.u32 %v2233, %v2229
        %v2235 = vrot.slane %v2234, 4
        %v2237 = vshll.u32 %v2000, 16
        %v2239 = vrot.slane %v2237, 5
        %v2240 = vsel %vm2024, %v2235, %v2239
        %v2242 = vshrl.u32 %v2001, 16
        %v2244 = vrot.slane %v2242, 4
        %v2245 = vshll.u32 %v2001, 16
        %v2247 = vrot.slane %v2245, 5
        %v2248 = vor.u32 %v2244, %v2247
        %v2249 = vrot.slane %v2248, 4
        %v2251 = vshll.u32 %v2002, 16
        %v2253 = vrot.slane %v2251, 5
        %v2254 = vsel %vm2024, %v2249, %v2253
        %v2255 = vshrl.u32 %v2002, 16
        %v2257 = vrot.slane %v2255, 4
        %v2258 = vor.u32 %v2257, %v2253
        %v2259 = vrot.slane %v2258, 4
        %v2261 = vshll.u32 %v2003, 16
        %v2263 = vrot.slane %v2261, 5
        %v2264 = vsel %vm2024, %v2259, %v2263
        %v2266 = vshrl.u32 %v2004, 16
        %v2268 = vrot.slane %v2266, 4
        %v2269 = vshll.u32 %v2004, 16
        %v2271 = vrot.slane %v2269, 5
        %v2272 = vor.u32 %v2268, %v2271
        %v2273 = vrot.slane %v2272, 4
        %v2275 = vshll.u32 %v2005, 16
        %v2277 = vrot.slane %v2275, 5
        %v2278 = vsel %vm2024, %v2273, %v2277
        %v2279 = vshrl.u32 %v2005, 16
        %v2281 = vrot.slane %v2279, 4
        %v2282 = vor.u32 %v2281, %v2277
        %v2283 = vrot.slane %v2282, 4
        %v2285 = vshll.u32 %v2006, 16
        %v2287 = vrot.slane %v2285, 5
        %v2288 = vsel %vm2024, %v2283, %v2287
        %v2290 = vshrl.u32 %v2007, 16
        %v2292 = vrot.slane %v2290, 4
        %v2293 = vshll.u32 %v2007, 16
        %v2295 = vrot.slane %v2293, 5
        %v2296 = vor.u32 %v2292, %v2295
        %v2297 = vrot.slane %v2296, 4
        %v2299 = vshll.u32 %v2008, 16
        %v2301 = vrot.slane %v2299, 5
        %v2302 = vsel %vm2024, %v2297, %v2301
        %v2303 = vshrl.u32 %v2008, 16
        %v2305 = vrot.slane %v2303, 4
        %v2306 = vor.u32 %v2305, %v2301
        %v2307 = vrot.slane %v2306, 4
        %v2309 = vshll.u32 %v2009, 16
        %v2311 = vrot.slane %v2309, 5
        %v2312 = vsel %vm2024, %v2307, %v2311
        %v2314 = vshrl.u32 %v2010, 16
        %v2316 = vrot.slane %v2314, 4
        %v2317 = vshll.u32 %v2010, 16
        %v2319 = vrot.slane %v2317, 5
        %v2320 = vor.u32 %v2316, %v2319
        %v2321 = vrot.slane %v2320, 4
        %v2323 = vshll.u32 %v2011, 16
        %v2325 = vrot.slane %v2323, 5
        %v2326 = vsel %vm2024, %v2321, %v2325
        %v2327 = vshrl.u32 %v2011, 16
        %v2329 = vrot.slane %v2327, 4
        %v2330 = vor.u32 %v2329, %v2325
        %v2331 = vrot.slane %v2330, 4
        %v2333 = vshll.u32 %v2012, 16
        %v2335 = vrot.slane %v2333, 5
        %v2336 = vsel %vm2024, %v2331, %v2335
        %v2338 = vshrl.u32 %v2013, 16
        %v2340 = vrot.slane %v2338, 4
        %v2341 = vshll.u32 %v2013, 16
        %v2343 = vrot.slane %v2341, 5
        %v2344 = vor.u32 %v2340, %v2343
        %v2345 = vrot.slane %v2344, 4
        %v2347 = vshll.u32 %v2014, 16
        %v2349 = vrot.slane %v2347, 5
        %v2350 = vsel %vm2024, %v2345, %v2349
        %v2351 = vshrl.u32 %v2014, 16
        %v2353 = vrot.slane %v2351, 4
        %v2354 = vor.u32 %v2353, %v2349
        %v2355 = vrot.slane %v2354, 4
        %v2357 = vshll.u32 %v2015, 16
        %v2359 = vrot.slane %v2357, 5
        %v2360 = vsel %vm2024, %v2355, %v2359
        %v2362 = vshrl.u32 %v2016, 16
        %v2364 = vrot.slane %v2362, 4
        %v2365 = vshll.u32 %v2016, 16
        %v2367 = vrot.slane %v2365, 5
        %v2368 = vor.u32 %v2364, %v2367
        %v2369 = vrot.slane %v2368, 4
        %v2371 = vshll.u32 %v2017, 16
        %v2373 = vrot.slane %v2371, 5
        %v2374 = vsel %vm2024, %v2369, %v2373
        %v2375 = vshrl.u32 %v2017, 16
        %v2377 = vrot.slane %v2375, 4
        %v2378 = vor.u32 %v2377, %v2373
        %v2379 = vrot.slane %v2378, 4
        %v2381 = vshll.u32 %v2018, 16
        %v2383 = vrot.slane %v2381, 5
        %v2384 = vsel %vm2024, %v2379, %v2383
        %v2386 = vshrl.u32 %v2019, 16
        %v2388 = vrot.slane %v2386, 4
        %v2389 = vshll.u32 %v2019, 16
        %v2391 = vrot.slane %v2389, 5
        %v2392 = vor.u32 %v2388, %v2391
        %v2393 = vrot.slane %v2392, 4
        %v2395 = vshll.u32 %v2020, 16
        %v2397 = vrot.slane %v2395, 5
        %v2398 = vsel %vm2024, %v2393, %v2397
        %v2399 = vshrl.u32 %v2020, 16
        %v2401 = vrot.slane %v2399, 4
        %v2402 = vor.u32 %v2401, %v2397
        %v2403 = vrot.slane %v2402, 4
        %v2405 = vshll.u32 %v2021, 16
        %v2407 = vrot.slane %v2405, 5
        %v2408 = vsel %vm2024, %v2403, %v2407
        %s2409 = scalar_lea.vmem %s3, 20
        %v2410 = vld [vmem:[%s2409] sm:$0xf]
        %v2411 = vld [vmem:[%s2409 + $0x4] sm:$0xf]
        %v2412 = vld [vmem:[%s2409 + $0x8] sm:$0xf]
        %v2413 = vld [vmem:[%s2409 + $0xc] sm:$0xf]
        %v2414 = vld [vmem:[%s2409 + $0x10] sm:$0x3]
        %v2415 = vunpack.c.l.b16 %v2038
        %v2416 = vunpack.c.l.b16 %v2048
        %v2417 = vunpack.c.l.b16 %v2062
        %v2418 = vunpack.c.l.b16 %v2072
        %v2419 = vunpack.c.l.b16 %v2086
        %v2420 = vunpack.c.l.b16 %v2096
        %v2421 = vunpack.c.l.b16 %v2110
        %v2422 = vunpack.c.l.b16 %v2120
        %v2423 = vunpack.c.l.b16 %v2134
        %v2424 = vunpack.c.l.b16 %v2144
        %v2425 = vunpack.c.l.b16 %v2158
        %v2426 = vunpack.c.l.b16 %v2168
        %v2427 = vunpack.c.l.b16 %v2182
        %v2428 = vunpack.c.l.b16 %v2192
        %v2429 = vunpack.c.l.b16 %v2206
        %v2430 = vunpack.c.l.b16 %v2216
        %v2431 = vunpack.c.l.b16 %v2230
        %v2432 = vunpack.c.l.b16 %v2240
        %v2433 = vunpack.c.l.b16 %v2254
        %v2434 = vunpack.c.l.b16 %v2264
        %v2435 = vunpack.c.l.b16 %v2278
        %v2436 = vunpack.c.l.b16 %v2288
        %v2437 = vunpack.c.l.b16 %v2302
        %v2438 = vunpack.c.l.b16 %v2312
        %v2439 = vunpack.c.l.b16 %v2326
        %v2440 = vunpack.c.l.b16 %v2336
        %v2441 = vunpack.c.l.b16 %v2350
        %v2442 = vunpack.c.l.b16 %v2360
        %v2443 = vunpack.c.l.b16 %v2374
        %v2444 = vunpack.c.l.b16 %v2384
        %v2445 = vunpack.c.l.b16 %v2398
        %v2446 = vunpack.c.l.b16 %v2408
        %v2447 = vpack.c.b16 %v2416, %v2415
        %v2448 = vpack.c.b16 %v2418, %v2417
        %v2449 = vpack.c.b16 %v2420, %v2419
        %v2450 = vpack.c.b16 %v2422, %v2421
        %v2451 = vpack.c.b16 %v2424, %v2423
        %v2452 = vpack.c.b16 %v2426, %v2425
        %v2453 = vpack.c.b16 %v2428, %v2427
        %v2454 = vpack.c.b16 %v2430, %v2429
        %v2455 = vpack.c.b16 %v2432, %v2431
        %v2456 = vpack.c.b16 %v2434, %v2433
        %v2457 = vpack.c.b16 %v2436, %v2435
        %v2458 = vpack.c.b16 %v2438, %v2437
        %v2459 = vpack.c.b16 %v2440, %v2439
        %v2460 = vpack.c.b16 %v2442, %v2441
        %v2461 = vpack.c.b16 %v2444, %v2443
        %v2462 = vpack.c.b16 %v2446, %v2445
        %v2468 = vunpack.c.l.b16 %v2410
        %v2469 = vunpack.c.l.b16 %v2411
        %v2470 = vunpack.c.l.b16 %v2412
        %v2471 = vunpack.c.l.b16 %v2413
        %v2472 = vunpack.c.l.b16 %v2414
        %v2473 = vpack.c.b16 %v2469, %v2468
        %v2474 = vpack.c.b16 %v2471, %v2470
        %v2475 = vpack.c.b16 %v2472, %v2472
        %v2479 = vsel %vm1728, %v2447, 0
        %v2482 = vsel %vm1728, %v2448, 0
        %v2485 = vsel %vm1728, %v2449, 0
        %v2488 = vsel %vm1728, %v2450, 0
        %v2491 = vsel %vm1728, %v2451, 0
        %v2494 = vsel %vm1728, %v2452, 0
        %v2497 = vsel %vm1728, %v2453, 0
        %v2500 = vsel %vm1728, %v2454, 0
        %v2503 = vsel %vm1728, %v2455, 0
        %v2506 = vsel %vm1728, %v2456, 0
        %v2509 = vsel %vm1728, %v2457, 0
        %v2512 = vsel %vm1728, %v2458, 0
        %v2515 = vsel %vm1728, %v2459, 0
        %v2518 = vsel %vm1728, %v2460, 0
        %v2521 = vsel %vm1728, %v2461, 0
        %v2524 = vsel %vm1728, %v2462, 0
        %v2527 = vsel %vm1777, %v2475, 0
        %2529 = vmatprep.subr.bf16.mxu0 0
        %2530 = vmatpush1.bf16.msra.mxu0 %v2473
        %2531 = vmatprep.subr.bf16.mxu0 0
        %2532 = vmatpush1.bf16.msra.mxu0 %v2474
        %2533 = vmatprep.subr.bf16.mxu0 0
        %2534 = vmatpush1.bf16.msra.mxu0 %v2527
        %2535 = vmatprep.subr.bf16.mxu0 0
        %2536 = vmatpush1.bf16.msra.mxu0 0
        %2537 = vmatprep.subr.bf16.mxu0 0
        %2538 = vmatpush1.bf16.msra.mxu0 0
        %2539 = vmatprep.subr.bf16.mxu0 0
        %2540 = vmatpush1.bf16.msra.mxu0 0
        %2541 = vmatprep.subr.bf16.mxu0 0
        %2542 = vmatpush1.bf16.msra.mxu0 0
        %2543 = vmatprep.subr.bf16.mxu0 0
        %2544 = vmatpush1.bf16.msra.mxu0 0
        %2545 = vmatprep.subr.bf16.mxu0 0
        %2546 = vmatpush1.bf16.msra.mxu0 0
        %2547 = vmatprep.subr.bf16.mxu0 0
        %2548 = vmatpush1.bf16.msra.mxu0 0
        %2549 = vmatprep.subr.bf16.mxu0 0
        %2550 = vmatpush1.bf16.msra.mxu0 0
        %2551 = vmatprep.subr.bf16.mxu0 0
        %2552 = vmatpush1.bf16.msra.mxu0 0
        %2553 = vmatprep.subr.bf16.mxu0 0
        %2554 = vmatpush1.bf16.msra.mxu0 0
        %2555 = vmatprep.subr.bf16.mxu0 0
        %2556 = vmatpush1.bf16.msra.mxu0 0
        %2557 = vmatprep.subr.bf16.mxu0 0
        %2558 = vmatpush1.bf16.msra.mxu0 0
        %2559 = vmatprep.subr.bf16.mxu0 0
        %2560 = vmatpush1.bf16.msra.mxu0 0
        %2561 = vmatprep.mubr.bf16.mxu0 0
        %2562 = vmatmul.mubr.bf16.gmra.mrb[0].mxu0 %v2479
        %v2563 = vpop.f32.mrb[0].mxu0
        %v2564 = vadd.f32 0.0, %v2563
        %v2565 = vpop.f32.mrb[0].mxu0
        %v2566 = vpop.f32.mrb[0].mxu0
        %v2567 = vadd.f32 0.0, %v2566
        %v2568 = vpop.f32.mrb[0].mxu0
        %2569 = vmatprep.mubr.bf16.mxu0 0
        %2570 = vmatmul.mubr.bf16.gmra.mrb[0].mxu0 %v2482
        %v2571 = vpop.f32.mrb[0].mxu0
        %v2572 = vadd.f32 0.0, %v2571
        %v2573 = vpop.f32.mrb[0].mxu0
        %v2574 = vpop.f32.mrb[0].mxu0
        %v2575 = vadd.f32 0.0, %v2574
        %v2576 = vpop.f32.mrb[0].mxu0
        %2577 = vmatprep.mubr.bf16.mxu0 0
        %2578 = vmatmul.mubr.bf16.gmra.mrb[0].mxu0 %v2485
        %v2579 = vpop.f32.mrb[0].mxu0
        %v2580 = vadd.f32 0.0, %v2579
        %v2581 = vpop.f32.mrb[0].mxu0
        %v2582 = vpop.f32.mrb[0].mxu0
        %v2583 = vadd.f32 0.0, %v2582
        %v2584 = vpop.f32.mrb[0].mxu0
        %2585 = vmatprep.mubr.bf16.mxu0 0
        %2586 = vmatmul.mubr.bf16.gmra.mrb[0].mxu0 %v2488
        %v2587 = vpop.f32.mrb[0].mxu0
        %v2588 = vadd.f32 0.0, %v2587
        %v2589 = vpop.f32.mrb[0].mxu0
        %v2590 = vpop.f32.mrb[0].mxu0
        %v2591 = vadd.f32 0.0, %v2590
        %v2592 = vpop.f32.mrb[0].mxu0
        %2593 = vmatprep.mubr.bf16.mxu0 0
        %2594 = vmatmul.mubr.bf16.gmra.mrb[0].mxu0 %v2491
        %v2595 = vpop.f32.mrb[0].mxu0
        %v2596 = vadd.f32 0.0, %v2595
        %v2597 = vpop.f32.mrb[0].mxu0
        %v2598 = vpop.f32.mrb[0].mxu0
        %v2599 = vadd.f32 0.0, %v2598
        %v2600 = vpop.f32.mrb[0].mxu0
        %2601 = vmatprep.mubr.bf16.mxu0 0
        %2602 = vmatmul.mubr.bf16.gmra.mrb[0].mxu0 %v2494
        %v2603 = vpop.f32.mrb[0].mxu0
        %v2604 = vadd.f32 0.0, %v2603
        %v2605 = vpop.f32.mrb[0].mxu0
        %v2606 = vpop.f32.mrb[0].mxu0
        %v2607 = vadd.f32 0.0, %v2606
        %v2608 = vpop.f32.mrb[0].mxu0
        %2609 = vmatprep.mubr.bf16.mxu0 0
        %2610 = vmatmul.mubr.bf16.gmra.mrb[0].mxu0 %v2497
        %v2611 = vpop.f32.mrb[0].mxu0
        %v2612 = vadd.f32 0.0, %v2611
        %v2613 = vpop.f32.mrb[0].mxu0
        %v2614 = vpop.f32.mrb[0].mxu0
        %v2615 = vadd.f32 0.0, %v2614
        %v2616 = vpop.f32.mrb[0].mxu0
        %2617 = vmatprep.mubr.bf16.mxu0 0
        %2618 = vmatmul.mubr.bf16.gmra.mrb[0].mxu0 %v2500
        %v2619 = vpop.f32.mrb[0].mxu0
        %v2620 = vadd.f32 0.0, %v2619
        %v2621 = vpop.f32.mrb[0].mxu0
        %v2622 = vpop.f32.mrb[0].mxu0
        %v2623 = vadd.f32 0.0, %v2622
        %v2624 = vpop.f32.mrb[0].mxu0
        %2625 = vmatprep.mubr.bf16.mxu0 0
        %2626 = vmatmul.mubr.bf16.gmra.mrb[0].mxu0 %v2503
        %v2627 = vpop.f32.mrb[0].mxu0
        %v2628 = vadd.f32 0.0, %v2627
        %v2629 = vpop.f32.mrb[0].mxu0
        %v2630 = vpop.f32.mrb[0].mxu0
        %v2631 = vadd.f32 0.0, %v2630
        %v2632 = vpop.f32.mrb[0].mxu0
        %2633 = vmatprep.mubr.bf16.mxu0 0
        %2634 = vmatmul.mubr.bf16.gmra.mrb[0].mxu0 %v2506
        %v2635 = vpop.f32.mrb[0].mxu0
        %v2636 = vadd.f32 0.0, %v2635
        %v2637 = vpop.f32.mrb[0].mxu0
        %v2638 = vpop.f32.mrb[0].mxu0
        %v2639 = vadd.f32 0.0, %v2638
        %v2640 = vpop.f32.mrb[0].mxu0
        %2641 = vmatprep.mubr.bf16.mxu0 0
        %2642 = vmatmul.mubr.bf16.gmra.mrb[0].mxu0 %v2509
        %v2643 = vpop.f32.mrb[0].mxu0
        %v2644 = vadd.f32 0.0, %v2643
        %v2645 = vpop.f32.mrb[0].mxu0
        %v2646 = vpop.f32.mrb[0].mxu0
        %v2647 = vadd.f32 0.0, %v2646
        %v2648 = vpop.f32.mrb[0].mxu0
        %2649 = vmatprep.mubr.bf16.mxu0 0
        %2650 = vmatmul.mubr.bf16.gmra.mrb[0].mxu0 %v2512
        %v2651 = vpop.f32.mrb[0].mxu0
        %v2652 = vadd.f32 0.0, %v2651
        %v2653 = vpop.f32.mrb[0].mxu0
        %v2654 = vpop.f32.mrb[0].mxu0
        %v2655 = vadd.f32 0.0, %v2654
        %v2656 = vpop.f32.mrb[0].mxu0
        %2657 = vmatprep.mubr.bf16.mxu0 0
        %2658 = vmatmul.mubr.bf16.gmra.mrb[0].mxu0 %v2515
        %v2659 = vpop.f32.mrb[0].mxu0
        %v2660 = vadd.f32 0.0, %v2659
        %v2661 = vpop.f32.mrb[0].mxu0
        %v2662 = vpop.f32.mrb[0].mxu0
        %v2663 = vadd.f32 0.0, %v2662
        %v2664 = vpop.f32.mrb[0].mxu0
        %2665 = vmatprep.mubr.bf16.mxu0 0
        %2666 = vmatmul.mubr.bf16.gmra.mrb[0].mxu0 %v2518
        %v2667 = vpop.f32.mrb[0].mxu0
        %v2668 = vadd.f32 0.0, %v2667
        %v2669 = vpop.f32.mrb[0].mxu0
        %v2670 = vpop.f32.mrb[0].mxu0
        %v2671 = vadd.f32 0.0, %v2670
        %v2672 = vpop.f32.mrb[0].mxu0
        %2673 = vmatprep.mubr.bf16.mxu0 0
        %2674 = vmatmul.mubr.bf16.gmra.mrb[0].mxu0 %v2521
        %v2675 = vpop.f32.mrb[0].mxu0
        %v2676 = vadd.f32 0.0, %v2675
        %v2677 = vpop.f32.mrb[0].mxu0
        %v2678 = vpop.f32.mrb[0].mxu0
        %v2679 = vadd.f32 0.0, %v2678
        %v2680 = vpop.f32.mrb[0].mxu0
        %2681 = vmatprep.mubr.bf16.mxu0 0
        %2682 = vmatmul.mubr.bf16.gmra.mrb[0].mxu0 %v2524
        %v2683 = vpop.f32.mrb[0].mxu0
        %v2684 = vadd.f32 0.0, %v2683
        %v2685 = vpop.f32.mrb[0].mxu0
        %v2686 = vpop.f32.mrb[0].mxu0
        %v2687 = vadd.f32 0.0, %v2686
        %v2688 = vpop.f32.mrb[0].mxu0
        %2689 = vdwg.mxu0
        %v2690 = vadd.f32 %v1942, %v2564
        %v2691 = vadd.f32 %v1943, %v2567
        %v2692 = vadd.f32 %v1944, %v2572
        %v2693 = vadd.f32 %v1945, %v2575
        %v2694 = vadd.f32 %v1946, %v2580
        %v2695 = vadd.f32 %v1947, %v2583
        %v2696 = vadd.f32 %v1948, %v2588
        %v2697 = vadd.f32 %v1949, %v2591
        %v2698 = vadd.f32 %v1950, %v2596
        %v2699 = vadd.f32 %v1951, %v2599
        %v2700 = vadd.f32 %v1952, %v2604
        %v2701 = vadd.f32 %v1953, %v2607
        %v2702 = vadd.f32 %v1954, %v2612
        %v2703 = vadd.f32 %v1955, %v2615
        %v2704 = vadd.f32 %v1956, %v2620
        %v2705 = vadd.f32 %v1957, %v2623
        %v2706 = vadd.f32 %v1958, %v2628
        %v2707 = vadd.f32 %v1959, %v2631
        %v2708 = vadd.f32 %v1960, %v2636
        %v2709 = vadd.f32 %v1961, %v2639
        %v2710 = vadd.f32 %v1962, %v2644
        %v2711 = vadd.f32 %v1963, %v2647
        %v2712 = vadd.f32 %v1964, %v2652
        %v2713 = vadd.f32 %v1965, %v2655
        %v2714 = vadd.f32 %v1966, %v2660
        %v2715 = vadd.f32 %v1967, %v2663
        %v2716 = vadd.f32 %v1968, %v2668
        %v2717 = vadd.f32 %v1969, %v2671
        %v2718 = vadd.f32 %v1970, %v2676
        %v2719 = vadd.f32 %v1971, %v2679
        %v2720 = vadd.f32 %v1972, %v2684
        %v2721 = vadd.f32 %v1973, %v2687
        %v2722 = vld [vmem:[#allocation2] sm:$0xe]
        %v2723 = vld [vmem:[#allocation2 + $0xc] sm:$0xe]
        %v2724 = vld [vmem:[#allocation2 + $0x18] sm:$0xe]
        %v2725 = vld [vmem:[#allocation2 + $0x24] sm:$0xe]
        %v2726 = vld [vmem:[#allocation2 + $0x30] sm:$0xe]
        %v2727 = vld [vmem:[#allocation2 + $0x3c] sm:$0xe]
        %v2728 = vld [vmem:[#allocation2 + $0x48] sm:$0xe]
        %v2729 = vld [vmem:[#allocation2 + $0x54] sm:$0xe]
        %v2730 = vld [vmem:[#allocation2 + $0x60] sm:$0xe]
        %v2731 = vld [vmem:[#allocation2 + $0x6c] sm:$0xe]
        %v2732 = vld [vmem:[#allocation2 + $0x78] sm:$0xe]
        %v2733 = vld [vmem:[#allocation2 + $0x84] sm:$0xe]
        %v2734 = vld [vmem:[#allocation2 + $0x90] sm:$0xe]
        %v2735 = vld [vmem:[#allocation2 + $0x9c] sm:$0xe]
        %v2736 = vld [vmem:[#allocation2 + $0xa8] sm:$0xe]
        %v2737 = vld [vmem:[#allocation2 + $0xb4] sm:$0xe]
        %vm2786 = vcmask 1042432
        %vm2787 = vcmask 1046532
        %vm2788 = vmor %vm2786, %vm2787
        %v2789 = vrot.slane %v2722, 5
        %v2790 = vrot.slane %v2789, 4
        %v2791 = vrot.slane %v1975, 5
        %v2792 = vsel %vm2788, %v2790, %v2791
        %v2793 = vrot.slane %v2791, 4
        %v2794 = vrot.slane %v1976, 5
        %v2795 = vsel %vm2788, %v2793, %v2794
        %v2796 = vrot.slane %v2723, 5
        %v2797 = vrot.slane %v2796, 4
        %v2798 = vrot.slane %v1978, 5
        %v2799 = vsel %vm2788, %v2797, %v2798
        %v2800 = vrot.slane %v2798, 4
        %v2801 = vrot.slane %v1979, 5
        %v2802 = vsel %vm2788, %v2800, %v2801
        %v2803 = vrot.slane %v2724, 5
        %v2804 = vrot.slane %v2803, 4
        %v2805 = vrot.slane %v1981, 5
        %v2806 = vsel %vm2788, %v2804, %v2805
        %v2807 = vrot.slane %v2805, 4
        %v2808 = vrot.slane %v1982, 5
        %v2809 = vsel %vm2788, %v2807, %v2808
        %v2810 = vrot.slane %v2725, 5
        %v2811 = vrot.slane %v2810, 4
        %v2812 = vrot.slane %v1984, 5
        %v2813 = vsel %vm2788, %v2811, %v2812
        %v2814 = vrot.slane %v2812, 4
        %v2815 = vrot.slane %v1985, 5
        %v2816 = vsel %vm2788, %v2814, %v2815
        %v2817 = vrot.slane %v2726, 5
        %v2818 = vrot.slane %v2817, 4
        %v2819 = vrot.slane %v1987, 5
        %v2820 = vsel %vm2788, %v2818, %v2819
        %v2821 = vrot.slane %v2819, 4
        %v2822 = vrot.slane %v1988, 5
        %v2823 = vsel %vm2788, %v2821, %v2822
        %v2824 = vrot.slane %v2727, 5
        %v2825 = vrot.slane %v2824, 4
        %v2826 = vrot.slane %v1990, 5
        %v2827 = vsel %vm2788, %v2825, %v2826
        %v2828 = vrot.slane %v2826, 4
        %v2829 = vrot.slane %v1991, 5
        %v2830 = vsel %vm2788, %v2828, %v2829
        %v2831 = vrot.slane %v2728, 5
        %v2832 = vrot.slane %v2831, 4
        %v2833 = vrot.slane %v1993, 5
        %v2834 = vsel %vm2788, %v2832, %v2833
        %v2835 = vrot.slane %v2833, 4
        %v2836 = vrot.slane %v1994, 5
        %v2837 = vsel %vm2788, %v2835, %v2836
        %v2838 = vrot.slane %v2729, 5
        %v2839 = vrot.slane %v2838, 4
        %v2840 = vrot.slane %v1996, 5
        %v2841 = vsel %vm2788, %v2839, %v2840
        %v2842 = vrot.slane %v2840, 4
        %v2843 = vrot.slane %v1997, 5
        %v2844 = vsel %vm2788, %v2842, %v2843
        %v2845 = vrot.slane %v2730, 5
        %v2846 = vrot.slane %v2845, 4
        %v2847 = vrot.slane %v1999, 5
        %v2848 = vsel %vm2788, %v2846, %v2847
        %v2849 = vrot.slane %v2847, 4
        %v2850 = vrot.slane %v2000, 5
        %v2851 = vsel %vm2788, %v2849, %v2850
        %v2852 = vrot.slane %v2731, 5
        %v2853 = vrot.slane %v2852, 4
        %v2854 = vrot.slane %v2002, 5
        %v2855 = vsel %vm2788, %v2853, %v2854
        %v2856 = vrot.slane %v2854, 4
        %v2857 = vrot.slane %v2003, 5
        %v2858 = vsel %vm2788, %v2856, %v2857
        %v2859 = vrot.slane %v2732, 5
        %v2860 = vrot.slane %v2859, 4
        %v2861 = vrot.slane %v2005, 5
        %v2862 = vsel %vm2788, %v2860, %v2861
        %v2863 = vrot.slane %v2861, 4
        %v2864 = vrot.slane %v2006, 5
        %v2865 = vsel %vm2788, %v2863, %v2864
        %v2866 = vrot.slane %v2733, 5
        %v2867 = vrot.slane %v2866, 4
        %v2868 = vrot.slane %v2008, 5
        %v2869 = vsel %vm2788, %v2867, %v2868
        %v2870 = vrot.slane %v2868, 4
        %v2871 = vrot.slane %v2009, 5
        %v2872 = vsel %vm2788, %v2870, %v2871
        %v2873 = vrot.slane %v2734, 5
        %v2874 = vrot.slane %v2873, 4
        %v2875 = vrot.slane %v2011, 5
        %v2876 = vsel %vm2788, %v2874, %v2875
        %v2877 = vrot.slane %v2875, 4
        %v2878 = vrot.slane %v2012, 5
        %v2879 = vsel %vm2788, %v2877, %v2878
        %v2880 = vrot.slane %v2735, 5
        %v2881 = vrot.slane %v2880, 4
        %v2882 = vrot.slane %v2014, 5
        %v2883 = vsel %vm2788, %v2881, %v2882
        %v2884 = vrot.slane %v2882, 4
        %v2885 = vrot.slane %v2015, 5
        %v2886 = vsel %vm2788, %v2884, %v2885
        %v2887 = vrot.slane %v2736, 5
        %v2888 = vrot.slane %v2887, 4
        %v2889 = vrot.slane %v2017, 5
        %v2890 = vsel %vm2788, %v2888, %v2889
        %v2891 = vrot.slane %v2889, 4
        %v2892 = vrot.slane %v2018, 5
        %v2893 = vsel %vm2788, %v2891, %v2892
        %v2894 = vrot.slane %v2737, 5
        %v2895 = vrot.slane %v2894, 4
        %v2896 = vrot.slane %v2020, 5
        %v2897 = vsel %vm2788, %v2895, %v2896
        %v2898 = vrot.slane %v2896, 4
        %v2899 = vrot.slane %v2021, 5
        %v2900 = vsel %vm2788, %v2898, %v2899
        %s2901 = scalar_lea.vmem %s3, 40
        %v2902 = vld [vmem:[%s2901] sm:$0xf]
        %v2903 = vld [vmem:[%s2901 + $0x4] sm:$0xf]
        %v2904 = vld [vmem:[%s2901 + $0x8] sm:$0xf]
        %v2905 = vld [vmem:[%s2901 + $0xc] sm:$0xf]
        %v2906 = vld [vmem:[%s2901 + $0x10] sm:$0x3]
        %v2907 = vunpack.c.l.b16 %v2792
        %v2908 = vunpack.c.l.b16 %v2795
        %v2909 = vunpack.c.l.b16 %v2799
        %v2910 = vunpack.c.l.b16 %v2802
        %v2911 = vunpack.c.l.b16 %v2806
        %v2912 = vunpack.c.l.b16 %v2809
        %v2913 = vunpack.c.l.b16 %v2813
        %v2914 = vunpack.c.l.b16 %v2816
        %v2915 = vunpack.c.l.b16 %v2820
        %v2916 = vunpack.c.l.b16 %v2823
        %v2917 = vunpack.c.l.b16 %v2827
        %v2918 = vunpack.c.l.b16 %v2830
        %v2919 = vunpack.c.l.b16 %v2834
        %v2920 = vunpack.c.l.b16 %v2837
        %v2921 = vunpack.c.l.b16 %v2841
        %v2922 = vunpack.c.l.b16 %v2844
        %v2923 = vunpack.c.l.b16 %v2848
        %v2924 = vunpack.c.l.b16 %v2851
        %v2925 = vunpack.c.l.b16 %v2855
        %v2926 = vunpack.c.l.b16 %v2858
        %v2927 = vunpack.c.l.b16 %v2862
        %v2928 = vunpack.c.l.b16 %v2865
        %v2929 = vunpack.c.l.b16 %v2869
        %v2930 = vunpack.c.l.b16 %v2872
        %v2931 = vunpack.c.l.b16 %v2876
        %v2932 = vunpack.c.l.b16 %v2879
        %v2933 = vunpack.c.l.b16 %v2883
        %v2934 = vunpack.c.l.b16 %v2886
        %v2935 = vunpack.c.l.b16 %v2890
        %v2936 = vunpack.c.l.b16 %v2893
        %v2937 = vunpack.c.l.b16 %v2897
        %v2938 = vunpack.c.l.b16 %v2900
        %v2939 = vpack.c.b16 %v2908, %v2907
        %v2940 = vpack.c.b16 %v2910, %v2909
        %v2941 = vpack.c.b16 %v2912, %v2911
        %v2942 = vpack.c.b16 %v2914, %v2913
        %v2943 = vpack.c.b16 %v2916, %v2915
        %v2944 = vpack.c.b16 %v2918, %v2917
        %v2945 = vpack.c.b16 %v2920, %v2919
        %v2946 = vpack.c.b16 %v2922, %v2921
        %v2947 = vpack.c.b16 %v2924, %v2923
        %v2948 = vpack.c.b16 %v2926, %v2925
        %v2949 = vpack.c.b16 %v2928, %v2927
        %v2950 = vpack.c.b16 %v2930, %v2929
        %v2951 = vpack.c.b16 %v2932, %v2931
        %v2952 = vpack.c.b16 %v2934, %v2933
        %v2953 = vpack.c.b16 %v2936, %v2935
        %v2954 = vpack.c.b16 %v2938, %v2937
        %v2960 = vunpack.c.l.b16 %v2902
        %v2961 = vunpack.c.l.b16 %v2903
        %v2962 = vunpack.c.l.b16 %v2904
        %v2963 = vunpack.c.l.b16 %v2905
        %v2964 = vunpack.c.l.b16 %v2906
        %v2965 = vpack.c.b16 %v2961, %v2960
        %v2966 = vpack.c.b16 %v2963, %v2962
        %v2967 = vpack.c.b16 %v2964, %v2964
        %v2971 = vsel %vm1728, %v2939, 0
        %v2974 = vsel %vm1728, %v2940, 0
        %v2977 = vsel %vm1728, %v2941, 0
        %v2980 = vsel %vm1728, %v2942, 0
        %v2983 = vsel %vm1728, %v2943, 0
        %v2986 = vsel %vm1728, %v2944, 0
        %v2989 = vsel %vm1728, %v2945, 0
        %v2992 = vsel %vm1728, %v2946, 0
        %v2995 = vsel %vm1728, %v2947, 0
        %v2998 = vsel %vm1728, %v2948, 0
        %v3001 = vsel %vm1728, %v2949, 0
        %v3004 = vsel %vm1728, %v2950, 0
        %v3007 = vsel %vm1728, %v2951, 0
        %v3010 = vsel %vm1728, %v2952, 0
        %v3013 = vsel %vm1728, %v2953, 0
        %v3016 = vsel %vm1728, %v2954, 0
        %v3019 = vsel %vm1777, %v2967, 0
        %3021 = vmatprep.subr.bf16.mxu0 0
        %3022 = vmatpush1.bf16.msra.mxu0 %v2965
        %3023 = vmatprep.subr.bf16.mxu0 0
        %3024 = vmatpush1.bf16.msra.mxu0 %v2966
        %3025 = vmatprep.subr.bf16.mxu0 0
        %3026 = vmatpush1.bf16.msra.mxu0 %v3019
        %3027 = vmatprep.subr.bf16.mxu0 0
        %3028 = vmatpush1.bf16.msra.mxu0 0
        %3029 = vmatprep.subr.bf16.mxu0 0
        %3030 = vmatpush1.bf16.msra.mxu0 0
        %3031 = vmatprep.subr.bf16.mxu0 0
        %3032 = vmatpush1.bf16.msra.mxu0 0
        %3033 = vmatprep.subr.bf16.mxu0 0
        %3034 = vmatpush1.bf16.msra.mxu0 0
        %3035 = vmatprep.subr.bf16.mxu0 0
        %3036 = vmatpush1.bf16.msra.mxu0 0
        %3037 = vmatprep.subr.bf16.mxu0 0
        %3038 = vmatpush1.bf16.msra.mxu0 0
        %3039 = vmatprep.subr.bf16.mxu0 0
        %3040 = vmatpush1.bf16.msra.mxu0 0
        %3041 = vmatprep.subr.bf16.mxu0 0
        %3042 = vmatpush1.bf16.msra.mxu0 0
        %3043 = vmatprep.subr.bf16.mxu0 0
        %3044 = vmatpush1.bf16.msra.mxu0 0
        %3045 = vmatprep.subr.bf16.mxu0 0
        %3046 = vmatpush1.bf16.msra.mxu0 0
        %3047 = vmatprep.subr.bf16.mxu0 0
        %3048 = vmatpush1.bf16.msra.mxu0 0
        %3049 = vmatprep.subr.bf16.mxu0 0
        %3050 = vmatpush1.bf16.msra.mxu0 0
        %3051 = vmatprep.subr.bf16.mxu0 0
        %3052 = vmatpush1.bf16.msra.mxu0 0
        %3053 = vmatprep.mubr.bf16.mxu0 0
        %3054 = vmatmul.mubr.bf16.gmra.mrb[0].mxu0 %v2971
        %v3055 = vpop.f32.mrb[0].mxu0
        %v3056 = vadd.f32 0.0, %v3055
        %v3057 = vpop.f32.mrb[0].mxu0
        %v3058 = vpop.f32.mrb[0].mxu0
        %v3059 = vadd.f32 0.0, %v3058
        %v3060 = vpop.f32.mrb[0].mxu0
        %3061 = vmatprep.mubr.bf16.mxu0 0
        %3062 = vmatmul.mubr.bf16.gmra.mrb[0].mxu0 %v2974
        %v3063 = vpop.f32.mrb[0].mxu0
        %v3064 = vadd.f32 0.0, %v3063
        %v3065 = vpop.f32.mrb[0].mxu0
        %v3066 = vpop.f32.mrb[0].mxu0
        %v3067 = vadd.f32 0.0, %v3066
        %v3068 = vpop.f32.mrb[0].mxu0
        %3069 = vmatprep.mubr.bf16.mxu0 0
        %3070 = vmatmul.mubr.bf16.gmra.mrb[0].mxu0 %v2977
        %v3071 = vpop.f32.mrb[0].mxu0
        %v3072 = vadd.f32 0.0, %v3071
        %v3073 = vpop.f32.mrb[0].mxu0
        %v3074 = vpop.f32.mrb[0].mxu0
        %v3075 = vadd.f32 0.0, %v3074
        %v3076 = vpop.f32.mrb[0].mxu0
        %3077 = vmatprep.mubr.bf16.mxu0 0
        %3078 = vmatmul.mubr.bf16.gmra.mrb[0].mxu0 %v2980
        %v3079 = vpop.f32.mrb[0].mxu0
        %v3080 = vadd.f32 0.0, %v3079
        %v3081 = vpop.f32.mrb[0].mxu0
        %v3082 = vpop.f32.mrb[0].mxu0
        %v3083 = vadd.f32 0.0, %v3082
        %v3084 = vpop.f32.mrb[0].mxu0
        %3085 = vmatprep.mubr.bf16.mxu0 0
        %3086 = vmatmul.mubr.bf16.gmra.mrb[0].mxu0 %v2983
        %v3087 = vpop.f32.mrb[0].mxu0
        %v3088 = vadd.f32 0.0, %v3087
        %v3089 = vpop.f32.mrb[0].mxu0
        %v3090 = vpop.f32.mrb[0].mxu0
        %v3091 = vadd.f32 0.0, %v3090
        %v3092 = vpop.f32.mrb[0].mxu0
        %3093 = vmatprep.mubr.bf16.mxu0 0
        %3094 = vmatmul.mubr.bf16.gmra.mrb[0].mxu0 %v2986
        %v3095 = vpop.f32.mrb[0].mxu0
        %v3096 = vadd.f32 0.0, %v3095
        %v3097 = vpop.f32.mrb[0].mxu0
        %v3098 = vpop.f32.mrb[0].mxu0
        %v3099 = vadd.f32 0.0, %v3098
        %v3100 = vpop.f32.mrb[0].mxu0
        %3101 = vmatprep.mubr.bf16.mxu0 0
        %3102 = vmatmul.mubr.bf16.gmra.mrb[0].mxu0 %v2989
        %v3103 = vpop.f32.mrb[0].mxu0
        %v3104 = vadd.f32 0.0, %v3103
        %v3105 = vpop.f32.mrb[0].mxu0
        %v3106 = vpop.f32.mrb[0].mxu0
        %v3107 = vadd.f32 0.0, %v3106
        %v3108 = vpop.f32.mrb[0].mxu0
        %3109 = vmatprep.mubr.bf16.mxu0 0
        %3110 = vmatmul.mubr.bf16.gmra.mrb[0].mxu0 %v2992
        %v3111 = vpop.f32.mrb[0].mxu0
        %v3112 = vadd.f32 0.0, %v3111
        %v3113 = vpop.f32.mrb[0].mxu0
        %v3114 = vpop.f32.mrb[0].mxu0
        %v3115 = vadd.f32 0.0, %v3114
        %v3116 = vpop.f32.mrb[0].mxu0
        %3117 = vmatprep.mubr.bf16.mxu0 0
        %3118 = vmatmul.mubr.bf16.gmra.mrb[0].mxu0 %v2995
        %v3119 = vpop.f32.mrb[0].mxu0
        %v3120 = vadd.f32 0.0, %v3119
        %v3121 = vpop.f32.mrb[0].mxu0
        %v3122 = vpop.f32.mrb[0].mxu0
        %v3123 = vadd.f32 0.0, %v3122
        %v3124 = vpop.f32.mrb[0].mxu0
        %3125 = vmatprep.mubr.bf16.mxu0 0
        %3126 = vmatmul.mubr.bf16.gmra.mrb[0].mxu0 %v2998
        %v3127 = vpop.f32.mrb[0].mxu0
        %v3128 = vadd.f32 0.0, %v3127
        %v3129 = vpop.f32.mrb[0].mxu0
        %v3130 = vpop.f32.mrb[0].mxu0
        %v3131 = vadd.f32 0.0, %v3130
        %v3132 = vpop.f32.mrb[0].mxu0
        %3133 = vmatprep.mubr.bf16.mxu0 0
        %3134 = vmatmul.mubr.bf16.gmra.mrb[0].mxu0 %v3001
        %v3135 = vpop.f32.mrb[0].mxu0
        %v3136 = vadd.f32 0.0, %v3135
        %v3137 = vpop.f32.mrb[0].mxu0
        %v3138 = vpop.f32.mrb[0].mxu0
        %v3139 = vadd.f32 0.0, %v3138
        %v3140 = vpop.f32.mrb[0].mxu0
        %3141 = vmatprep.mubr.bf16.mxu0 0
        %3142 = vmatmul.mubr.bf16.gmra.mrb[0].mxu0 %v3004
        %v3143 = vpop.f32.mrb[0].mxu0
        %v3144 = vadd.f32 0.0, %v3143
        %v3145 = vpop.f32.mrb[0].mxu0
        %v3146 = vpop.f32.mrb[0].mxu0
        %v3147 = vadd.f32 0.0, %v3146
        %v3148 = vpop.f32.mrb[0].mxu0
        %3149 = vmatprep.mubr.bf16.mxu0 0
        %3150 = vmatmul.mubr.bf16.gmra.mrb[0].mxu0 %v3007
        %v3151 = vpop.f32.mrb[0].mxu0
        %v3152 = vadd.f32 0.0, %v3151
        %v3153 = vpop.f32.mrb[0].mxu0
        %v3154 = vpop.f32.mrb[0].mxu0
        %v3155 = vadd.f32 0.0, %v3154
        %v3156 = vpop.f32.mrb[0].mxu0
        %3157 = vmatprep.mubr.bf16.mxu0 0
        %3158 = vmatmul.mubr.bf16.gmra.mrb[0].mxu0 %v3010
        %v3159 = vpop.f32.mrb[0].mxu0
        %v3160 = vadd.f32 0.0, %v3159
        %v3161 = vpop.f32.mrb[0].mxu0
        %v3162 = vpop.f32.mrb[0].mxu0
        %v3163 = vadd.f32 0.0, %v3162
        %v3164 = vpop.f32.mrb[0].mxu0
        %3165 = vmatprep.mubr.bf16.mxu0 0
        %3166 = vmatmul.mubr.bf16.gmra.mrb[0].mxu0 %v3013
        %v3167 = vpop.f32.mrb[0].mxu0
        %v3168 = vadd.f32 0.0, %v3167
        %v3169 = vpop.f32.mrb[0].mxu0
        %v3170 = vpop.f32.mrb[0].mxu0
        %v3171 = vadd.f32 0.0, %v3170
        %v3172 = vpop.f32.mrb[0].mxu0
        %3173 = vmatprep.mubr.bf16.mxu0 0
        %3174 = vmatmul.mubr.bf16.gmra.mrb[0].mxu0 %v3016
        %v3175 = vpop.f32.mrb[0].mxu0
        %v3176 = vadd.f32 0.0, %v3175
        %v3177 = vpop.f32.mrb[0].mxu0
        %v3178 = vpop.f32.mrb[0].mxu0
        %v3179 = vadd.f32 0.0, %v3178
        %v3180 = vpop.f32.mrb[0].mxu0
        %3181 = vdwg.mxu0
        %v3182 = vadd.f32 %v2690, %v3056
        %v3183 = vadd.f32 %v2691, %v3059
        %v3184 = vadd.f32 %v2692, %v3064
        %v3185 = vadd.f32 %v2693, %v3067
        %v3186 = vadd.f32 %v2694, %v3072
        %v3187 = vadd.f32 %v2695, %v3075
        %v3188 = vadd.f32 %v2696, %v3080
        %v3189 = vadd.f32 %v2697, %v3083
        %v3190 = vadd.f32 %v2698, %v3088
        %v3191 = vadd.f32 %v2699, %v3091
        %v3192 = vadd.f32 %v2700, %v3096
        %v3193 = vadd.f32 %v2701, %v3099
        %v3194 = vadd.f32 %v2702, %v3104
        %v3195 = vadd.f32 %v2703, %v3107
        %v3196 = vadd.f32 %v2704, %v3112
        %v3197 = vadd.f32 %v2705, %v3115
        %v3198 = vadd.f32 %v2706, %v3120
        %v3199 = vadd.f32 %v2707, %v3123
        %v3200 = vadd.f32 %v2708, %v3128
        %v3201 = vadd.f32 %v2709, %v3131
        %v3202 = vadd.f32 %v2710, %v3136
        %v3203 = vadd.f32 %v2711, %v3139
        %v3204 = vadd.f32 %v2712, %v3144
        %v3205 = vadd.f32 %v2713, %v3147
        %v3206 = vadd.f32 %v2714, %v3152
        %v3207 = vadd.f32 %v2715, %v3155
        %v3208 = vadd.f32 %v2716, %v3160
        %v3209 = vadd.f32 %v2717, %v3163
        %v3210 = vadd.f32 %v2718, %v3168
        %v3211 = vadd.f32 %v2719, %v3171
        %v3212 = vadd.f32 %v2720, %v3176
        %v3213 = vadd.f32 %v2721, %v3179
        %v3214 = vld [vmem:[%s809] sm:$0xf]
        %v3215 = vld [vmem:[%s809 + $0x4] sm:$0xf]
        %v3216 = vld [vmem:[%s809 + $0xc] sm:$0xf]
        %v3217 = vld [vmem:[%s809 + $0x10] sm:$0xf]
        %v3218 = vld [vmem:[%s809 + $0x18] sm:$0xf]
        %v3219 = vld [vmem:[%s809 + $0x1c] sm:$0xf]
        %v3220 = vld [vmem:[%s809 + $0x24] sm:$0xf]
        %v3221 = vld [vmem:[%s809 + $0x28] sm:$0xf]
        %v3222 = vld [vmem:[%s809 + $0x30] sm:$0xf]
        %v3223 = vld [vmem:[%s809 + $0x34] sm:$0xf]
        %v3224 = vld [vmem:[%s809 + $0x3c] sm:$0xf]
        %v3225 = vld [vmem:[%s809 + $0x40] sm:$0xf]
        %v3226 = vld [vmem:[%s809 + $0x48] sm:$0xf]
        %v3227 = vld [vmem:[%s809 + $0x4c] sm:$0xf]
        %v3228 = vld [vmem:[%s809 + $0x54] sm:$0xf]
        %v3229 = vld [vmem:[%s809 + $0x58] sm:$0xf]
        %v3230 = vld [vmem:[%s809 + $0x60] sm:$0xf]
        %v3231 = vld [vmem:[%s809 + $0x64] sm:$0xf]
        %v3232 = vld [vmem:[%s809 + $0x6c] sm:$0xf]
        %v3233 = vld [vmem:[%s809 + $0x70] sm:$0xf]
        %v3234 = vld [vmem:[%s809 + $0x78] sm:$0xf]
        %v3235 = vld [vmem:[%s809 + $0x7c] sm:$0xf]
        %v3236 = vld [vmem:[%s809 + $0x84] sm:$0xf]
        %v3237 = vld [vmem:[%s809 + $0x88] sm:$0xf]
        %v3238 = vld [vmem:[%s809 + $0x90] sm:$0xf]
        %v3239 = vld [vmem:[%s809 + $0x94] sm:$0xf]
        %v3240 = vld [vmem:[%s809 + $0x9c] sm:$0xf]
        %v3241 = vld [vmem:[%s809 + $0xa0] sm:$0xf]
        %v3242 = vld [vmem:[%s809 + $0xa8] sm:$0xf]
        %v3243 = vld [vmem:[%s809 + $0xac] sm:$0xf]
        %v3244 = vld [vmem:[%s809 + $0xb4] sm:$0xf]
        %v3245 = vld [vmem:[%s809 + $0xb8] sm:$0xf]
        %s3246 = scalar_lea.vmem %s3, 60
        %v3247 = vld [vmem:[%s3246] sm:$0xf]
        %v3248 = vld [vmem:[%s3246 + $0x4] sm:$0xf]
        %v3249 = vld [vmem:[%s3246 + $0x8] sm:$0xf]
        %v3250 = vld [vmem:[%s3246 + $0xc] sm:$0xf]
        %v3251 = vld [vmem:[%s3246 + $0x10] sm:$0x3]
        %v3284 = vunpack.c.l.b16 %v3214
        %v3285 = vunpack.c.l.b16 %v3215
        %v3286 = vunpack.c.l.b16 %v3216
        %v3287 = vunpack.c.l.b16 %v3217
        %v3288 = vunpack.c.l.b16 %v3218
        %v3289 = vunpack.c.l.b16 %v3219
        %v3290 = vunpack.c.l.b16 %v3220
        %v3291 = vunpack.c.l.b16 %v3221
        %v3292 = vunpack.c.l.b16 %v3222
        %v3293 = vunpack.c.l.b16 %v3223
        %v3294 = vunpack.c.l.b16 %v3224
        %v3295 = vunpack.c.l.b16 %v3225
        %v3296 = vunpack.c.l.b16 %v3226
        %v3297 = vunpack.c.l.b16 %v3227
        %v3298 = vunpack.c.l.b16 %v3228
        %v3299 = vunpack.c.l.b16 %v3229
        %v3300 = vunpack.c.l.b16 %v3230
        %v3301 = vunpack.c.l.b16 %v3231
        %v3302 = vunpack.c.l.b16 %v3232
        %v3303 = vunpack.c.l.b16 %v3233
        %v3304 = vunpack.c.l.b16 %v3234
        %v3305 = vunpack.c.l.b16 %v3235
        %v3306 = vunpack.c.l.b16 %v3236
        %v3307 = vunpack.c.l.b16 %v3237
        %v3308 = vunpack.c.l.b16 %v3238
        %v3309 = vunpack.c.l.b16 %v3239
        %v3310 = vunpack.c.l.b16 %v3240
        %v3311 = vunpack.c.l.b16 %v3241
        %v3312 = vunpack.c.l.b16 %v3242
        %v3313 = vunpack.c.l.b16 %v3243
        %v3314 = vunpack.c.l.b16 %v3244
        %v3315 = vunpack.c.l.b16 %v3245
        %v3316 = vpack.c.b16 %v3285, %v3284
        %v3317 = vpack.c.b16 %v3287, %v3286
        %v3318 = vpack.c.b16 %v3289, %v3288
        %v3319 = vpack.c.b16 %v3291, %v3290
        %v3320 = vpack.c.b16 %v3293, %v3292
        %v3321 = vpack.c.b16 %v3295, %v3294
        %v3322 = vpack.c.b16 %v3297, %v3296
        %v3323 = vpack.c.b16 %v3299, %v3298
        %v3324 = vpack.c.b16 %v3301, %v3300
        %v3325 = vpack.c.b16 %v3303, %v3302
        %v3326 = vpack.c.b16 %v3305, %v3304
        %v3327 = vpack.c.b16 %v3307, %v3306
        %v3328 = vpack.c.b16 %v3309, %v3308
        %v3329 = vpack.c.b16 %v3311, %v3310
        %v3330 = vpack.c.b16 %v3313, %v3312
        %v3331 = vpack.c.b16 %v3315, %v3314
        %v3337 = vunpack.c.l.b16 %v3247
        %v3338 = vunpack.c.l.b16 %v3248
        %v3339 = vunpack.c.l.b16 %v3249
        %v3340 = vunpack.c.l.b16 %v3250
        %v3341 = vunpack.c.l.b16 %v3251
        %v3342 = vpack.c.b16 %v3338, %v3337
        %v3343 = vpack.c.b16 %v3340, %v3339
        %v3344 = vpack.c.b16 %v3341, %v3341
        %v3348 = vsel %vm1728, %v3316, 0
        %v3351 = vsel %vm1728, %v3317, 0
        %v3354 = vsel %vm1728, %v3318, 0
        %v3357 = vsel %vm1728, %v3319, 0
        %v3360 = vsel %vm1728, %v3320, 0
        %v3363 = vsel %vm1728, %v3321, 0
        %v3366 = vsel %vm1728, %v3322, 0
        %v3369 = vsel %vm1728, %v3323, 0
        %v3372 = vsel %vm1728, %v3324, 0
        %v3375 = vsel %vm1728, %v3325, 0
        %v3378 = vsel %vm1728, %v3326, 0
        %v3381 = vsel %vm1728, %v3327, 0
        %v3384 = vsel %vm1728, %v3328, 0
        %v3387 = vsel %vm1728, %v3329, 0
        %v3390 = vsel %vm1728, %v3330, 0
        %v3393 = vsel %vm1728, %v3331, 0
        %v3396 = vsel %vm1777, %v3344, 0
        %3398 = vmatprep.subr.bf16.mxu0 0
        %3399 = vmatpush1.bf16.msra.mxu0 %v3342
        %3400 = vmatprep.subr.bf16.mxu0 0
        %3401 = vmatpush1.bf16.msra.mxu0 %v3343
        %3402 = vmatprep.subr.bf16.mxu0 0
        %3403 = vmatpush1.bf16.msra.mxu0 %v3396
        %3404 = vmatprep.subr.bf16.mxu0 0
        %3405 = vmatpush1.bf16.msra.mxu0 0
        %3406 = vmatprep.subr.bf16.mxu0 0
        %3407 = vmatpush1.bf16.msra.mxu0 0
        %3408 = vmatprep.subr.bf16.mxu0 0
        %3409 = vmatpush1.bf16.msra.mxu0 0
        %3410 = vmatprep.subr.bf16.mxu0 0
        %3411 = vmatpush1.bf16.msra.mxu0 0
        %3412 = vmatprep.subr.bf16.mxu0 0
        %3413 = vmatpush1.bf16.msra.mxu0 0
        %3414 = vmatprep.subr.bf16.mxu0 0
        %3415 = vmatpush1.bf16.msra.mxu0 0
        %3416 = vmatprep.subr.bf16.mxu0 0
        %3417 = vmatpush1.bf16.msra.mxu0 0
        %3418 = vmatprep.subr.bf16.mxu0 0
        %3419 = vmatpush1.bf16.msra.mxu0 0
        %3420 = vmatprep.subr.bf16.mxu0 0
        %3421 = vmatpush1.bf16.msra.mxu0 0
        %3422 = vmatprep.subr.bf16.mxu0 0
        %3423 = vmatpush1.bf16.msra.mxu0 0
        %3424 = vmatprep.subr.bf16.mxu0 0
        %3425 = vmatpush1.bf16.msra.mxu0 0
        %3426 = vmatprep.subr.bf16.mxu0 0
        %3427 = vmatpush1.bf16.msra.mxu0 0
        %3428 = vmatprep.subr.bf16.mxu0 0
        %3429 = vmatpush1.bf16.msra.mxu0 0
        %3430 = vmatprep.mubr.bf16.mxu0 0
        %3431 = vmatmul.mubr.bf16.gmra.mrb[0].mxu0 %v3348
        %v3432 = vpop.f32.mrb[0].mxu0
        %v3433 = vadd.f32 0.0, %v3432
        %v3434 = vpop.f32.mrb[0].mxu0
        %v3435 = vpop.f32.mrb[0].mxu0
        %v3436 = vadd.f32 0.0, %v3435
        %v3437 = vpop.f32.mrb[0].mxu0
        %3438 = vmatprep.mubr.bf16.mxu0 0
        %3439 = vmatmul.mubr.bf16.gmra.mrb[0].mxu0 %v3351
        %v3440 = vpop.f32.mrb[0].mxu0
        %v3441 = vadd.f32 0.0, %v3440
        %v3442 = vpop.f32.mrb[0].mxu0
        %v3443 = vpop.f32.mrb[0].mxu0
        %v3444 = vadd.f32 0.0, %v3443
        %v3445 = vpop.f32.mrb[0].mxu0
        %3446 = vmatprep.mubr.bf16.mxu0 0
        %3447 = vmatmul.mubr.bf16.gmra.mrb[0].mxu0 %v3354
        %v3448 = vpop.f32.mrb[0].mxu0
        %v3449 = vadd.f32 0.0, %v3448
        %v3450 = vpop.f32.mrb[0].mxu0
        %v3451 = vpop.f32.mrb[0].mxu0
        %v3452 = vadd.f32 0.0, %v3451
        %v3453 = vpop.f32.mrb[0].mxu0
        %3454 = vmatprep.mubr.bf16.mxu0 0
        %3455 = vmatmul.mubr.bf16.gmra.mrb[0].mxu0 %v3357
        %v3456 = vpop.f32.mrb[0].mxu0
        %v3457 = vadd.f32 0.0, %v3456
        %v3458 = vpop.f32.mrb[0].mxu0
        %v3459 = vpop.f32.mrb[0].mxu0
        %v3460 = vadd.f32 0.0, %v3459
        %v3461 = vpop.f32.mrb[0].mxu0
        %3462 = vmatprep.mubr.bf16.mxu0 0
        %3463 = vmatmul.mubr.bf16.gmra.mrb[0].mxu0 %v3360
        %v3464 = vpop.f32.mrb[0].mxu0
        %v3465 = vadd.f32 0.0, %v3464
        %v3466 = vpop.f32.mrb[0].mxu0
        %v3467 = vpop.f32.mrb[0].mxu0
        %v3468 = vadd.f32 0.0, %v3467
        %v3469 = vpop.f32.mrb[0].mxu0
        %3470 = vmatprep.mubr.bf16.mxu0 0
        %3471 = vmatmul.mubr.bf16.gmra.mrb[0].mxu0 %v3363
        %v3472 = vpop.f32.mrb[0].mxu0
        %v3473 = vadd.f32 0.0, %v3472
        %v3474 = vpop.f32.mrb[0].mxu0
        %v3475 = vpop.f32.mrb[0].mxu0
        %v3476 = vadd.f32 0.0, %v3475
        %v3477 = vpop.f32.mrb[0].mxu0
        %3478 = vmatprep.mubr.bf16.mxu0 0
        %3479 = vmatmul.mubr.bf16.gmra.mrb[0].mxu0 %v3366
        %v3480 = vpop.f32.mrb[0].mxu0
        %v3481 = vadd.f32 0.0, %v3480
        %v3482 = vpop.f32.mrb[0].mxu0
        %v3483 = vpop.f32.mrb[0].mxu0
        %v3484 = vadd.f32 0.0, %v3483
        %v3485 = vpop.f32.mrb[0].mxu0
        %3486 = vmatprep.mubr.bf16.mxu0 0
        %3487 = vmatmul.mubr.bf16.gmra.mrb[0].mxu0 %v3369
        %v3488 = vpop.f32.mrb[0].mxu0
        %v3489 = vadd.f32 0.0, %v3488
        %v3490 = vpop.f32.mrb[0].mxu0
        %v3491 = vpop.f32.mrb[0].mxu0
        %v3492 = vadd.f32 0.0, %v3491
        %v3493 = vpop.f32.mrb[0].mxu0
        %3494 = vmatprep.mubr.bf16.mxu0 0
        %3495 = vmatmul.mubr.bf16.gmra.mrb[0].mxu0 %v3372
        %v3496 = vpop.f32.mrb[0].mxu0
        %v3497 = vadd.f32 0.0, %v3496
        %v3498 = vpop.f32.mrb[0].mxu0
        %v3499 = vpop.f32.mrb[0].mxu0
        %v3500 = vadd.f32 0.0, %v3499
        %v3501 = vpop.f32.mrb[0].mxu0
        %3502 = vmatprep.mubr.bf16.mxu0 0
        %3503 = vmatmul.mubr.bf16.gmra.mrb[0].mxu0 %v3375
        %v3504 = vpop.f32.mrb[0].mxu0
        %v3505 = vadd.f32 0.0, %v3504
        %v3506 = vpop.f32.mrb[0].mxu0
        %v3507 = vpop.f32.mrb[0].mxu0
        %v3508 = vadd.f32 0.0, %v3507
        %v3509 = vpop.f32.mrb[0].mxu0
        %3510 = vmatprep.mubr.bf16.mxu0 0
        %3511 = vmatmul.mubr.bf16.gmra.mrb[0].mxu0 %v3378
        %v3512 = vpop.f32.mrb[0].mxu0
        %v3513 = vadd.f32 0.0, %v3512
        %v3514 = vpop.f32.mrb[0].mxu0
        %v3515 = vpop.f32.mrb[0].mxu0
        %v3516 = vadd.f32 0.0, %v3515
        %v3517 = vpop.f32.mrb[0].mxu0
        %3518 = vmatprep.mubr.bf16.mxu0 0
        %3519 = vmatmul.mubr.bf16.gmra.mrb[0].mxu0 %v3381
        %v3520 = vpop.f32.mrb[0].mxu0
        %v3521 = vadd.f32 0.0, %v3520
        %v3522 = vpop.f32.mrb[0].mxu0
        %v3523 = vpop.f32.mrb[0].mxu0
        %v3524 = vadd.f32 0.0, %v3523
        %v3525 = vpop.f32.mrb[0].mxu0
        %3526 = vmatprep.mubr.bf16.mxu0 0
        %3527 = vmatmul.mubr.bf16.gmra.mrb[0].mxu0 %v3384
        %v3528 = vpop.f32.mrb[0].mxu0
        %v3529 = vadd.f32 0.0, %v3528
        %v3530 = vpop.f32.mrb[0].mxu0
        %v3531 = vpop.f32.mrb[0].mxu0
        %v3532 = vadd.f32 0.0, %v3531
        %v3533 = vpop.f32.mrb[0].mxu0
        %3534 = vmatprep.mubr.bf16.mxu0 0
        %3535 = vmatmul.mubr.bf16.gmra.mrb[0].mxu0 %v3387
        %v3536 = vpop.f32.mrb[0].mxu0
        %v3537 = vadd.f32 0.0, %v3536
        %v3538 = vpop.f32.mrb[0].mxu0
        %v3539 = vpop.f32.mrb[0].mxu0
        %v3540 = vadd.f32 0.0, %v3539
        %v3541 = vpop.f32.mrb[0].mxu0
        %3542 = vmatprep.mubr.bf16.mxu0 0
        %3543 = vmatmul.mubr.bf16.gmra.mrb[0].mxu0 %v3390
        %v3544 = vpop.f32.mrb[0].mxu0
        %v3545 = vadd.f32 0.0, %v3544
        %v3546 = vpop.f32.mrb[0].mxu0
        %v3547 = vpop.f32.mrb[0].mxu0
        %v3548 = vadd.f32 0.0, %v3547
        %v3549 = vpop.f32.mrb[0].mxu0
        %3550 = vmatprep.mubr.bf16.mxu0 0
        %3551 = vmatmul.mubr.bf16.gmra.mrb[0].mxu0 %v3393
        %v3552 = vpop.f32.mrb[0].mxu0
        %v3553 = vadd.f32 0.0, %v3552
        %v3554 = vpop.f32.mrb[0].mxu0
        %v3555 = vpop.f32.mrb[0].mxu0
        %v3556 = vadd.f32 0.0, %v3555
        %v3557 = vpop.f32.mrb[0].mxu0
        %3558 = vdwg.mxu0
        %v3559 = vadd.f32 %v3182, %v3433
        %v3560 = vadd.f32 %v3183, %v3436
        %v3561 = vadd.f32 %v3184, %v3441
        %v3562 = vadd.f32 %v3185, %v3444
        %v3563 = vadd.f32 %v3186, %v3449
        %v3564 = vadd.f32 %v3187, %v3452
        %v3565 = vadd.f32 %v3188, %v3457
        %v3566 = vadd.f32 %v3189, %v3460
        %v3567 = vadd.f32 %v3190, %v3465
        %v3568 = vadd.f32 %v3191, %v3468
        %v3569 = vadd.f32 %v3192, %v3473
        %v3570 = vadd.f32 %v3193, %v3476
        %v3571 = vadd.f32 %v3194, %v3481
        %v3572 = vadd.f32 %v3195, %v3484
        %v3573 = vadd.f32 %v3196, %v3489
        %v3574 = vadd.f32 %v3197, %v3492
        %v3575 = vadd.f32 %v3198, %v3497
        %v3576 = vadd.f32 %v3199, %v3500
        %v3577 = vadd.f32 %v3200, %v3505
        %v3578 = vadd.f32 %v3201, %v3508
        %v3579 = vadd.f32 %v3202, %v3513
        %v3580 = vadd.f32 %v3203, %v3516
        %v3581 = vadd.f32 %v3204, %v3521
        %v3582 = vadd.f32 %v3205, %v3524
        %v3583 = vadd.f32 %v3206, %v3529
        %v3584 = vadd.f32 %v3207, %v3532
        %v3585 = vadd.f32 %v3208, %v3537
        %v3586 = vadd.f32 %v3209, %v3540
        %v3587 = vadd.f32 %v3210, %v3545
        %v3588 = vadd.f32 %v3211, %v3548
        %v3589 = vadd.f32 %v3212, %v3553
        %v3590 = vadd.f32 %v3213, %v3556
        %v3591 = vld [vmem:[%s809] sm:$0xf]
        %v3592 = vld [vmem:[%s809 + $0x4] sm:$0xf]
        %v3593 = vld [vmem:[%s809 + $0x8] sm:$0x1]
        %v3594 = vld [vmem:[%s809 + $0xc] sm:$0xf]
        %v3595 = vld [vmem:[%s809 + $0x10] sm:$0xf]
        %v3596 = vld [vmem:[%s809 + $0x14] sm:$0x1]
        %v3597 = vld [vmem:[%s809 + $0x18] sm:$0xf]
        %v3598 = vld [vmem:[%s809 + $0x1c] sm:$0xf]
        %v3599 = vld [vmem:[%s809 + $0x20] sm:$0x1]
        %v3600 = vld [vmem:[%s809 + $0x24] sm:$0xf]
        %v3601 = vld [vmem:[%s809 + $0x28] sm:$0xf]
        %v3602 = vld [vmem:[%s809 + $0x2c] sm:$0x1]
        %v3603 = vld [vmem:[%s809 + $0x30] sm:$0xf]
        %v3604 = vld [vmem:[%s809 + $0x34] sm:$0xf]
        %v3605 = vld [vmem:[%s809 + $0x38] sm:$0x1]
        %v3606 = vld [vmem:[%s809 + $0x3c] sm:$0xf]
        %v3607 = vld [vmem:[%s809 + $0x40] sm:$0xf]
        %v3608 = vld [vmem:[%s809 + $0x44] sm:$0x1]
        %v3609 = vld [vmem:[%s809 + $0x48] sm:$0xf]
        %v3610 = vld [vmem:[%s809 + $0x4c] sm:$0xf]
        %v3611 = vld [vmem:[%s809 + $0x50] sm:$0x1]
        %v3612 = vld [vmem:[%s809 + $0x54] sm:$0xf]
        %v3613 = vld [vmem:[%s809 + $0x58] sm:$0xf]
        %v3614 = vld [vmem:[%s809 + $0x5c] sm:$0x1]
        %v3615 = vld [vmem:[%s809 + $0x60] sm:$0xf]
        %v3616 = vld [vmem:[%s809 + $0x64] sm:$0xf]
        %v3617 = vld [vmem:[%s809 + $0x68] sm:$0x1]
        %v3618 = vld [vmem:[%s809 + $0x6c] sm:$0xf]
        %v3619 = vld [vmem:[%s809 + $0x70] sm:$0xf]
        %v3620 = vld [vmem:[%s809 + $0x74] sm:$0x1]
        %v3621 = vld [vmem:[%s809 + $0x78] sm:$0xf]
        %v3622 = vld [vmem:[%s809 + $0x7c] sm:$0xf]
        %v3623 = vld [vmem:[%s809 + $0x80] sm:$0x1]
        %v3624 = vld [vmem:[%s809 + $0x84] sm:$0xf]
        %v3625 = vld [vmem:[%s809 + $0x88] sm:$0xf]
        %v3626 = vld [vmem:[%s809 + $0x8c] sm:$0x1]
        %v3627 = vld [vmem:[%s809 + $0x90] sm:$0xf]
        %v3628 = vld [vmem:[%s809 + $0x94] sm:$0xf]
        %v3629 = vld [vmem:[%s809 + $0x98] sm:$0x1]
        %v3630 = vld [vmem:[%s809 + $0x9c] sm:$0xf]
        %v3631 = vld [vmem:[%s809 + $0xa0] sm:$0xf]
        %v3632 = vld [vmem:[%s809 + $0xa4] sm:$0x1]
        %v3633 = vld [vmem:[%s809 + $0xa8] sm:$0xf]
        %v3634 = vld [vmem:[%s809 + $0xac] sm:$0xf]
        %v3635 = vld [vmem:[%s809 + $0xb0] sm:$0x1]
        %v3636 = vld [vmem:[%s809 + $0xb4] sm:$0xf]
        %v3637 = vld [vmem:[%s809 + $0xb8] sm:$0xf]
        %v3638 = vld [vmem:[%s809 + $0xbc] sm:$0x1]
        %v3640 = vshrl.u32 %v3591, 16
        %v3642 = vrot.slane %v3640, 4
        %v3643 = vshll.u32 %v3591, 16
        %v3645 = vrot.slane %v3643, 5
        %v3646 = vor.u32 %v3642, %v3645
        %v3647 = vrot.slane %v3646, 4
        %v3649 = vshll.u32 %v3592, 16
        %v3651 = vrot.slane %v3649, 5
        %v3652 = vsel %vm2024, %v3647, %v3651
        %v3653 = vshrl.u32 %v3592, 16
        %v3655 = vrot.slane %v3653, 4
        %v3656 = vor.u32 %v3655, %v3651
        %v3657 = vrot.slane %v3656, 4
        %v3659 = vshll.u32 %v3593, 16
        %v3661 = vrot.slane %v3659, 5
        %v3662 = vsel %vm2024, %v3657, %v3661
        %v3664 = vshrl.u32 %v3594, 16
        %v3666 = vrot.slane %v3664, 4
        %v3667 = vshll.u32 %v3594, 16
        %v3669 = vrot.slane %v3667, 5
        %v3670 = vor.u32 %v3666, %v3669
        %v3671 = vrot.slane %v3670, 4
        %v3673 = vshll.u32 %v3595, 16
        %v3675 = vrot.slane %v3673, 5
        %v3676 = vsel %vm2024, %v3671, %v3675
        %v3677 = vshrl.u32 %v3595, 16
        %v3679 = vrot.slane %v3677, 4
        %v3680 = vor.u32 %v3679, %v3675
        %v3681 = vrot.slane %v3680, 4
        %v3683 = vshll.u32 %v3596, 16
        %v3685 = vrot.slane %v3683, 5
        %v3686 = vsel %vm2024, %v3681, %v3685
        %v3688 = vshrl.u32 %v3597, 16
        %v3690 = vrot.slane %v3688, 4
        %v3691 = vshll.u32 %v3597, 16
        %v3693 = vrot.slane %v3691, 5
        %v3694 = vor.u32 %v3690, %v3693
        %v3695 = vrot.slane %v3694, 4
        %v3697 = vshll.u32 %v3598, 16
        %v3699 = vrot.slane %v3697, 5
        %v3700 = vsel %vm2024, %v3695, %v3699
        %v3701 = vshrl.u32 %v3598, 16
        %v3703 = vrot.slane %v3701, 4
        %v3704 = vor.u32 %v3703, %v3699
        %v3705 = vrot.slane %v3704, 4
        %v3707 = vshll.u32 %v3599, 16
        %v3709 = vrot.slane %v3707, 5
        %v3710 = vsel %vm2024, %v3705, %v3709
        %v3712 = vshrl.u32 %v3600, 16
        %v3714 = vrot.slane %v3712, 4
        %v3715 = vshll.u32 %v3600, 16
        %v3717 = vrot.slane %v3715, 5
        %v3718 = vor.u32 %v3714, %v3717
        %v3719 = vrot.slane %v3718, 4
        %v3721 = vshll.u32 %v3601, 16
        %v3723 = vrot.slane %v3721, 5
        %v3724 = vsel %vm2024, %v3719, %v3723
        %v3725 = vshrl.u32 %v3601, 16
        %v3727 = vrot.slane %v3725, 4
        %v3728 = vor.u32 %v3727, %v3723
        %v3729 = vrot.slane %v3728, 4
        %v3731 = vshll.u32 %v3602, 16
        %v3733 = vrot.slane %v3731, 5
        %v3734 = vsel %vm2024, %v3729, %v3733
        %v3736 = vshrl.u32 %v3603, 16
        %v3738 = vrot.slane %v3736, 4
        %v3739 = vshll.u32 %v3603, 16
        %v3741 = vrot.slane %v3739, 5
        %v3742 = vor.u32 %v3738, %v3741
        %v3743 = vrot.slane %v3742, 4
        %v3745 = vshll.u32 %v3604, 16
        %v3747 = vrot.slane %v3745, 5
        %v3748 = vsel %vm2024, %v3743, %v3747
        %v3749 = vshrl.u32 %v3604, 16
        %v3751 = vrot.slane %v3749, 4
        %v3752 = vor.u32 %v3751, %v3747
        %v3753 = vrot.slane %v3752, 4
        %v3755 = vshll.u32 %v3605, 16
        %v3757 = vrot.slane %v3755, 5
        %v3758 = vsel %vm2024, %v3753, %v3757
        %v3760 = vshrl.u32 %v3606, 16
        %v3762 = vrot.slane %v3760, 4
        %v3763 = vshll.u32 %v3606, 16
        %v3765 = vrot.slane %v3763, 5
        %v3766 = vor.u32 %v3762, %v3765
        %v3767 = vrot.slane %v3766, 4
        %v3769 = vshll.u32 %v3607, 16
        %v3771 = vrot.slane %v3769, 5
        %v3772 = vsel %vm2024, %v3767, %v3771
        %v3773 = vshrl.u32 %v3607, 16
        %v3775 = vrot.slane %v3773, 4
        %v3776 = vor.u32 %v3775, %v3771
        %v3777 = vrot.slane %v3776, 4
        %v3779 = vshll.u32 %v3608, 16
        %v3781 = vrot.slane %v3779, 5
        %v3782 = vsel %vm2024, %v3777, %v3781
        %v3784 = vshrl.u32 %v3609, 16
        %v3786 = vrot.slane %v3784, 4
        %v3787 = vshll.u32 %v3609, 16
        %v3789 = vrot.slane %v3787, 5
        %v3790 = vor.u32 %v3786, %v3789
        %v3791 = vrot.slane %v3790, 4
        %v3793 = vshll.u32 %v3610, 16
        %v3795 = vrot.slane %v3793, 5
        %v3796 = vsel %vm2024, %v3791, %v3795
        %v3797 = vshrl.u32 %v3610, 16
        %v3799 = vrot.slane %v3797, 4
        %v3800 = vor.u32 %v3799, %v3795
        %v3801 = vrot.slane %v3800, 4
        %v3803 = vshll.u32 %v3611, 16
        %v3805 = vrot.slane %v3803, 5
        %v3806 = vsel %vm2024, %v3801, %v3805
        %v3808 = vshrl.u32 %v3612, 16
        %v3810 = vrot.slane %v3808, 4
        %v3811 = vshll.u32 %v3612, 16
        %v3813 = vrot.slane %v3811, 5
        %v3814 = vor.u32 %v3810, %v3813
        %v3815 = vrot.slane %v3814, 4
        %v3817 = vshll.u32 %v3613, 16
        %v3819 = vrot.slane %v3817, 5
        %v3820 = vsel %vm2024, %v3815, %v3819
        %v3821 = vshrl.u32 %v3613, 16
        %v3823 = vrot.slane %v3821, 4
        %v3824 = vor.u32 %v3823, %v3819
        %v3825 = vrot.slane %v3824, 4
        %v3827 = vshll.u32 %v3614, 16
        %v3829 = vrot.slane %v3827, 5
        %v3830 = vsel %vm2024, %v3825, %v3829
        %v3832 = vshrl.u32 %v3615, 16
        %v3834 = vrot.slane %v3832, 4
        %v3835 = vshll.u32 %v3615, 16
        %v3837 = vrot.slane %v3835, 5
        %v3838 = vor.u32 %v3834, %v3837
        %v3839 = vrot.slane %v3838, 4
        %v3841 = vshll.u32 %v3616, 16
        %v3843 = vrot.slane %v3841, 5
        %v3844 = vsel %vm2024, %v3839, %v3843
        %v3845 = vshrl.u32 %v3616, 16
        %v3847 = vrot.slane %v3845, 4
        %v3848 = vor.u32 %v3847, %v3843
        %v3849 = vrot.slane %v3848, 4
        %v3851 = vshll.u32 %v3617, 16
        %v3853 = vrot.slane %v3851, 5
        %v3854 = vsel %vm2024, %v3849, %v3853
        %v3856 = vshrl.u32 %v3618, 16
        %v3858 = vrot.slane %v3856, 4
        %v3859 = vshll.u32 %v3618, 16
        %v3861 = vrot.slane %v3859, 5
        %v3862 = vor.u32 %v3858, %v3861
        %v3863 = vrot.slane %v3862, 4
        %v3865 = vshll.u32 %v3619, 16
        %v3867 = vrot.slane %v3865, 5
        %v3868 = vsel %vm2024, %v3863, %v3867
        %v3869 = vshrl.u32 %v3619, 16
        %v3871 = vrot.slane %v3869, 4
        %v3872 = vor.u32 %v3871, %v3867
        %v3873 = vrot.slane %v3872, 4
        %v3875 = vshll.u32 %v3620, 16
        %v3877 = vrot.slane %v3875, 5
        %v3878 = vsel %vm2024, %v3873, %v3877
        %v3880 = vshrl.u32 %v3621, 16
        %v3882 = vrot.slane %v3880, 4
        %v3883 = vshll.u32 %v3621, 16
        %v3885 = vrot.slane %v3883, 5
        %v3886 = vor.u32 %v3882, %v3885
        %v3887 = vrot.slane %v3886, 4
        %v3889 = vshll.u32 %v3622, 16
        %v3891 = vrot.slane %v3889, 5
        %v3892 = vsel %vm2024, %v3887, %v3891
        %v3893 = vshrl.u32 %v3622, 16
        %v3895 = vrot.slane %v3893, 4
        %v3896 = vor.u32 %v3895, %v3891
        %v3897 = vrot.slane %v3896, 4
        %v3899 = vshll.u32 %v3623, 16
        %v3901 = vrot.slane %v3899, 5
        %v3902 = vsel %vm2024, %v3897, %v3901
        %v3904 = vshrl.u32 %v3624, 16
        %v3906 = vrot.slane %v3904, 4
        %v3907 = vshll.u32 %v3624, 16
        %v3909 = vrot.slane %v3907, 5
        %v3910 = vor.u32 %v3906, %v3909
        %v3911 = vrot.slane %v3910, 4
        %v3913 = vshll.u32 %v3625, 16
        %v3915 = vrot.slane %v3913, 5
        %v3916 = vsel %vm2024, %v3911, %v3915
        %v3917 = vshrl.u32 %v3625, 16
        %v3919 = vrot.slane %v3917, 4
        %v3920 = vor.u32 %v3919, %v3915
        %v3921 = vrot.slane %v3920, 4
        %v3923 = vshll.u32 %v3626, 16
        %v3925 = vrot.slane %v3923, 5
        %v3926 = vsel %vm2024, %v3921, %v3925
        %v3928 = vshrl.u32 %v3627, 16
        %v3930 = vrot.slane %v3928, 4
        %v3931 = vshll.u32 %v3627, 16
        %v3933 = vrot.slane %v3931, 5
        %v3934 = vor.u32 %v3930, %v3933
        %v3935 = vrot.slane %v3934, 4
        %v3937 = vshll.u32 %v3628, 16
        %v3939 = vrot.slane %v3937, 5
        %v3940 = vsel %vm2024, %v3935, %v3939
        %v3941 = vshrl.u32 %v3628, 16
        %v3943 = vrot.slane %v3941, 4
        %v3944 = vor.u32 %v3943, %v3939
        %v3945 = vrot.slane %v3944, 4
        %v3947 = vshll.u32 %v3629, 16
        %v3949 = vrot.slane %v3947, 5
        %v3950 = vsel %vm2024, %v3945, %v3949
        %v3952 = vshrl.u32 %v3630, 16
        %v3954 = vrot.slane %v3952, 4
        %v3955 = vshll.u32 %v3630, 16
        %v3957 = vrot.slane %v3955, 5
        %v3958 = vor.u32 %v3954, %v3957
        %v3959 = vrot.slane %v3958, 4
        %v3961 = vshll.u32 %v3631, 16
        %v3963 = vrot.slane %v3961, 5
        %v3964 = vsel %vm2024, %v3959, %v3963
        %v3965 = vshrl.u32 %v3631, 16
        %v3967 = vrot.slane %v3965, 4
        %v3968 = vor.u32 %v3967, %v3963
        %v3969 = vrot.slane %v3968, 4
        %v3971 = vshll.u32 %v3632, 16
        %v3973 = vrot.slane %v3971, 5
        %v3974 = vsel %vm2024, %v3969, %v3973
        %v3976 = vshrl.u32 %v3633, 16
        %v3978 = vrot.slane %v3976, 4
        %v3979 = vshll.u32 %v3633, 16
        %v3981 = vrot.slane %v3979, 5
        %v3982 = vor.u32 %v3978, %v3981
        %v3983 = vrot.slane %v3982, 4
        %v3985 = vshll.u32 %v3634, 16
        %v3987 = vrot.slane %v3985, 5
        %v3988 = vsel %vm2024, %v3983, %v3987
        %v3989 = vshrl.u32 %v3634, 16
        %v3991 = vrot.slane %v3989, 4
        %v3992 = vor.u32 %v3991, %v3987
        %v3993 = vrot.slane %v3992, 4
        %v3995 = vshll.u32 %v3635, 16
        %v3997 = vrot.slane %v3995, 5
        %v3998 = vsel %vm2024, %v3993, %v3997
        %v4000 = vshrl.u32 %v3636, 16
        %v4002 = vrot.slane %v4000, 4
        %v4003 = vshll.u32 %v3636, 16
        %v4005 = vrot.slane %v4003, 5
        %v4006 = vor.u32 %v4002, %v4005
        %v4007 = vrot.slane %v4006, 4
        %v4009 = vshll.u32 %v3637, 16
        %v4011 = vrot.slane %v4009, 5
        %v4012 = vsel %vm2024, %v4007, %v4011
        %v4013 = vshrl.u32 %v3637, 16
        %v4015 = vrot.slane %v4013, 4
        %v4016 = vor.u32 %v4015, %v4011
        %v4017 = vrot.slane %v4016, 4
        %v4019 = vshll.u32 %v3638, 16
        %v4021 = vrot.slane %v4019, 5
        %v4022 = vsel %vm2024, %v4017, %v4021
        %s4023 = scalar_lea.vmem %s3, 80
        %v4024 = vld [vmem:[%s4023] sm:$0xf]
        %v4025 = vld [vmem:[%s4023 + $0x4] sm:$0xf]
        %v4026 = vld [vmem:[%s4023 + $0x8] sm:$0xf]
        %v4027 = vld [vmem:[%s4023 + $0xc] sm:$0xf]
        %v4028 = vld [vmem:[%s4023 + $0x10] sm:$0x3]
        %v4029 = vunpack.c.l.b16 %v3652
        %v4030 = vunpack.c.l.b16 %v3662
        %v4031 = vunpack.c.l.b16 %v3676
        %v4032 = vunpack.c.l.b16 %v3686
        %v4033 = vunpack.c.l.b16 %v3700
        %v4034 = vunpack.c.l.b16 %v3710
        %v4035 = vunpack.c.l.b16 %v3724
        %v4036 = vunpack.c.l.b16 %v3734
        %v4037 = vunpack.c.l.b16 %v3748
        %v4038 = vunpack.c.l.b16 %v3758
        %v4039 = vunpack.c.l.b16 %v3772
        %v4040 = vunpack.c.l.b16 %v3782
        %v4041 = vunpack.c.l.b16 %v3796
        %v4042 = vunpack.c.l.b16 %v3806
        %v4043 = vunpack.c.l.b16 %v3820
        %v4044 = vunpack.c.l.b16 %v3830
        %v4045 = vunpack.c.l.b16 %v3844
        %v4046 = vunpack.c.l.b16 %v3854
        %v4047 = vunpack.c.l.b16 %v3868
        %v4048 = vunpack.c.l.b16 %v3878
        %v4049 = vunpack.c.l.b16 %v3892
        %v4050 = vunpack.c.l.b16 %v3902
        %v4051 = vunpack.c.l.b16 %v3916
        %v4052 = vunpack.c.l.b16 %v3926
        %v4053 = vunpack.c.l.b16 %v3940
        %v4054 = vunpack.c.l.b16 %v3950
        %v4055 = vunpack.c.l.b16 %v3964
        %v4056 = vunpack.c.l.b16 %v3974
        %v4057 = vunpack.c.l.b16 %v3988
        %v4058 = vunpack.c.l.b16 %v3998
        %v4059 = vunpack.c.l.b16 %v4012
        %v4060 = vunpack.c.l.b16 %v4022
        %v4061 = vpack.c.b16 %v4030, %v4029
        %v4062 = vpack.c.b16 %v4032, %v4031
        %v4063 = vpack.c.b16 %v4034, %v4033
        %v4064 = vpack.c.b16 %v4036, %v4035
        %v4065 = vpack.c.b16 %v4038, %v4037
        %v4066 = vpack.c.b16 %v4040, %v4039
        %v4067 = vpack.c.b16 %v4042, %v4041
        %v4068 = vpack.c.b16 %v4044, %v4043
        %v4069 = vpack.c.b16 %v4046, %v4045
        %v4070 = vpack.c.b16 %v4048, %v4047
        %v4071 = vpack.c.b16 %v4050, %v4049
        %v4072 = vpack.c.b16 %v4052, %v4051
        %v4073 = vpack.c.b16 %v4054, %v4053
        %v4074 = vpack.c.b16 %v4056, %v4055
        %v4075 = vpack.c.b16 %v4058, %v4057
        %v4076 = vpack.c.b16 %v4060, %v4059
        %v4082 = vunpack.c.l.b16 %v4024
        %v4083 = vunpack.c.l.b16 %v4025
        %v4084 = vunpack.c.l.b16 %v4026
        %v4085 = vunpack.c.l.b16 %v4027
        %v4086 = vunpack.c.l.b16 %v4028
        %v4087 = vpack.c.b16 %v4083, %v4082
        %v4088 = vpack.c.b16 %v4085, %v4084
        %v4089 = vpack.c.b16 %v4086, %v4086
        %v4093 = vsel %vm1728, %v4061, 0
        %v4096 = vsel %vm1728, %v4062, 0
        %v4099 = vsel %vm1728, %v4063, 0
        %v4102 = vsel %vm1728, %v4064, 0
        %v4105 = vsel %vm1728, %v4065, 0
        %v4108 = vsel %vm1728, %v4066, 0
        %v4111 = vsel %vm1728, %v4067, 0
        %v4114 = vsel %vm1728, %v4068, 0
        %v4117 = vsel %vm1728, %v4069, 0
        %v4120 = vsel %vm1728, %v4070, 0
        %v4123 = vsel %vm1728, %v4071, 0
        %v4126 = vsel %vm1728, %v4072, 0
        %v4129 = vsel %vm1728, %v4073, 0
        %v4132 = vsel %vm1728, %v4074, 0
        %v4135 = vsel %vm1728, %v4075, 0
        %v4138 = vsel %vm1728, %v4076, 0
        %v4141 = vsel %vm1777, %v4089, 0
        %4143 = vmatprep.subr.bf16.mxu0 0
        %4144 = vmatpush1.bf16.msra.mxu0 %v4087
        %4145 = vmatprep.subr.bf16.mxu0 0
        %4146 = vmatpush1.bf16.msra.mxu0 %v4088
        %4147 = vmatprep.subr.bf16.mxu0 0
        %4148 = vmatpush1.bf16.msra.mxu0 %v4141
        %4149 = vmatprep.subr.bf16.mxu0 0
        %4150 = vmatpush1.bf16.msra.mxu0 0
        %4151 = vmatprep.subr.bf16.mxu0 0
        %4152 = vmatpush1.bf16.msra.mxu0 0
        %4153 = vmatprep.subr.bf16.mxu0 0
        %4154 = vmatpush1.bf16.msra.mxu0 0
        %4155 = vmatprep.subr.bf16.mxu0 0
        %4156 = vmatpush1.bf16.msra.mxu0 0
        %4157 = vmatprep.subr.bf16.mxu0 0
        %4158 = vmatpush1.bf16.msra.mxu0 0
        %4159 = vmatprep.subr.bf16.mxu0 0
        %4160 = vmatpush1.bf16.msra.mxu0 0
        %4161 = vmatprep.subr.bf16.mxu0 0
        %4162 = vmatpush1.bf16.msra.mxu0 0
        %4163 = vmatprep.subr.bf16.mxu0 0
        %4164 = vmatpush1.bf16.msra.mxu0 0
        %4165 = vmatprep.subr.bf16.mxu0 0
        %4166 = vmatpush1.bf16.msra.mxu0 0
        %4167 = vmatprep.subr.bf16.mxu0 0
        %4168 = vmatpush1.bf16.msra.mxu0 0
        %4169 = vmatprep.subr.bf16.mxu0 0
        %4170 = vmatpush1.bf16.msra.mxu0 0
        %4171 = vmatprep.subr.bf16.mxu0 0
        %4172 = vmatpush1.bf16.msra.mxu0 0
        %4173 = vmatprep.subr.bf16.mxu0 0
        %4174 = vmatpush1.bf16.msra.mxu0 0
        %4175 = vmatprep.mubr.bf16.mxu0 0
        %4176 = vmatmul.mubr.bf16.gmra.mrb[0].mxu0 %v4093
        %v4177 = vpop.f32.mrb[0].mxu0
        %v4178 = vadd.f32 0.0, %v4177
        %v4179 = vpop.f32.mrb[0].mxu0
        %v4180 = vpop.f32.mrb[0].mxu0
        %v4181 = vadd.f32 0.0, %v4180
        %v4182 = vpop.f32.mrb[0].mxu0
        %4183 = vmatprep.mubr.bf16.mxu0 0
        %4184 = vmatmul.mubr.bf16.gmra.mrb[0].mxu0 %v4096
        %v4185 = vpop.f32.mrb[0].mxu0
        %v4186 = vadd.f32 0.0, %v4185
        %v4187 = vpop.f32.mrb[0].mxu0
        %v4188 = vpop.f32.mrb[0].mxu0
        %v4189 = vadd.f32 0.0, %v4188
        %v4190 = vpop.f32.mrb[0].mxu0
        %4191 = vmatprep.mubr.bf16.mxu0 0
        %4192 = vmatmul.mubr.bf16.gmra.mrb[0].mxu0 %v4099
        %v4193 = vpop.f32.mrb[0].mxu0
        %v4194 = vadd.f32 0.0, %v4193
        %v4195 = vpop.f32.mrb[0].mxu0
        %v4196 = vpop.f32.mrb[0].mxu0
        %v4197 = vadd.f32 0.0, %v4196
        %v4198 = vpop.f32.mrb[0].mxu0
        %4199 = vmatprep.mubr.bf16.mxu0 0
        %4200 = vmatmul.mubr.bf16.gmra.mrb[0].mxu0 %v4102
        %v4201 = vpop.f32.mrb[0].mxu0
        %v4202 = vadd.f32 0.0, %v4201
        %v4203 = vpop.f32.mrb[0].mxu0
        %v4204 = vpop.f32.mrb[0].mxu0
        %v4205 = vadd.f32 0.0, %v4204
        %v4206 = vpop.f32.mrb[0].mxu0
        %4207 = vmatprep.mubr.bf16.mxu0 0
        %4208 = vmatmul.mubr.bf16.gmra.mrb[0].mxu0 %v4105
        %v4209 = vpop.f32.mrb[0].mxu0
        %v4210 = vadd.f32 0.0, %v4209
        %v4211 = vpop.f32.mrb[0].mxu0
        %v4212 = vpop.f32.mrb[0].mxu0
        %v4213 = vadd.f32 0.0, %v4212
        %v4214 = vpop.f32.mrb[0].mxu0
        %4215 = vmatprep.mubr.bf16.mxu0 0
        %4216 = vmatmul.mubr.bf16.gmra.mrb[0].mxu0 %v4108
        %v4217 = vpop.f32.mrb[0].mxu0
        %v4218 = vadd.f32 0.0, %v4217
        %v4219 = vpop.f32.mrb[0].mxu0
        %v4220 = vpop.f32.mrb[0].mxu0
        %v4221 = vadd.f32 0.0, %v4220
        %v4222 = vpop.f32.mrb[0].mxu0
        %4223 = vmatprep.mubr.bf16.mxu0 0
        %4224 = vmatmul.mubr.bf16.gmra.mrb[0].mxu0 %v4111
        %v4225 = vpop.f32.mrb[0].mxu0
        %v4226 = vadd.f32 0.0, %v4225
        %v4227 = vpop.f32.mrb[0].mxu0
        %v4228 = vpop.f32.mrb[0].mxu0
        %v4229 = vadd.f32 0.0, %v4228
        %v4230 = vpop.f32.mrb[0].mxu0
        %4231 = vmatprep.mubr.bf16.mxu0 0
        %4232 = vmatmul.mubr.bf16.gmra.mrb[0].mxu0 %v4114
        %v4233 = vpop.f32.mrb[0].mxu0
        %v4234 = vadd.f32 0.0, %v4233
        %v4235 = vpop.f32.mrb[0].mxu0
        %v4236 = vpop.f32.mrb[0].mxu0
        %v4237 = vadd.f32 0.0, %v4236
        %v4238 = vpop.f32.mrb[0].mxu0
        %4239 = vmatprep.mubr.bf16.mxu0 0
        %4240 = vmatmul.mubr.bf16.gmra.mrb[0].mxu0 %v4117
        %v4241 = vpop.f32.mrb[0].mxu0
        %v4242 = vadd.f32 0.0, %v4241
        %v4243 = vpop.f32.mrb[0].mxu0
        %v4244 = vpop.f32.mrb[0].mxu0
        %v4245 = vadd.f32 0.0, %v4244
        %v4246 = vpop.f32.mrb[0].mxu0
        %4247 = vmatprep.mubr.bf16.mxu0 0
        %4248 = vmatmul.mubr.bf16.gmra.mrb[0].mxu0 %v4120
        %v4249 = vpop.f32.mrb[0].mxu0
        %v4250 = vadd.f32 0.0, %v4249
        %v4251 = vpop.f32.mrb[0].mxu0
        %v4252 = vpop.f32.mrb[0].mxu0
        %v4253 = vadd.f32 0.0, %v4252
        %v4254 = vpop.f32.mrb[0].mxu0
        %4255 = vmatprep.mubr.bf16.mxu0 0
        %4256 = vmatmul.mubr.bf16.gmra.mrb[0].mxu0 %v4123
        %v4257 = vpop.f32.mrb[0].mxu0
        %v4258 = vadd.f32 0.0, %v4257
        %v4259 = vpop.f32.mrb[0].mxu0
        %v4260 = vpop.f32.mrb[0].mxu0
        %v4261 = vadd.f32 0.0, %v4260
        %v4262 = vpop.f32.mrb[0].mxu0
        %4263 = vmatprep.mubr.bf16.mxu0 0
        %4264 = vmatmul.mubr.bf16.gmra.mrb[0].mxu0 %v4126
        %v4265 = vpop.f32.mrb[0].mxu0
        %v4266 = vadd.f32 0.0, %v4265
        %v4267 = vpop.f32.mrb[0].mxu0
        %v4268 = vpop.f32.mrb[0].mxu0
        %v4269 = vadd.f32 0.0, %v4268
        %v4270 = vpop.f32.mrb[0].mxu0
        %4271 = vmatprep.mubr.bf16.mxu0 0
        %4272 = vmatmul.mubr.bf16.gmra.mrb[0].mxu0 %v4129
        %v4273 = vpop.f32.mrb[0].mxu0
        %v4274 = vadd.f32 0.0, %v4273
        %v4275 = vpop.f32.mrb[0].mxu0
        %v4276 = vpop.f32.mrb[0].mxu0
        %v4277 = vadd.f32 0.0, %v4276
        %v4278 = vpop.f32.mrb[0].mxu0
        %4279 = vmatprep.mubr.bf16.mxu0 0
        %4280 = vmatmul.mubr.bf16.gmra.mrb[0].mxu0 %v4132
        %v4281 = vpop.f32.mrb[0].mxu0
        %v4282 = vadd.f32 0.0, %v4281
        %v4283 = vpop.f32.mrb[0].mxu0
        %v4284 = vpop.f32.mrb[0].mxu0
        %v4285 = vadd.f32 0.0, %v4284
        %v4286 = vpop.f32.mrb[0].mxu0
        %4287 = vmatprep.mubr.bf16.mxu0 0
        %4288 = vmatmul.mubr.bf16.gmra.mrb[0].mxu0 %v4135
        %v4289 = vpop.f32.mrb[0].mxu0
        %v4290 = vadd.f32 0.0, %v4289
        %v4291 = vpop.f32.mrb[0].mxu0
        %v4292 = vpop.f32.mrb[0].mxu0
        %v4293 = vadd.f32 0.0, %v4292
        %v4294 = vpop.f32.mrb[0].mxu0
        %4295 = vmatprep.mubr.bf16.mxu0 0
        %4296 = vmatmul.mubr.bf16.gmra.mrb[0].mxu0 %v4138
        %v4297 = vpop.f32.mrb[0].mxu0
        %v4298 = vadd.f32 0.0, %v4297
        %v4299 = vpop.f32.mrb[0].mxu0
        %v4300 = vpop.f32.mrb[0].mxu0
        %v4301 = vadd.f32 0.0, %v4300
        %v4302 = vpop.f32.mrb[0].mxu0
        %4303 = vdwg.mxu0
        %v4304 = vadd.f32 %v3559, %v4178
        %v4305 = vadd.f32 %v3560, %v4181
        %v4306 = vadd.f32 %v3561, %v4186
        %v4307 = vadd.f32 %v3562, %v4189
        %v4308 = vadd.f32 %v3563, %v4194
        %v4309 = vadd.f32 %v3564, %v4197
        %v4310 = vadd.f32 %v3565, %v4202
        %v4311 = vadd.f32 %v3566, %v4205
        %v4312 = vadd.f32 %v3567, %v4210
        %v4313 = vadd.f32 %v3568, %v4213
        %v4314 = vadd.f32 %v3569, %v4218
        %v4315 = vadd.f32 %v3570, %v4221
        %v4316 = vadd.f32 %v3571, %v4226
        %v4317 = vadd.f32 %v3572, %v4229
        %v4318 = vadd.f32 %v3573, %v4234
        %v4319 = vadd.f32 %v3574, %v4237
        %v4320 = vadd.f32 %v3575, %v4242
        %v4321 = vadd.f32 %v3576, %v4245
        %v4322 = vadd.f32 %v3577, %v4250
        %v4323 = vadd.f32 %v3578, %v4253
        %v4324 = vadd.f32 %v3579, %v4258
        %v4325 = vadd.f32 %v3580, %v4261
        %v4326 = vadd.f32 %v3581, %v4266
        %v4327 = vadd.f32 %v3582, %v4269
        %v4328 = vadd.f32 %v3583, %v4274
        %v4329 = vadd.f32 %v3584, %v4277
        %v4330 = vadd.f32 %v3585, %v4282
        %v4331 = vadd.f32 %v3586, %v4285
        %v4332 = vadd.f32 %v3587, %v4290
        %v4333 = vadd.f32 %v3588, %v4293
        %v4334 = vadd.f32 %v3589, %v4298
        %v4335 = vadd.f32 %v3590, %v4301
        %v4336 = vld [vmem:[%s809] sm:$0xe]
        %v4337 = vld [vmem:[%s809 + $0xc] sm:$0xe]
        %v4338 = vld [vmem:[%s809 + $0x18] sm:$0xe]
        %v4339 = vld [vmem:[%s809 + $0x24] sm:$0xe]
        %v4340 = vld [vmem:[%s809 + $0x30] sm:$0xe]
        %v4341 = vld [vmem:[%s809 + $0x3c] sm:$0xe]
        %v4342 = vld [vmem:[%s809 + $0x48] sm:$0xe]
        %v4343 = vld [vmem:[%s809 + $0x54] sm:$0xe]
        %v4344 = vld [vmem:[%s809 + $0x60] sm:$0xe]
        %v4345 = vld [vmem:[%s809 + $0x6c] sm:$0xe]
        %v4346 = vld [vmem:[%s809 + $0x78] sm:$0xe]
        %v4347 = vld [vmem:[%s809 + $0x84] sm:$0xe]
        %v4348 = vld [vmem:[%s809 + $0x90] sm:$0xe]
        %v4349 = vld [vmem:[%s809 + $0x9c] sm:$0xe]
        %v4350 = vld [vmem:[%s809 + $0xa8] sm:$0xe]
        %v4351 = vld [vmem:[%s809 + $0xb4] sm:$0xe]
        %v4400 = vrot.slane %v4336, 5
        %v4401 = vrot.slane %v4400, 4
        %v4402 = vrot.slane %v3592, 5
        %v4403 = vsel %vm2788, %v4401, %v4402
        %v4404 = vrot.slane %v4402, 4
        %v4405 = vrot.slane %v3593, 5
        %v4406 = vsel %vm2788, %v4404, %v4405
        %v4407 = vrot.slane %v4337, 5
        %v4408 = vrot.slane %v4407, 4
        %v4409 = vrot.slane %v3595, 5
        %v4410 = vsel %vm2788, %v4408, %v4409
        %v4411 = vrot.slane %v4409, 4
        %v4412 = vrot.slane %v3596, 5
        %v4413 = vsel %vm2788, %v4411, %v4412
        %v4414 = vrot.slane %v4338, 5
        %v4415 = vrot.slane %v4414, 4
        %v4416 = vrot.slane %v3598, 5
        %v4417 = vsel %vm2788, %v4415, %v4416
        %v4418 = vrot.slane %v4416, 4
        %v4419 = vrot.slane %v3599, 5
        %v4420 = vsel %vm2788, %v4418, %v4419
        %v4421 = vrot.slane %v4339, 5
        %v4422 = vrot.slane %v4421, 4
        %v4423 = vrot.slane %v3601, 5
        %v4424 = vsel %vm2788, %v4422, %v4423
        %v4425 = vrot.slane %v4423, 4
        %v4426 = vrot.slane %v3602, 5
        %v4427 = vsel %vm2788, %v4425, %v4426
        %v4428 = vrot.slane %v4340, 5
        %v4429 = vrot.slane %v4428, 4
        %v4430 = vrot.slane %v3604, 5
        %v4431 = vsel %vm2788, %v4429, %v4430
        %v4432 = vrot.slane %v4430, 4
        %v4433 = vrot.slane %v3605, 5
        %v4434 = vsel %vm2788, %v4432, %v4433
        %v4435 = vrot.slane %v4341, 5
        %v4436 = vrot.slane %v4435, 4
        %v4437 = vrot.slane %v3607, 5
        %v4438 = vsel %vm2788, %v4436, %v4437
        %v4439 = vrot.slane %v4437, 4
        %v4440 = vrot.slane %v3608, 5
        %v4441 = vsel %vm2788, %v4439, %v4440
        %v4442 = vrot.slane %v4342, 5
        %v4443 = vrot.slane %v4442, 4
        %v4444 = vrot.slane %v3610, 5
        %v4445 = vsel %vm2788, %v4443, %v4444
        %v4446 = vrot.slane %v4444, 4
        %v4447 = vrot.slane %v3611, 5
        %v4448 = vsel %vm2788, %v4446, %v4447
        %v4449 = vrot.slane %v4343, 5
        %v4450 = vrot.slane %v4449, 4
        %v4451 = vrot.slane %v3613, 5
        %v4452 = vsel %vm2788, %v4450, %v4451
        %v4453 = vrot.slane %v4451, 4
        %v4454 = vrot.slane %v3614, 5
        %v4455 = vsel %vm2788, %v4453, %v4454
        %v4456 = vrot.slane %v4344, 5
        %v4457 = vrot.slane %v4456, 4
        %v4458 = vrot.slane %v3616, 5
        %v4459 = vsel %vm2788, %v4457, %v4458
        %v4460 = vrot.slane %v4458, 4
        %v4461 = vrot.slane %v3617, 5
        %v4462 = vsel %vm2788, %v4460, %v4461
        %v4463 = vrot.slane %v4345, 5
        %v4464 = vrot.slane %v4463, 4
        %v4465 = vrot.slane %v3619, 5
        %v4466 = vsel %vm2788, %v4464, %v4465
        %v4467 = vrot.slane %v4465, 4
        %v4468 = vrot.slane %v3620, 5
        %v4469 = vsel %vm2788, %v4467, %v4468
        %v4470 = vrot.slane %v4346, 5
        %v4471 = vrot.slane %v4470, 4
        %v4472 = vrot.slane %v3622, 5
        %v4473 = vsel %vm2788, %v4471, %v4472
        %v4474 = vrot.slane %v4472, 4
        %v4475 = vrot.slane %v3623, 5
        %v4476 = vsel %vm2788, %v4474, %v4475
        %v4477 = vrot.slane %v4347, 5
        %v4478 = vrot.slane %v4477, 4
        %v4479 = vrot.slane %v3625, 5
        %v4480 = vsel %vm2788, %v4478, %v4479
        %v4481 = vrot.slane %v4479, 4
        %v4482 = vrot.slane %v3626, 5
        %v4483 = vsel %vm2788, %v4481, %v4482
        %v4484 = vrot.slane %v4348, 5
        %v4485 = vrot.slane %v4484, 4
        %v4486 = vrot.slane %v3628, 5
        %v4487 = vsel %vm2788, %v4485, %v4486
        %v4488 = vrot.slane %v4486, 4
        %v4489 = vrot.slane %v3629, 5
        %v4490 = vsel %vm2788, %v4488, %v4489
        %v4491 = vrot.slane %v4349, 5
        %v4492 = vrot.slane %v4491, 4
        %v4493 = vrot.slane %v3631, 5
        %v4494 = vsel %vm2788, %v4492, %v4493
        %v4495 = vrot.slane %v4493, 4
        %v4496 = vrot.slane %v3632, 5
        %v4497 = vsel %vm2788, %v4495, %v4496
        %v4498 = vrot.slane %v4350, 5
        %v4499 = vrot.slane %v4498, 4
        %v4500 = vrot.slane %v3634, 5
        %v4501 = vsel %vm2788, %v4499, %v4500
        %v4502 = vrot.slane %v4500, 4
        %v4503 = vrot.slane %v3635, 5
        %v4504 = vsel %vm2788, %v4502, %v4503
        %v4505 = vrot.slane %v4351, 5
        %v4506 = vrot.slane %v4505, 4
        %v4507 = vrot.slane %v3637, 5
        %v4508 = vsel %vm2788, %v4506, %v4507
        %v4509 = vrot.slane %v4507, 4
        %v4510 = vrot.slane %v3638, 5
        %v4511 = vsel %vm2788, %v4509, %v4510
        %s4512 = scalar_lea.vmem %s3, 100
        %v4513 = vld [vmem:[%s4512] sm:$0xf]
        %v4514 = vld [vmem:[%s4512 + $0x4] sm:$0xf]
        %v4515 = vld [vmem:[%s4512 + $0x8] sm:$0xf]
        %v4516 = vld [vmem:[%s4512 + $0xc] sm:$0xf]
        %v4517 = vld [vmem:[%s4512 + $0x10] sm:$0x3]
        %v4518 = vunpack.c.l.b16 %v4403
        %v4519 = vunpack.c.l.b16 %v4406
        %v4520 = vunpack.c.l.b16 %v4410
        %v4521 = vunpack.c.l.b16 %v4413
        %v4522 = vunpack.c.l.b16 %v4417
        %v4523 = vunpack.c.l.b16 %v4420
        %v4524 = vunpack.c.l.b16 %v4424
        %v4525 = vunpack.c.l.b16 %v4427
        %v4526 = vunpack.c.l.b16 %v4431
        %v4527 = vunpack.c.l.b16 %v4434
        %v4528 = vunpack.c.l.b16 %v4438
        %v4529 = vunpack.c.l.b16 %v4441
        %v4530 = vunpack.c.l.b16 %v4445
        %v4531 = vunpack.c.l.b16 %v4448
        %v4532 = vunpack.c.l.b16 %v4452
        %v4533 = vunpack.c.l.b16 %v4455
        %v4534 = vunpack.c.l.b16 %v4459
        %v4535 = vunpack.c.l.b16 %v4462
        %v4536 = vunpack.c.l.b16 %v4466
        %v4537 = vunpack.c.l.b16 %v4469
        %v4538 = vunpack.c.l.b16 %v4473
        %v4539 = vunpack.c.l.b16 %v4476
        %v4540 = vunpack.c.l.b16 %v4480
        %v4541 = vunpack.c.l.b16 %v4483
        %v4542 = vunpack.c.l.b16 %v4487
        %v4543 = vunpack.c.l.b16 %v4490
        %v4544 = vunpack.c.l.b16 %v4494
        %v4545 = vunpack.c.l.b16 %v4497
        %v4546 = vunpack.c.l.b16 %v4501
        %v4547 = vunpack.c.l.b16 %v4504
        %v4548 = vunpack.c.l.b16 %v4508
        %v4549 = vunpack.c.l.b16 %v4511
        %v4550 = vpack.c.b16 %v4519, %v4518
        %v4551 = vpack.c.b16 %v4521, %v4520
        %v4552 = vpack.c.b16 %v4523, %v4522
        %v4553 = vpack.c.b16 %v4525, %v4524
        %v4554 = vpack.c.b16 %v4527, %v4526
        %v4555 = vpack.c.b16 %v4529, %v4528
        %v4556 = vpack.c.b16 %v4531, %v4530
        %v4557 = vpack.c.b16 %v4533, %v4532
        %v4558 = vpack.c.b16 %v4535, %v4534
        %v4559 = vpack.c.b16 %v4537, %v4536
        %v4560 = vpack.c.b16 %v4539, %v4538
        %v4561 = vpack.c.b16 %v4541, %v4540
        %v4562 = vpack.c.b16 %v4543, %v4542
        %v4563 = vpack.c.b16 %v4545, %v4544
        %v4564 = vpack.c.b16 %v4547, %v4546
        %v4565 = vpack.c.b16 %v4549, %v4548
        %v4571 = vunpack.c.l.b16 %v4513
        %v4572 = vunpack.c.l.b16 %v4514
        %v4573 = vunpack.c.l.b16 %v4515
        %v4574 = vunpack.c.l.b16 %v4516
        %v4575 = vunpack.c.l.b16 %v4517
        %v4576 = vpack.c.b16 %v4572, %v4571
        %v4577 = vpack.c.b16 %v4574, %v4573
        %v4578 = vpack.c.b16 %v4575, %v4575
        %v4582 = vsel %vm1728, %v4550, 0
        %v4585 = vsel %vm1728, %v4551, 0
        %v4588 = vsel %vm1728, %v4552, 0
        %v4591 = vsel %vm1728, %v4553, 0
        %v4594 = vsel %vm1728, %v4554, 0
        %v4597 = vsel %vm1728, %v4555, 0
        %v4600 = vsel %vm1728, %v4556, 0
        %v4603 = vsel %vm1728, %v4557, 0
        %v4606 = vsel %vm1728, %v4558, 0
        %v4609 = vsel %vm1728, %v4559, 0
        %v4612 = vsel %vm1728, %v4560, 0
        %v4615 = vsel %vm1728, %v4561, 0
        %v4618 = vsel %vm1728, %v4562, 0
        %v4621 = vsel %vm1728, %v4563, 0
        %v4624 = vsel %vm1728, %v4564, 0
        %v4627 = vsel %vm1728, %v4565, 0
        %v4630 = vsel %vm1777, %v4578, 0
        %4632 = vmatprep.subr.bf16.mxu0 0
        %4633 = vmatpush1.bf16.msra.mxu0 %v4576
        %4634 = vmatprep.subr.bf16.mxu0 0
        %4635 = vmatpush1.bf16.msra.mxu0 %v4577
        %4636 = vmatprep.subr.bf16.mxu0 0
        %4637 = vmatpush1.bf16.msra.mxu0 %v4630
        %4638 = vmatprep.subr.bf16.mxu0 0
        %4639 = vmatpush1.bf16.msra.mxu0 0
        %4640 = vmatprep.subr.bf16.mxu0 0
        %4641 = vmatpush1.bf16.msra.mxu0 0
        %4642 = vmatprep.subr.bf16.mxu0 0
        %4643 = vmatpush1.bf16.msra.mxu0 0
        %4644 = vmatprep.subr.bf16.mxu0 0
        %4645 = vmatpush1.bf16.msra.mxu0 0
        %4646 = vmatprep.subr.bf16.mxu0 0
        %4647 = vmatpush1.bf16.msra.mxu0 0
        %4648 = vmatprep.subr.bf16.mxu0 0
        %4649 = vmatpush1.bf16.msra.mxu0 0
        %4650 = vmatprep.subr.bf16.mxu0 0
        %4651 = vmatpush1.bf16.msra.mxu0 0
        %4652 = vmatprep.subr.bf16.mxu0 0
        %4653 = vmatpush1.bf16.msra.mxu0 0
        %4654 = vmatprep.subr.bf16.mxu0 0
        %4655 = vmatpush1.bf16.msra.mxu0 0
        %4656 = vmatprep.subr.bf16.mxu0 0
        %4657 = vmatpush1.bf16.msra.mxu0 0
        %4658 = vmatprep.subr.bf16.mxu0 0
        %4659 = vmatpush1.bf16.msra.mxu0 0
        %4660 = vmatprep.subr.bf16.mxu0 0
        %4661 = vmatpush1.bf16.msra.mxu0 0
        %4662 = vmatprep.subr.bf16.mxu0 0
        %4663 = vmatpush1.bf16.msra.mxu0 0
        %4664 = vmatprep.mubr.bf16.mxu0 0
        %4665 = vmatmul.mubr.bf16.gmra.mrb[0].mxu0 %v4582
        %v4666 = vpop.f32.mrb[0].mxu0
        %v4667 = vadd.f32 0.0, %v4666
        %v4668 = vpop.f32.mrb[0].mxu0
        %v4669 = vpop.f32.mrb[0].mxu0
        %v4670 = vadd.f32 0.0, %v4669
        %v4671 = vpop.f32.mrb[0].mxu0
        %4672 = vmatprep.mubr.bf16.mxu0 0
        %4673 = vmatmul.mubr.bf16.gmra.mrb[0].mxu0 %v4585
        %v4674 = vpop.f32.mrb[0].mxu0
        %v4675 = vadd.f32 0.0, %v4674
        %v4676 = vpop.f32.mrb[0].mxu0
        %v4677 = vpop.f32.mrb[0].mxu0
        %v4678 = vadd.f32 0.0, %v4677
        %v4679 = vpop.f32.mrb[0].mxu0
        %4680 = vmatprep.mubr.bf16.mxu0 0
        %4681 = vmatmul.mubr.bf16.gmra.mrb[0].mxu0 %v4588
        %v4682 = vpop.f32.mrb[0].mxu0
        %v4683 = vadd.f32 0.0, %v4682
        %v4684 = vpop.f32.mrb[0].mxu0
        %v4685 = vpop.f32.mrb[0].mxu0
        %v4686 = vadd.f32 0.0, %v4685
        %v4687 = vpop.f32.mrb[0].mxu0
        %4688 = vmatprep.mubr.bf16.mxu0 0
        %4689 = vmatmul.mubr.bf16.gmra.mrb[0].mxu0 %v4591
        %v4690 = vpop.f32.mrb[0].mxu0
        %v4691 = vadd.f32 0.0, %v4690
        %v4692 = vpop.f32.mrb[0].mxu0
        %v4693 = vpop.f32.mrb[0].mxu0
        %v4694 = vadd.f32 0.0, %v4693
        %v4695 = vpop.f32.mrb[0].mxu0
        %4696 = vmatprep.mubr.bf16.mxu0 0
        %4697 = vmatmul.mubr.bf16.gmra.mrb[0].mxu0 %v4594
        %v4698 = vpop.f32.mrb[0].mxu0
        %v4699 = vadd.f32 0.0, %v4698
        %v4700 = vpop.f32.mrb[0].mxu0
        %v4701 = vpop.f32.mrb[0].mxu0
        %v4702 = vadd.f32 0.0, %v4701
        %v4703 = vpop.f32.mrb[0].mxu0
        %4704 = vmatprep.mubr.bf16.mxu0 0
        %4705 = vmatmul.mubr.bf16.gmra.mrb[0].mxu0 %v4597
        %v4706 = vpop.f32.mrb[0].mxu0
        %v4707 = vadd.f32 0.0, %v4706
        %v4708 = vpop.f32.mrb[0].mxu0
        %v4709 = vpop.f32.mrb[0].mxu0
        %v4710 = vadd.f32 0.0, %v4709
        %v4711 = vpop.f32.mrb[0].mxu0
        %4712 = vmatprep.mubr.bf16.mxu0 0
        %4713 = vmatmul.mubr.bf16.gmra.mrb[0].mxu0 %v4600
        %v4714 = vpop.f32.mrb[0].mxu0
        %v4715 = vadd.f32 0.0, %v4714
        %v4716 = vpop.f32.mrb[0].mxu0
        %v4717 = vpop.f32.mrb[0].mxu0
        %v4718 = vadd.f32 0.0, %v4717
        %v4719 = vpop.f32.mrb[0].mxu0
        %4720 = vmatprep.mubr.bf16.mxu0 0
        %4721 = vmatmul.mubr.bf16.gmra.mrb[0].mxu0 %v4603
        %v4722 = vpop.f32.mrb[0].mxu0
        %v4723 = vadd.f32 0.0, %v4722
        %v4724 = vpop.f32.mrb[0].mxu0
        %v4725 = vpop.f32.mrb[0].mxu0
        %v4726 = vadd.f32 0.0, %v4725
        %v4727 = vpop.f32.mrb[0].mxu0
        %4728 = vmatprep.mubr.bf16.mxu0 0
        %4729 = vmatmul.mubr.bf16.gmra.mrb[0].mxu0 %v4606
        %v4730 = vpop.f32.mrb[0].mxu0
        %v4731 = vadd.f32 0.0, %v4730
        %v4732 = vpop.f32.mrb[0].mxu0
        %v4733 = vpop.f32.mrb[0].mxu0
        %v4734 = vadd.f32 0.0, %v4733
        %v4735 = vpop.f32.mrb[0].mxu0
        %4736 = vmatprep.mubr.bf16.mxu0 0
        %4737 = vmatmul.mubr.bf16.gmra.mrb[0].mxu0 %v4609
        %v4738 = vpop.f32.mrb[0].mxu0
        %v4739 = vadd.f32 0.0, %v4738
        %v4740 = vpop.f32.mrb[0].mxu0
        %v4741 = vpop.f32.mrb[0].mxu0
        %v4742 = vadd.f32 0.0, %v4741
        %v4743 = vpop.f32.mrb[0].mxu0
        %4744 = vmatprep.mubr.bf16.mxu0 0
        %4745 = vmatmul.mubr.bf16.gmra.mrb[0].mxu0 %v4612
        %v4746 = vpop.f32.mrb[0].mxu0
        %v4747 = vadd.f32 0.0, %v4746
        %v4748 = vpop.f32.mrb[0].mxu0
        %v4749 = vpop.f32.mrb[0].mxu0
        %v4750 = vadd.f32 0.0, %v4749
        %v4751 = vpop.f32.mrb[0].mxu0
        %4752 = vmatprep.mubr.bf16.mxu0 0
        %4753 = vmatmul.mubr.bf16.gmra.mrb[0].mxu0 %v4615
        %v4754 = vpop.f32.mrb[0].mxu0
        %v4755 = vadd.f32 0.0, %v4754
        %v4756 = vpop.f32.mrb[0].mxu0
        %v4757 = vpop.f32.mrb[0].mxu0
        %v4758 = vadd.f32 0.0, %v4757
        %v4759 = vpop.f32.mrb[0].mxu0
        %4760 = vmatprep.mubr.bf16.mxu0 0
        %4761 = vmatmul.mubr.bf16.gmra.mrb[0].mxu0 %v4618
        %v4762 = vpop.f32.mrb[0].mxu0
        %v4763 = vadd.f32 0.0, %v4762
        %v4764 = vpop.f32.mrb[0].mxu0
        %v4765 = vpop.f32.mrb[0].mxu0
        %v4766 = vadd.f32 0.0, %v4765
        %v4767 = vpop.f32.mrb[0].mxu0
        %4768 = vmatprep.mubr.bf16.mxu0 0
        %4769 = vmatmul.mubr.bf16.gmra.mrb[0].mxu0 %v4621
        %v4770 = vpop.f32.mrb[0].mxu0
        %v4771 = vadd.f32 0.0, %v4770
        %v4772 = vpop.f32.mrb[0].mxu0
        %v4773 = vpop.f32.mrb[0].mxu0
        %v4774 = vadd.f32 0.0, %v4773
        %v4775 = vpop.f32.mrb[0].mxu0
        %4776 = vmatprep.mubr.bf16.mxu0 0
        %4777 = vmatmul.mubr.bf16.gmra.mrb[0].mxu0 %v4624
        %v4778 = vpop.f32.mrb[0].mxu0
        %v4779 = vadd.f32 0.0, %v4778
        %v4780 = vpop.f32.mrb[0].mxu0
        %v4781 = vpop.f32.mrb[0].mxu0
        %v4782 = vadd.f32 0.0, %v4781
        %v4783 = vpop.f32.mrb[0].mxu0
        %4784 = vmatprep.mubr.bf16.mxu0 0
        %4785 = vmatmul.mubr.bf16.gmra.mrb[0].mxu0 %v4627
        %v4786 = vpop.f32.mrb[0].mxu0
        %v4787 = vadd.f32 0.0, %v4786
        %v4788 = vpop.f32.mrb[0].mxu0
        %v4789 = vpop.f32.mrb[0].mxu0
        %v4790 = vadd.f32 0.0, %v4789
        %v4791 = vpop.f32.mrb[0].mxu0
        %4792 = vdwg.mxu0
        %v4793 = vadd.f32 %v4304, %v4667
        %v4794 = vadd.f32 %v4305, %v4670
        %v4795 = vadd.f32 %v4306, %v4675
        %v4796 = vadd.f32 %v4307, %v4678
        %v4797 = vadd.f32 %v4308, %v4683
        %v4798 = vadd.f32 %v4309, %v4686
        %v4799 = vadd.f32 %v4310, %v4691
        %v4800 = vadd.f32 %v4311, %v4694
        %v4801 = vadd.f32 %v4312, %v4699
        %v4802 = vadd.f32 %v4313, %v4702
        %v4803 = vadd.f32 %v4314, %v4707
        %v4804 = vadd.f32 %v4315, %v4710
        %v4805 = vadd.f32 %v4316, %v4715
        %v4806 = vadd.f32 %v4317, %v4718
        %v4807 = vadd.f32 %v4318, %v4723
        %v4808 = vadd.f32 %v4319, %v4726
        %v4809 = vadd.f32 %v4320, %v4731
        %v4810 = vadd.f32 %v4321, %v4734
        %v4811 = vadd.f32 %v4322, %v4739
        %v4812 = vadd.f32 %v4323, %v4742
        %v4813 = vadd.f32 %v4324, %v4747
        %v4814 = vadd.f32 %v4325, %v4750
        %v4815 = vadd.f32 %v4326, %v4755
        %v4816 = vadd.f32 %v4327, %v4758
        %v4817 = vadd.f32 %v4328, %v4763
        %v4818 = vadd.f32 %v4329, %v4766
        %v4819 = vadd.f32 %v4330, %v4771
        %v4820 = vadd.f32 %v4331, %v4774
        %v4821 = vadd.f32 %v4332, %v4779
        %v4822 = vadd.f32 %v4333, %v4782
        %v4823 = vadd.f32 %v4334, %v4787
        %v4824 = vadd.f32 %v4335, %v4790
        %s4825 = scalar_lea.vmem [#allocation2], 24
        %v4826 = vld [vmem:[%s4825] sm:$0xf]
        %v4827 = vld [vmem:[%s4825 + $0x4] sm:$0xf]
        %v4828 = vld [vmem:[%s4825 + $0xc] sm:$0xf]
        %v4829 = vld [vmem:[%s4825 + $0x10] sm:$0xf]
        %v4830 = vld [vmem:[%s4825 + $0x18] sm:$0xf]
        %v4831 = vld [vmem:[%s4825 + $0x1c] sm:$0xf]
        %v4832 = vld [vmem:[%s4825 + $0x24] sm:$0xf]
        %v4833 = vld [vmem:[%s4825 + $0x28] sm:$0xf]
        %v4834 = vld [vmem:[%s4825 + $0x30] sm:$0xf]
        %v4835 = vld [vmem:[%s4825 + $0x34] sm:$0xf]
        %v4836 = vld [vmem:[%s4825 + $0x3c] sm:$0xf]
        %v4837 = vld [vmem:[%s4825 + $0x40] sm:$0xf]
        %v4838 = vld [vmem:[%s4825 + $0x48] sm:$0xf]
        %v4839 = vld [vmem:[%s4825 + $0x4c] sm:$0xf]
        %v4840 = vld [vmem:[%s4825 + $0x54] sm:$0xf]
        %v4841 = vld [vmem:[%s4825 + $0x58] sm:$0xf]
        %v4842 = vld [vmem:[%s4825 + $0x60] sm:$0xf]
        %v4843 = vld [vmem:[%s4825 + $0x64] sm:$0xf]
        %v4844 = vld [vmem:[%s4825 + $0x6c] sm:$0xf]
        %v4845 = vld [vmem:[%s4825 + $0x70] sm:$0xf]
        %v4846 = vld [vmem:[%s4825 + $0x78] sm:$0xf]
        %v4847 = vld [vmem:[%s4825 + $0x7c] sm:$0xf]
        %v4848 = vld [vmem:[%s4825 + $0x84] sm:$0xf]
        %v4849 = vld [vmem:[%s4825 + $0x88] sm:$0xf]
        %v4850 = vld [vmem:[%s4825 + $0x90] sm:$0xf]
        %v4851 = vld [vmem:[%s4825 + $0x94] sm:$0xf]
        %v4852 = vld [vmem:[%s4825 + $0x9c] sm:$0xf]
        %v4853 = vld [vmem:[%s4825 + $0xa0] sm:$0xf]
        %v4854 = vld [vmem:[%s4825 + $0xa8] sm:$0xf]
        %v4855 = vld [vmem:[%s4825 + $0xac] sm:$0xf]
        %v4856 = vld [vmem:[%s4825 + $0xb4] sm:$0xf]
        %v4857 = vld [vmem:[%s4825 + $0xb8] sm:$0xf]
        %s4858 = scalar_lea.vmem %s3, 120
        %v4859 = vld [vmem:[%s4858] sm:$0xf]
        %v4860 = vld [vmem:[%s4858 + $0x4] sm:$0xf]
        %v4861 = vld [vmem:[%s4858 + $0x8] sm:$0xf]
        %v4862 = vld [vmem:[%s4858 + $0xc] sm:$0xf]
        %v4863 = vld [vmem:[%s4858 + $0x10] sm:$0x3]
        %v4896 = vunpack.c.l.b16 %v4826
        %v4897 = vunpack.c.l.b16 %v4827
        %v4898 = vunpack.c.l.b16 %v4828
        %v4899 = vunpack.c.l.b16 %v4829
        %v4900 = vunpack.c.l.b16 %v4830
        %v4901 = vunpack.c.l.b16 %v4831
        %v4902 = vunpack.c.l.b16 %v4832
        %v4903 = vunpack.c.l.b16 %v4833
        %v4904 = vunpack.c.l.b16 %v4834
        %v4905 = vunpack.c.l.b16 %v4835
        %v4906 = vunpack.c.l.b16 %v4836
        %v4907 = vunpack.c.l.b16 %v4837
        %v4908 = vunpack.c.l.b16 %v4838
        %v4909 = vunpack.c.l.b16 %v4839
        %v4910 = vunpack.c.l.b16 %v4840
        %v4911 = vunpack.c.l.b16 %v4841
        %v4912 = vunpack.c.l.b16 %v4842
        %v4913 = vunpack.c.l.b16 %v4843
        %v4914 = vunpack.c.l.b16 %v4844
        %v4915 = vunpack.c.l.b16 %v4845
        %v4916 = vunpack.c.l.b16 %v4846
        %v4917 = vunpack.c.l.b16 %v4847
        %v4918 = vunpack.c.l.b16 %v4848
        %v4919 = vunpack.c.l.b16 %v4849
        %v4920 = vunpack.c.l.b16 %v4850
        %v4921 = vunpack.c.l.b16 %v4851
        %v4922 = vunpack.c.l.b16 %v4852
        %v4923 = vunpack.c.l.b16 %v4853
        %v4924 = vunpack.c.l.b16 %v4854
        %v4925 = vunpack.c.l.b16 %v4855
        %v4926 = vunpack.c.l.b16 %v4856
        %v4927 = vunpack.c.l.b16 %v4857
        %v4928 = vpack.c.b16 %v4897, %v4896
        %v4929 = vpack.c.b16 %v4899, %v4898
        %v4930 = vpack.c.b16 %v4901, %v4900
        %v4931 = vpack.c.b16 %v4903, %v4902
        %v4932 = vpack.c.b16 %v4905, %v4904
        %v4933 = vpack.c.b16 %v4907, %v4906
        %v4934 = vpack.c.b16 %v4909, %v4908
        %v4935 = vpack.c.b16 %v4911, %v4910
        %v4936 = vpack.c.b16 %v4913, %v4912
        %v4937 = vpack.c.b16 %v4915, %v4914
        %v4938 = vpack.c.b16 %v4917, %v4916
        %v4939 = vpack.c.b16 %v4919, %v4918
        %v4940 = vpack.c.b16 %v4921, %v4920
        %v4941 = vpack.c.b16 %v4923, %v4922
        %v4942 = vpack.c.b16 %v4925, %v4924
        %v4943 = vpack.c.b16 %v4927, %v4926
        %v4949 = vunpack.c.l.b16 %v4859
        %v4950 = vunpack.c.l.b16 %v4860
        %v4951 = vunpack.c.l.b16 %v4861
        %v4952 = vunpack.c.l.b16 %v4862
        %v4953 = vunpack.c.l.b16 %v4863
        %v4954 = vpack.c.b16 %v4950, %v4949
        %v4955 = vpack.c.b16 %v4952, %v4951
        %v4956 = vpack.c.b16 %v4953, %v4953
        %v4960 = vsel %vm1728, %v4928, 0
        %v4963 = vsel %vm1728, %v4929, 0
        %v4966 = vsel %vm1728, %v4930, 0
        %v4969 = vsel %vm1728, %v4931, 0
        %v4972 = vsel %vm1728, %v4932, 0
        %v4975 = vsel %vm1728, %v4933, 0
        %v4978 = vsel %vm1728, %v4934, 0
        %v4981 = vsel %vm1728, %v4935, 0
        %v4984 = vsel %vm1728, %v4936, 0
        %v4987 = vsel %vm1728, %v4937, 0
        %v4990 = vsel %vm1728, %v4938, 0
        %v4993 = vsel %vm1728, %v4939, 0
        %v4996 = vsel %vm1728, %v4940, 0
        %v4999 = vsel %vm1728, %v4941, 0
        %v5002 = vsel %vm1728, %v4942, 0
        %v5005 = vsel %vm1728, %v4943, 0
        %v5008 = vsel %vm1777, %v4956, 0
        %5010 = vmatprep.subr.bf16.mxu0 0
        %5011 = vmatpush1.bf16.msra.mxu0 %v4954
        %5012 = vmatprep.subr.bf16.mxu0 0
        %5013 = vmatpush1.bf16.msra.mxu0 %v4955
        %5014 = vmatprep.subr.bf16.mxu0 0
        %5015 = vmatpush1.bf16.msra.mxu0 %v5008
        %5016 = vmatprep.subr.bf16.mxu0 0
        %5017 = vmatpush1.bf16.msra.mxu0 0
        %5018 = vmatprep.subr.bf16.mxu0 0
        %5019 = vmatpush1.bf16.msra.mxu0 0
        %5020 = vmatprep.subr.bf16.mxu0 0
        %5021 = vmatpush1.bf16.msra.mxu0 0
        %5022 = vmatprep.subr.bf16.mxu0 0
        %5023 = vmatpush1.bf16.msra.mxu0 0
        %5024 = vmatprep.subr.bf16.mxu0 0
        %5025 = vmatpush1.bf16.msra.mxu0 0
        %5026 = vmatprep.subr.bf16.mxu0 0
        %5027 = vmatpush1.bf16.msra.mxu0 0
        %5028 = vmatprep.subr.bf16.mxu0 0
        %5029 = vmatpush1.bf16.msra.mxu0 0
        %5030 = vmatprep.subr.bf16.mxu0 0
        %5031 = vmatpush1.bf16.msra.mxu0 0
        %5032 = vmatprep.subr.bf16.mxu0 0
        %5033 = vmatpush1.bf16.msra.mxu0 0
        %5034 = vmatprep.subr.bf16.mxu0 0
        %5035 = vmatpush1.bf16.msra.mxu0 0
        %5036 = vmatprep.subr.bf16.mxu0 0
        %5037 = vmatpush1.bf16.msra.mxu0 0
        %5038 = vmatprep.subr.bf16.mxu0 0
        %5039 = vmatpush1.bf16.msra.mxu0 0
        %5040 = vmatprep.subr.bf16.mxu0 0
        %5041 = vmatpush1.bf16.msra.mxu0 0
        %5042 = vmatprep.mubr.bf16.mxu0 0
        %5043 = vmatmul.mubr.bf16.gmra.mrb[0].mxu0 %v4960
        %v5044 = vpop.f32.mrb[0].mxu0
        %v5045 = vadd.f32 0.0, %v5044
        %v5046 = vpop.f32.mrb[0].mxu0
        %v5047 = vpop.f32.mrb[0].mxu0
        %v5048 = vadd.f32 0.0, %v5047
        %v5049 = vpop.f32.mrb[0].mxu0
        %5050 = vmatprep.mubr.bf16.mxu0 0
        %5051 = vmatmul.mubr.bf16.gmra.mrb[0].mxu0 %v4963
        %v5052 = vpop.f32.mrb[0].mxu0
        %v5053 = vadd.f32 0.0, %v5052
        %v5054 = vpop.f32.mrb[0].mxu0
        %v5055 = vpop.f32.mrb[0].mxu0
        %v5056 = vadd.f32 0.0, %v5055
        %v5057 = vpop.f32.mrb[0].mxu0
        %5058 = vmatprep.mubr.bf16.mxu0 0
        %5059 = vmatmul.mubr.bf16.gmra.mrb[0].mxu0 %v4966
        %v5060 = vpop.f32.mrb[0].mxu0
        %v5061 = vadd.f32 0.0, %v5060
        %v5062 = vpop.f32.mrb[0].mxu0
        %v5063 = vpop.f32.mrb[0].mxu0
        %v5064 = vadd.f32 0.0, %v5063
        %v5065 = vpop.f32.mrb[0].mxu0
        %5066 = vmatprep.mubr.bf16.mxu0 0
        %5067 = vmatmul.mubr.bf16.gmra.mrb[0].mxu0 %v4969
        %v5068 = vpop.f32.mrb[0].mxu0
        %v5069 = vadd.f32 0.0, %v5068
        %v5070 = vpop.f32.mrb[0].mxu0
        %v5071 = vpop.f32.mrb[0].mxu0
        %v5072 = vadd.f32 0.0, %v5071
        %v5073 = vpop.f32.mrb[0].mxu0
        %5074 = vmatprep.mubr.bf16.mxu0 0
        %5075 = vmatmul.mubr.bf16.gmra.mrb[0].mxu0 %v4972
        %v5076 = vpop.f32.mrb[0].mxu0
        %v5077 = vadd.f32 0.0, %v5076
        %v5078 = vpop.f32.mrb[0].mxu0
        %v5079 = vpop.f32.mrb[0].mxu0
        %v5080 = vadd.f32 0.0, %v5079
        %v5081 = vpop.f32.mrb[0].mxu0
        %5082 = vmatprep.mubr.bf16.mxu0 0
        %5083 = vmatmul.mubr.bf16.gmra.mrb[0].mxu0 %v4975
        %v5084 = vpop.f32.mrb[0].mxu0
        %v5085 = vadd.f32 0.0, %v5084
        %v5086 = vpop.f32.mrb[0].mxu0
        %v5087 = vpop.f32.mrb[0].mxu0
        %v5088 = vadd.f32 0.0, %v5087
        %v5089 = vpop.f32.mrb[0].mxu0
        %5090 = vmatprep.mubr.bf16.mxu0 0
        %5091 = vmatmul.mubr.bf16.gmra.mrb[0].mxu0 %v4978
        %v5092 = vpop.f32.mrb[0].mxu0
        %v5093 = vadd.f32 0.0, %v5092
        %v5094 = vpop.f32.mrb[0].mxu0
        %v5095 = vpop.f32.mrb[0].mxu0
        %v5096 = vadd.f32 0.0, %v5095
        %v5097 = vpop.f32.mrb[0].mxu0
        %5098 = vmatprep.mubr.bf16.mxu0 0
        %5099 = vmatmul.mubr.bf16.gmra.mrb[0].mxu0 %v4981
        %v5100 = vpop.f32.mrb[0].mxu0
        %v5101 = vadd.f32 0.0, %v5100
        %v5102 = vpop.f32.mrb[0].mxu0
        %v5103 = vpop.f32.mrb[0].mxu0
        %v5104 = vadd.f32 0.0, %v5103
        %v5105 = vpop.f32.mrb[0].mxu0
        %5106 = vmatprep.mubr.bf16.mxu0 0
        %5107 = vmatmul.mubr.bf16.gmra.mrb[0].mxu0 %v4984
        %v5108 = vpop.f32.mrb[0].mxu0
        %v5109 = vadd.f32 0.0, %v5108
        %v5110 = vpop.f32.mrb[0].mxu0
        %v5111 = vpop.f32.mrb[0].mxu0
        %v5112 = vadd.f32 0.0, %v5111
        %v5113 = vpop.f32.mrb[0].mxu0
        %5114 = vmatprep.mubr.bf16.mxu0 0
        %5115 = vmatmul.mubr.bf16.gmra.mrb[0].mxu0 %v4987
        %v5116 = vpop.f32.mrb[0].mxu0
        %v5117 = vadd.f32 0.0, %v5116
        %v5118 = vpop.f32.mrb[0].mxu0
        %v5119 = vpop.f32.mrb[0].mxu0
        %v5120 = vadd.f32 0.0, %v5119
        %v5121 = vpop.f32.mrb[0].mxu0
        %5122 = vmatprep.mubr.bf16.mxu0 0
        %5123 = vmatmul.mubr.bf16.gmra.mrb[0].mxu0 %v4990
        %v5124 = vpop.f32.mrb[0].mxu0
        %v5125 = vadd.f32 0.0, %v5124
        %v5126 = vpop.f32.mrb[0].mxu0
        %v5127 = vpop.f32.mrb[0].mxu0
        %v5128 = vadd.f32 0.0, %v5127
        %v5129 = vpop.f32.mrb[0].mxu0
        %5130 = vmatprep.mubr.bf16.mxu0 0
        %5131 = vmatmul.mubr.bf16.gmra.mrb[0].mxu0 %v4993
        %v5132 = vpop.f32.mrb[0].mxu0
        %v5133 = vadd.f32 0.0, %v5132
        %v5134 = vpop.f32.mrb[0].mxu0
        %v5135 = vpop.f32.mrb[0].mxu0
        %v5136 = vadd.f32 0.0, %v5135
        %v5137 = vpop.f32.mrb[0].mxu0
        %5138 = vmatprep.mubr.bf16.mxu0 0
        %5139 = vmatmul.mubr.bf16.gmra.mrb[0].mxu0 %v4996
        %v5140 = vpop.f32.mrb[0].mxu0
        %v5141 = vadd.f32 0.0, %v5140
        %v5142 = vpop.f32.mrb[0].mxu0
        %v5143 = vpop.f32.mrb[0].mxu0
        %v5144 = vadd.f32 0.0, %v5143
        %v5145 = vpop.f32.mrb[0].mxu0
        %5146 = vmatprep.mubr.bf16.mxu0 0
        %5147 = vmatmul.mubr.bf16.gmra.mrb[0].mxu0 %v4999
        %v5148 = vpop.f32.mrb[0].mxu0
        %v5149 = vadd.f32 0.0, %v5148
        %v5150 = vpop.f32.mrb[0].mxu0
        %v5151 = vpop.f32.mrb[0].mxu0
        %v5152 = vadd.f32 0.0, %v5151
        %v5153 = vpop.f32.mrb[0].mxu0
        %5154 = vmatprep.mubr.bf16.mxu0 0
        %5155 = vmatmul.mubr.bf16.gmra.mrb[0].mxu0 %v5002
        %v5156 = vpop.f32.mrb[0].mxu0
        %v5157 = vadd.f32 0.0, %v5156
        %v5158 = vpop.f32.mrb[0].mxu0
        %v5159 = vpop.f32.mrb[0].mxu0
        %v5160 = vadd.f32 0.0, %v5159
        %v5161 = vpop.f32.mrb[0].mxu0
        %5162 = vmatprep.mubr.bf16.mxu0 0
        %5163 = vmatmul.mubr.bf16.gmra.mrb[0].mxu0 %v5005
        %v5164 = vpop.f32.mrb[0].mxu0
        %v5165 = vadd.f32 0.0, %v5164
        %v5166 = vpop.f32.mrb[0].mxu0
        %v5167 = vpop.f32.mrb[0].mxu0
        %v5168 = vadd.f32 0.0, %v5167
        %v5169 = vpop.f32.mrb[0].mxu0
        %5170 = vdwg.mxu0
        %v5171 = vadd.f32 %v4793, %v5045
        %v5172 = vadd.f32 %v4794, %v5048
        %v5173 = vadd.f32 %v4795, %v5053
        %v5174 = vadd.f32 %v4796, %v5056
        %v5175 = vadd.f32 %v4797, %v5061
        %v5176 = vadd.f32 %v4798, %v5064
        %v5177 = vadd.f32 %v4799, %v5069
        %v5178 = vadd.f32 %v4800, %v5072
        %v5179 = vadd.f32 %v4801, %v5077
        %v5180 = vadd.f32 %v4802, %v5080
        %v5181 = vadd.f32 %v4803, %v5085
        %v5182 = vadd.f32 %v4804, %v5088
        %v5183 = vadd.f32 %v4805, %v5093
        %v5184 = vadd.f32 %v4806, %v5096
        %v5185 = vadd.f32 %v4807, %v5101
        %v5186 = vadd.f32 %v4808, %v5104
        %v5187 = vadd.f32 %v4809, %v5109
        %v5188 = vadd.f32 %v4810, %v5112
        %v5189 = vadd.f32 %v4811, %v5117
        %v5190 = vadd.f32 %v4812, %v5120
        %v5191 = vadd.f32 %v4813, %v5125
        %v5192 = vadd.f32 %v4814, %v5128
        %v5193 = vadd.f32 %v4815, %v5133
        %v5194 = vadd.f32 %v4816, %v5136
        %v5195 = vadd.f32 %v4817, %v5141
        %v5196 = vadd.f32 %v4818, %v5144
        %v5197 = vadd.f32 %v4819, %v5149
        %v5198 = vadd.f32 %v4820, %v5152
        %v5199 = vadd.f32 %v4821, %v5157
        %v5200 = vadd.f32 %v4822, %v5160
        %v5201 = vadd.f32 %v4823, %v5165
        %v5202 = vadd.f32 %v4824, %v5168
        %v5203 = vld [vmem:[%s4825] sm:$0xf]
        %v5204 = vld [vmem:[%s4825 + $0x4] sm:$0xf]
        %v5205 = vld [vmem:[%s4825 + $0x8] sm:$0x1]
        %v5206 = vld [vmem:[%s4825 + $0xc] sm:$0xf]
        %v5207 = vld [vmem:[%s4825 + $0x10] sm:$0xf]
        %v5208 = vld [vmem:[%s4825 + $0x14] sm:$0x1]
        %v5209 = vld [vmem:[%s4825 + $0x18] sm:$0xf]
        %v5210 = vld [vmem:[%s4825 + $0x1c] sm:$0xf]
        %v5211 = vld [vmem:[%s4825 + $0x20] sm:$0x1]
        %v5212 = vld [vmem:[%s4825 + $0x24] sm:$0xf]
        %v5213 = vld [vmem:[%s4825 + $0x28] sm:$0xf]
        %v5214 = vld [vmem:[%s4825 + $0x2c] sm:$0x1]
        %v5215 = vld [vmem:[%s4825 + $0x30] sm:$0xf]
        %v5216 = vld [vmem:[%s4825 + $0x34] sm:$0xf]
        %v5217 = vld [vmem:[%s4825 + $0x38] sm:$0x1]
        %v5218 = vld [vmem:[%s4825 + $0x3c] sm:$0xf]
        %v5219 = vld [vmem:[%s4825 + $0x40] sm:$0xf]
        %v5220 = vld [vmem:[%s4825 + $0x44] sm:$0x1]
        %v5221 = vld [vmem:[%s4825 + $0x48] sm:$0xf]
        %v5222 = vld [vmem:[%s4825 + $0x4c] sm:$0xf]
        %v5223 = vld [vmem:[%s4825 + $0x50] sm:$0x1]
        %v5224 = vld [vmem:[%s4825 + $0x54] sm:$0xf]
        %v5225 = vld [vmem:[%s4825 + $0x58] sm:$0xf]
        %v5226 = vld [vmem:[%s4825 + $0x5c] sm:$0x1]
        %v5227 = vld [vmem:[%s4825 + $0x60] sm:$0xf]
        %v5228 = vld [vmem:[%s4825 + $0x64] sm:$0xf]
        %v5229 = vld [vmem:[%s4825 + $0x68] sm:$0x1]
        %v5230 = vld [vmem:[%s4825 + $0x6c] sm:$0xf]
        %v5231 = vld [vmem:[%s4825 + $0x70] sm:$0xf]
        %v5232 = vld [vmem:[%s4825 + $0x74] sm:$0x1]
        %v5233 = vld [vmem:[%s4825 + $0x78] sm:$0xf]
        %v5234 = vld [vmem:[%s4825 + $0x7c] sm:$0xf]
        %v5235 = vld [vmem:[%s4825 + $0x80] sm:$0x1]
        %v5236 = vld [vmem:[%s4825 + $0x84] sm:$0xf]
        %v5237 = vld [vmem:[%s4825 + $0x88] sm:$0xf]
        %v5238 = vld [vmem:[%s4825 + $0x8c] sm:$0x1]
        %v5239 = vld [vmem:[%s4825 + $0x90] sm:$0xf]
        %v5240 = vld [vmem:[%s4825 + $0x94] sm:$0xf]
        %v5241 = vld [vmem:[%s4825 + $0x98] sm:$0x1]
        %v5242 = vld [vmem:[%s4825 + $0x9c] sm:$0xf]
        %v5243 = vld [vmem:[%s4825 + $0xa0] sm:$0xf]
        %v5244 = vld [vmem:[%s4825 + $0xa4] sm:$0x1]
        %v5245 = vld [vmem:[%s4825 + $0xa8] sm:$0xf]
        %v5246 = vld [vmem:[%s4825 + $0xac] sm:$0xf]
        %v5247 = vld [vmem:[%s4825 + $0xb0] sm:$0x1]
        %v5248 = vld [vmem:[%s4825 + $0xb4] sm:$0xf]
        %v5249 = vld [vmem:[%s4825 + $0xb8] sm:$0xf]
        %v5250 = vld [vmem:[%s4825 + $0xbc] sm:$0x1]
        %v5252 = vshrl.u32 %v5203, 16
        %v5254 = vrot.slane %v5252, 4
        %v5255 = vshll.u32 %v5203, 16
        %v5257 = vrot.slane %v5255, 5
        %v5258 = vor.u32 %v5254, %v5257
        %v5259 = vrot.slane %v5258, 4
        %v5261 = vshll.u32 %v5204, 16
        %v5263 = vrot.slane %v5261, 5
        %v5264 = vsel %vm2024, %v5259, %v5263
        %v5265 = vshrl.u32 %v5204, 16
        %v5267 = vrot.slane %v5265, 4
        %v5268 = vor.u32 %v5267, %v5263
        %v5269 = vrot.slane %v5268, 4
        %v5271 = vshll.u32 %v5205, 16
        %v5273 = vrot.slane %v5271, 5
        %v5274 = vsel %vm2024, %v5269, %v5273
        %v5276 = vshrl.u32 %v5206, 16
        %v5278 = vrot.slane %v5276, 4
        %v5279 = vshll.u32 %v5206, 16
        %v5281 = vrot.slane %v5279, 5
        %v5282 = vor.u32 %v5278, %v5281
        %v5283 = vrot.slane %v5282, 4
        %v5285 = vshll.u32 %v5207, 16
        %v5287 = vrot.slane %v5285, 5
        %v5288 = vsel %vm2024, %v5283, %v5287
        %v5289 = vshrl.u32 %v5207, 16
        %v5291 = vrot.slane %v5289, 4
        %v5292 = vor.u32 %v5291, %v5287
        %v5293 = vrot.slane %v5292, 4
        %v5295 = vshll.u32 %v5208, 16
        %v5297 = vrot.slane %v5295, 5
        %v5298 = vsel %vm2024, %v5293, %v5297
        %v5300 = vshrl.u32 %v5209, 16
        %v5302 = vrot.slane %v5300, 4
        %v5303 = vshll.u32 %v5209, 16
        %v5305 = vrot.slane %v5303, 5
        %v5306 = vor.u32 %v5302, %v5305
        %v5307 = vrot.slane %v5306, 4
        %v5309 = vshll.u32 %v5210, 16
        %v5311 = vrot.slane %v5309, 5
        %v5312 = vsel %vm2024, %v5307, %v5311
        %v5313 = vshrl.u32 %v5210, 16
        %v5315 = vrot.slane %v5313, 4
        %v5316 = vor.u32 %v5315, %v5311
        %v5317 = vrot.slane %v5316, 4
        %v5319 = vshll.u32 %v5211, 16
        %v5321 = vrot.slane %v5319, 5
        %v5322 = vsel %vm2024, %v5317, %v5321
        %v5324 = vshrl.u32 %v5212, 16
        %v5326 = vrot.slane %v5324, 4
        %v5327 = vshll.u32 %v5212, 16
        %v5329 = vrot.slane %v5327, 5
        %v5330 = vor.u32 %v5326, %v5329
        %v5331 = vrot.slane %v5330, 4
        %v5333 = vshll.u32 %v5213, 16
        %v5335 = vrot.slane %v5333, 5
        %v5336 = vsel %vm2024, %v5331, %v5335
        %v5337 = vshrl.u32 %v5213, 16
        %v5339 = vrot.slane %v5337, 4
        %v5340 = vor.u32 %v5339, %v5335
        %v5341 = vrot.slane %v5340, 4
        %v5343 = vshll.u32 %v5214, 16
        %v5345 = vrot.slane %v5343, 5
        %v5346 = vsel %vm2024, %v5341, %v5345
        %v5348 = vshrl.u32 %v5215, 16
        %v5350 = vrot.slane %v5348, 4
        %v5351 = vshll.u32 %v5215, 16
        %v5353 = vrot.slane %v5351, 5
        %v5354 = vor.u32 %v5350, %v5353
        %v5355 = vrot.slane %v5354, 4
        %v5357 = vshll.u32 %v5216, 16
        %v5359 = vrot.slane %v5357, 5
        %v5360 = vsel %vm2024, %v5355, %v5359
        %v5361 = vshrl.u32 %v5216, 16
        %v5363 = vrot.slane %v5361, 4
        %v5364 = vor.u32 %v5363, %v5359
        %v5365 = vrot.slane %v5364, 4
        %v5367 = vshll.u32 %v5217, 16
        %v5369 = vrot.slane %v5367, 5
        %v5370 = vsel %vm2024, %v5365, %v5369
        %v5372 = vshrl.u32 %v5218, 16
        %v5374 = vrot.slane %v5372, 4
        %v5375 = vshll.u32 %v5218, 16
        %v5377 = vrot.slane %v5375, 5
        %v5378 = vor.u32 %v5374, %v5377
        %v5379 = vrot.slane %v5378, 4
        %v5381 = vshll.u32 %v5219, 16
        %v5383 = vrot.slane %v5381, 5
        %v5384 = vsel %vm2024, %v5379, %v5383
        %v5385 = vshrl.u32 %v5219, 16
        %v5387 = vrot.slane %v5385, 4
        %v5388 = vor.u32 %v5387, %v5383
        %v5389 = vrot.slane %v5388, 4
        %v5391 = vshll.u32 %v5220, 16
        %v5393 = vrot.slane %v5391, 5
        %v5394 = vsel %vm2024, %v5389, %v5393
        %v5396 = vshrl.u32 %v5221, 16
        %v5398 = vrot.slane %v5396, 4
        %v5399 = vshll.u32 %v5221, 16
        %v5401 = vrot.slane %v5399, 5
        %v5402 = vor.u32 %v5398, %v5401
        %v5403 = vrot.slane %v5402, 4
        %v5405 = vshll.u32 %v5222, 16
        %v5407 = vrot.slane %v5405, 5
        %v5408 = vsel %vm2024, %v5403, %v5407
        %v5409 = vshrl.u32 %v5222, 16
        %v5411 = vrot.slane %v5409, 4
        %v5412 = vor.u32 %v5411, %v5407
        %v5413 = vrot.slane %v5412, 4
        %v5415 = vshll.u32 %v5223, 16
        %v5417 = vrot.slane %v5415, 5
        %v5418 = vsel %vm2024, %v5413, %v5417
        %v5420 = vshrl.u32 %v5224, 16
        %v5422 = vrot.slane %v5420, 4
        %v5423 = vshll.u32 %v5224, 16
        %v5425 = vrot.slane %v5423, 5
        %v5426 = vor.u32 %v5422, %v5425
        %v5427 = vrot.slane %v5426, 4
        %v5429 = vshll.u32 %v5225, 16
        %v5431 = vrot.slane %v5429, 5
        %v5432 = vsel %vm2024, %v5427, %v5431
        %v5433 = vshrl.u32 %v5225, 16
        %v5435 = vrot.slane %v5433, 4
        %v5436 = vor.u32 %v5435, %v5431
        %v5437 = vrot.slane %v5436, 4
        %v5439 = vshll.u32 %v5226, 16
        %v5441 = vrot.slane %v5439, 5
        %v5442 = vsel %vm2024, %v5437, %v5441
        %v5444 = vshrl.u32 %v5227, 16
        %v5446 = vrot.slane %v5444, 4
        %v5447 = vshll.u32 %v5227, 16
        %v5449 = vrot.slane %v5447, 5
        %v5450 = vor.u32 %v5446, %v5449
        %v5451 = vrot.slane %v5450, 4
        %v5453 = vshll.u32 %v5228, 16
        %v5455 = vrot.slane %v5453, 5
        %v5456 = vsel %vm2024, %v5451, %v5455
        %v5457 = vshrl.u32 %v5228, 16
        %v5459 = vrot.slane %v5457, 4
        %v5460 = vor.u32 %v5459, %v5455
        %v5461 = vrot.slane %v5460, 4
        %v5463 = vshll.u32 %v5229, 16
        %v5465 = vrot.slane %v5463, 5
        %v5466 = vsel %vm2024, %v5461, %v5465
        %v5468 = vshrl.u32 %v5230, 16
        %v5470 = vrot.slane %v5468, 4
        %v5471 = vshll.u32 %v5230, 16
        %v5473 = vrot.slane %v5471, 5
        %v5474 = vor.u32 %v5470, %v5473
        %v5475 = vrot.slane %v5474, 4
        %v5477 = vshll.u32 %v5231, 16
        %v5479 = vrot.slane %v5477, 5
        %v5480 = vsel %vm2024, %v5475, %v5479
        %v5481 = vshrl.u32 %v5231, 16
        %v5483 = vrot.slane %v5481, 4
        %v5484 = vor.u32 %v5483, %v5479
        %v5485 = vrot.slane %v5484, 4
        %v5487 = vshll.u32 %v5232, 16
        %v5489 = vrot.slane %v5487, 5
        %v5490 = vsel %vm2024, %v5485, %v5489
        %v5492 = vshrl.u32 %v5233, 16
        %v5494 = vrot.slane %v5492, 4
        %v5495 = vshll.u32 %v5233, 16
        %v5497 = vrot.slane %v5495, 5
        %v5498 = vor.u32 %v5494, %v5497
        %v5499 = vrot.slane %v5498, 4
        %v5501 = vshll.u32 %v5234, 16
        %v5503 = vrot.slane %v5501, 5
        %v5504 = vsel %vm2024, %v5499, %v5503
        %v5505 = vshrl.u32 %v5234, 16
        %v5507 = vrot.slane %v5505, 4
        %v5508 = vor.u32 %v5507, %v5503
        %v5509 = vrot.slane %v5508, 4
        %v5511 = vshll.u32 %v5235, 16
        %v5513 = vrot.slane %v5511, 5
        %v5514 = vsel %vm2024, %v5509, %v5513
        %v5516 = vshrl.u32 %v5236, 16
        %v5518 = vrot.slane %v5516, 4
        %v5519 = vshll.u32 %v5236, 16
        %v5521 = vrot.slane %v5519, 5
        %v5522 = vor.u32 %v5518, %v5521
        %v5523 = vrot.slane %v5522, 4
        %v5525 = vshll.u32 %v5237, 16
        %v5527 = vrot.slane %v5525, 5
        %v5528 = vsel %vm2024, %v5523, %v5527
        %v5529 = vshrl.u32 %v5237, 16
        %v5531 = vrot.slane %v5529, 4
        %v5532 = vor.u32 %v5531, %v5527
        %v5533 = vrot.slane %v5532, 4
        %v5535 = vshll.u32 %v5238, 16
        %v5537 = vrot.slane %v5535, 5
        %v5538 = vsel %vm2024, %v5533, %v5537
        %v5540 = vshrl.u32 %v5239, 16
        %v5542 = vrot.slane %v5540, 4
        %v5543 = vshll.u32 %v5239, 16
        %v5545 = vrot.slane %v5543, 5
        %v5546 = vor.u32 %v5542, %v5545
        %v5547 = vrot.slane %v5546, 4
        %v5549 = vshll.u32 %v5240, 16
        %v5551 = vrot.slane %v5549, 5
        %v5552 = vsel %vm2024, %v5547, %v5551
        %v5553 = vshrl.u32 %v5240, 16
        %v5555 = vrot.slane %v5553, 4
        %v5556 = vor.u32 %v5555, %v5551
        %v5557 = vrot.slane %v5556, 4
        %v5559 = vshll.u32 %v5241, 16
        %v5561 = vrot.slane %v5559, 5
        %v5562 = vsel %vm2024, %v5557, %v5561
        %v5564 = vshrl.u32 %v5242, 16
        %v5566 = vrot.slane %v5564, 4
        %v5567 = vshll.u32 %v5242, 16
        %v5569 = vrot.slane %v5567, 5
        %v5570 = vor.u32 %v5566, %v5569
        %v5571 = vrot.slane %v5570, 4
        %v5573 = vshll.u32 %v5243, 16
        %v5575 = vrot.slane %v5573, 5
        %v5576 = vsel %vm2024, %v5571, %v5575
        %v5577 = vshrl.u32 %v5243, 16
        %v5579 = vrot.slane %v5577, 4
        %v5580 = vor.u32 %v5579, %v5575
        %v5581 = vrot.slane %v5580, 4
        %v5583 = vshll.u32 %v5244, 16
        %v5585 = vrot.slane %v5583, 5
        %v5586 = vsel %vm2024, %v5581, %v5585
        %v5588 = vshrl.u32 %v5245, 16
        %v5590 = vrot.slane %v5588, 4
        %v5591 = vshll.u32 %v5245, 16
        %v5593 = vrot.slane %v5591, 5
        %v5594 = vor.u32 %v5590, %v5593
        %v5595 = vrot.slane %v5594, 4
        %v5597 = vshll.u32 %v5246, 16
        %v5599 = vrot.slane %v5597, 5
        %v5600 = vsel %vm2024, %v5595, %v5599
        %v5601 = vshrl.u32 %v5246, 16
        %v5603 = vrot.slane %v5601, 4
        %v5604 = vor.u32 %v5603, %v5599
        %v5605 = vrot.slane %v5604, 4
        %v5607 = vshll.u32 %v5247, 16
        %v5609 = vrot.slane %v5607, 5
        %v5610 = vsel %vm2024, %v5605, %v5609
        %v5612 = vshrl.u32 %v5248, 16
        %v5614 = vrot.slane %v5612, 4
        %v5615 = vshll.u32 %v5248, 16
        %v5617 = vrot.slane %v5615, 5
        %v5618 = vor.u32 %v5614, %v5617
        %v5619 = vrot.slane %v5618, 4
        %v5621 = vshll.u32 %v5249, 16
        %v5623 = vrot.slane %v5621, 5
        %v5624 = vsel %vm2024, %v5619, %v5623
        %v5625 = vshrl.u32 %v5249, 16
        %v5627 = vrot.slane %v5625, 4
        %v5628 = vor.u32 %v5627, %v5623
        %v5629 = vrot.slane %v5628, 4
        %v5631 = vshll.u32 %v5250, 16
        %v5633 = vrot.slane %v5631, 5
        %v5634 = vsel %vm2024, %v5629, %v5633
        %s5635 = scalar_lea.vmem %s3, 140
        %v5636 = vld [vmem:[%s5635] sm:$0xf]
        %v5637 = vld [vmem:[%s5635 + $0x4] sm:$0xf]
        %v5638 = vld [vmem:[%s5635 + $0x8] sm:$0xf]
        %v5639 = vld [vmem:[%s5635 + $0xc] sm:$0xf]
        %v5640 = vld [vmem:[%s5635 + $0x10] sm:$0x3]
        %v5641 = vunpack.c.l.b16 %v5264
        %v5642 = vunpack.c.l.b16 %v5274
        %v5643 = vunpack.c.l.b16 %v5288
        %v5644 = vunpack.c.l.b16 %v5298
        %v5645 = vunpack.c.l.b16 %v5312
        %v5646 = vunpack.c.l.b16 %v5322
        %v5647 = vunpack.c.l.b16 %v5336
        %v5648 = vunpack.c.l.b16 %v5346
        %v5649 = vunpack.c.l.b16 %v5360
        %v5650 = vunpack.c.l.b16 %v5370
        %v5651 = vunpack.c.l.b16 %v5384
        %v5652 = vunpack.c.l.b16 %v5394
        %v5653 = vunpack.c.l.b16 %v5408
        %v5654 = vunpack.c.l.b16 %v5418
        %v5655 = vunpack.c.l.b16 %v5432
        %v5656 = vunpack.c.l.b16 %v5442
        %v5657 = vunpack.c.l.b16 %v5456
        %v5658 = vunpack.c.l.b16 %v5466
        %v5659 = vunpack.c.l.b16 %v5480
        %v5660 = vunpack.c.l.b16 %v5490
        %v5661 = vunpack.c.l.b16 %v5504
        %v5662 = vunpack.c.l.b16 %v5514
        %v5663 = vunpack.c.l.b16 %v5528
        %v5664 = vunpack.c.l.b16 %v5538
        %v5665 = vunpack.c.l.b16 %v5552
        %v5666 = vunpack.c.l.b16 %v5562
        %v5667 = vunpack.c.l.b16 %v5576
        %v5668 = vunpack.c.l.b16 %v5586
        %v5669 = vunpack.c.l.b16 %v5600
        %v5670 = vunpack.c.l.b16 %v5610
        %v5671 = vunpack.c.l.b16 %v5624
        %v5672 = vunpack.c.l.b16 %v5634
        %v5673 = vpack.c.b16 %v5642, %v5641
        %v5674 = vpack.c.b16 %v5644, %v5643
        %v5675 = vpack.c.b16 %v5646, %v5645
        %v5676 = vpack.c.b16 %v5648, %v5647
        %v5677 = vpack.c.b16 %v5650, %v5649
        %v5678 = vpack.c.b16 %v5652, %v5651
        %v5679 = vpack.c.b16 %v5654, %v5653
        %v5680 = vpack.c.b16 %v5656, %v5655
        %v5681 = vpack.c.b16 %v5658, %v5657
        %v5682 = vpack.c.b16 %v5660, %v5659
        %v5683 = vpack.c.b16 %v5662, %v5661
        %v5684 = vpack.c.b16 %v5664, %v5663
        %v5685 = vpack.c.b16 %v5666, %v5665
        %v5686 = vpack.c.b16 %v5668, %v5667
        %v5687 = vpack.c.b16 %v5670, %v5669
        %v5688 = vpack.c.b16 %v5672, %v5671
        %v5694 = vunpack.c.l.b16 %v5636
        %v5695 = vunpack.c.l.b16 %v5637
        %v5696 = vunpack.c.l.b16 %v5638
        %v5697 = vunpack.c.l.b16 %v5639
        %v5698 = vunpack.c.l.b16 %v5640
        %v5699 = vpack.c.b16 %v5695, %v5694
        %v5700 = vpack.c.b16 %v5697, %v5696
        %v5701 = vpack.c.b16 %v5698, %v5698
        %v5705 = vsel %vm1728, %v5673, 0
        %v5708 = vsel %vm1728, %v5674, 0
        %v5711 = vsel %vm1728, %v5675, 0
        %v5714 = vsel %vm1728, %v5676, 0
        %v5717 = vsel %vm1728, %v5677, 0
        %v5720 = vsel %vm1728, %v5678, 0
        %v5723 = vsel %vm1728, %v5679, 0
        %v5726 = vsel %vm1728, %v5680, 0
        %v5729 = vsel %vm1728, %v5681, 0
        %v5732 = vsel %vm1728, %v5682, 0
        %v5735 = vsel %vm1728, %v5683, 0
        %v5738 = vsel %vm1728, %v5684, 0
        %v5741 = vsel %vm1728, %v5685, 0
        %v5744 = vsel %vm1728, %v5686, 0
        %v5747 = vsel %vm1728, %v5687, 0
        %v5750 = vsel %vm1728, %v5688, 0
        %v5753 = vsel %vm1777, %v5701, 0
        %5755 = vmatprep.subr.bf16.mxu0 0
        %5756 = vmatpush1.bf16.msra.mxu0 %v5699
        %5757 = vmatprep.subr.bf16.mxu0 0
        %5758 = vmatpush1.bf16.msra.mxu0 %v5700
        %5759 = vmatprep.subr.bf16.mxu0 0
        %5760 = vmatpush1.bf16.msra.mxu0 %v5753
        %5761 = vmatprep.subr.bf16.mxu0 0
        %5762 = vmatpush1.bf16.msra.mxu0 0
        %5763 = vmatprep.subr.bf16.mxu0 0
        %5764 = vmatpush1.bf16.msra.mxu0 0
        %5765 = vmatprep.subr.bf16.mxu0 0
        %5766 = vmatpush1.bf16.msra.mxu0 0
        %5767 = vmatprep.subr.bf16.mxu0 0
        %5768 = vmatpush1.bf16.msra.mxu0 0
        %5769 = vmatprep.subr.bf16.mxu0 0
        %5770 = vmatpush1.bf16.msra.mxu0 0
        %5771 = vmatprep.subr.bf16.mxu0 0
        %5772 = vmatpush1.bf16.msra.mxu0 0
        %5773 = vmatprep.subr.bf16.mxu0 0
        %5774 = vmatpush1.bf16.msra.mxu0 0
        %5775 = vmatprep.subr.bf16.mxu0 0
        %5776 = vmatpush1.bf16.msra.mxu0 0
        %5777 = vmatprep.subr.bf16.mxu0 0
        %5778 = vmatpush1.bf16.msra.mxu0 0
        %5779 = vmatprep.subr.bf16.mxu0 0
        %5780 = vmatpush1.bf16.msra.mxu0 0
        %5781 = vmatprep.subr.bf16.mxu0 0
        %5782 = vmatpush1.bf16.msra.mxu0 0
        %5783 = vmatprep.subr.bf16.mxu0 0
        %5784 = vmatpush1.bf16.msra.mxu0 0
        %5785 = vmatprep.subr.bf16.mxu0 0
        %5786 = vmatpush1.bf16.msra.mxu0 0
        %5787 = vmatprep.mubr.bf16.mxu0 0
        %5788 = vmatmul.mubr.bf16.gmra.mrb[0].mxu0 %v5705
        %v5789 = vpop.f32.mrb[0].mxu0
        %v5790 = vadd.f32 0.0, %v5789
        %v5791 = vpop.f32.mrb[0].mxu0
        %v5792 = vpop.f32.mrb[0].mxu0
        %v5793 = vadd.f32 0.0, %v5792
        %v5794 = vpop.f32.mrb[0].mxu0
        %5795 = vmatprep.mubr.bf16.mxu0 0
        %5796 = vmatmul.mubr.bf16.gmra.mrb[0].mxu0 %v5708
        %v5797 = vpop.f32.mrb[0].mxu0
        %v5798 = vadd.f32 0.0, %v5797
        %v5799 = vpop.f32.mrb[0].mxu0
        %v5800 = vpop.f32.mrb[0].mxu0
        %v5801 = vadd.f32 0.0, %v5800
        %v5802 = vpop.f32.mrb[0].mxu0
        %5803 = vmatprep.mubr.bf16.mxu0 0
        %5804 = vmatmul.mubr.bf16.gmra.mrb[0].mxu0 %v5711
        %v5805 = vpop.f32.mrb[0].mxu0
        %v5806 = vadd.f32 0.0, %v5805
        %v5807 = vpop.f32.mrb[0].mxu0
        %v5808 = vpop.f32.mrb[0].mxu0
        %v5809 = vadd.f32 0.0, %v5808
        %v5810 = vpop.f32.mrb[0].mxu0
        %5811 = vmatprep.mubr.bf16.mxu0 0
        %5812 = vmatmul.mubr.bf16.gmra.mrb[0].mxu0 %v5714
        %v5813 = vpop.f32.mrb[0].mxu0
        %v5814 = vadd.f32 0.0, %v5813
        %v5815 = vpop.f32.mrb[0].mxu0
        %v5816 = vpop.f32.mrb[0].mxu0
        %v5817 = vadd.f32 0.0, %v5816
        %v5818 = vpop.f32.mrb[0].mxu0
        %5819 = vmatprep.mubr.bf16.mxu0 0
        %5820 = vmatmul.mubr.bf16.gmra.mrb[0].mxu0 %v5717
        %v5821 = vpop.f32.mrb[0].mxu0
        %v5822 = vadd.f32 0.0, %v5821
        %v5823 = vpop.f32.mrb[0].mxu0
        %v5824 = vpop.f32.mrb[0].mxu0
        %v5825 = vadd.f32 0.0, %v5824
        %v5826 = vpop.f32.mrb[0].mxu0
        %5827 = vmatprep.mubr.bf16.mxu0 0
        %5828 = vmatmul.mubr.bf16.gmra.mrb[0].mxu0 %v5720
        %v5829 = vpop.f32.mrb[0].mxu0
        %v5830 = vadd.f32 0.0, %v5829
        %v5831 = vpop.f32.mrb[0].mxu0
        %v5832 = vpop.f32.mrb[0].mxu0
        %v5833 = vadd.f32 0.0, %v5832
        %v5834 = vpop.f32.mrb[0].mxu0
        %5835 = vmatprep.mubr.bf16.mxu0 0
        %5836 = vmatmul.mubr.bf16.gmra.mrb[0].mxu0 %v5723
        %v5837 = vpop.f32.mrb[0].mxu0
        %v5838 = vadd.f32 0.0, %v5837
        %v5839 = vpop.f32.mrb[0].mxu0
        %v5840 = vpop.f32.mrb[0].mxu0
        %v5841 = vadd.f32 0.0, %v5840
        %v5842 = vpop.f32.mrb[0].mxu0
        %5843 = vmatprep.mubr.bf16.mxu0 0
        %5844 = vmatmul.mubr.bf16.gmra.mrb[0].mxu0 %v5726
        %v5845 = vpop.f32.mrb[0].mxu0
        %v5846 = vadd.f32 0.0, %v5845
        %v5847 = vpop.f32.mrb[0].mxu0
        %v5848 = vpop.f32.mrb[0].mxu0
        %v5849 = vadd.f32 0.0, %v5848
        %v5850 = vpop.f32.mrb[0].mxu0
        %5851 = vmatprep.mubr.bf16.mxu0 0
        %5852 = vmatmul.mubr.bf16.gmra.mrb[0].mxu0 %v5729
        %v5853 = vpop.f32.mrb[0].mxu0
        %v5854 = vadd.f32 0.0, %v5853
        %v5855 = vpop.f32.mrb[0].mxu0
        %v5856 = vpop.f32.mrb[0].mxu0
        %v5857 = vadd.f32 0.0, %v5856
        %v5858 = vpop.f32.mrb[0].mxu0
        %5859 = vmatprep.mubr.bf16.mxu0 0
        %5860 = vmatmul.mubr.bf16.gmra.mrb[0].mxu0 %v5732
        %v5861 = vpop.f32.mrb[0].mxu0
        %v5862 = vadd.f32 0.0, %v5861
        %v5863 = vpop.f32.mrb[0].mxu0
        %v5864 = vpop.f32.mrb[0].mxu0
        %v5865 = vadd.f32 0.0, %v5864
        %v5866 = vpop.f32.mrb[0].mxu0
        %5867 = vmatprep.mubr.bf16.mxu0 0
        %5868 = vmatmul.mubr.bf16.gmra.mrb[0].mxu0 %v5735
        %v5869 = vpop.f32.mrb[0].mxu0
        %v5870 = vadd.f32 0.0, %v5869
        %v5871 = vpop.f32.mrb[0].mxu0
        %v5872 = vpop.f32.mrb[0].mxu0
        %v5873 = vadd.f32 0.0, %v5872
        %v5874 = vpop.f32.mrb[0].mxu0
        %5875 = vmatprep.mubr.bf16.mxu0 0
        %5876 = vmatmul.mubr.bf16.gmra.mrb[0].mxu0 %v5738
        %v5877 = vpop.f32.mrb[0].mxu0
        %v5878 = vadd.f32 0.0, %v5877
        %v5879 = vpop.f32.mrb[0].mxu0
        %v5880 = vpop.f32.mrb[0].mxu0
        %v5881 = vadd.f32 0.0, %v5880
        %v5882 = vpop.f32.mrb[0].mxu0
        %5883 = vmatprep.mubr.bf16.mxu0 0
        %5884 = vmatmul.mubr.bf16.gmra.mrb[0].mxu0 %v5741
        %v5885 = vpop.f32.mrb[0].mxu0
        %v5886 = vadd.f32 0.0, %v5885
        %v5887 = vpop.f32.mrb[0].mxu0
        %v5888 = vpop.f32.mrb[0].mxu0
        %v5889 = vadd.f32 0.0, %v5888
        %v5890 = vpop.f32.mrb[0].mxu0
        %5891 = vmatprep.mubr.bf16.mxu0 0
        %5892 = vmatmul.mubr.bf16.gmra.mrb[0].mxu0 %v5744
        %v5893 = vpop.f32.mrb[0].mxu0
        %v5894 = vadd.f32 0.0, %v5893
        %v5895 = vpop.f32.mrb[0].mxu0
        %v5896 = vpop.f32.mrb[0].mxu0
        %v5897 = vadd.f32 0.0, %v5896
        %v5898 = vpop.f32.mrb[0].mxu0
        %5899 = vmatprep.mubr.bf16.mxu0 0
        %5900 = vmatmul.mubr.bf16.gmra.mrb[0].mxu0 %v5747
        %v5901 = vpop.f32.mrb[0].mxu0
        %v5902 = vadd.f32 0.0, %v5901
        %v5903 = vpop.f32.mrb[0].mxu0
        %v5904 = vpop.f32.mrb[0].mxu0
        %v5905 = vadd.f32 0.0, %v5904
        %v5906 = vpop.f32.mrb[0].mxu0
        %5907 = vmatprep.mubr.bf16.mxu0 0
        %5908 = vmatmul.mubr.bf16.gmra.mrb[0].mxu0 %v5750
        %v5909 = vpop.f32.mrb[0].mxu0
        %v5910 = vadd.f32 0.0, %v5909
        %v5911 = vpop.f32.mrb[0].mxu0
        %v5912 = vpop.f32.mrb[0].mxu0
        %v5913 = vadd.f32 0.0, %v5912
        %v5914 = vpop.f32.mrb[0].mxu0
        %5915 = vdwg.mxu0
        %v5916 = vadd.f32 %v5171, %v5790
        %v5917 = vadd.f32 %v5172, %v5793
        %v5918 = vadd.f32 %v5173, %v5798
        %v5919 = vadd.f32 %v5174, %v5801
        %v5920 = vadd.f32 %v5175, %v5806
        %v5921 = vadd.f32 %v5176, %v5809
        %v5922 = vadd.f32 %v5177, %v5814
        %v5923 = vadd.f32 %v5178, %v5817
        %v5924 = vadd.f32 %v5179, %v5822
        %v5925 = vadd.f32 %v5180, %v5825
        %v5926 = vadd.f32 %v5181, %v5830
        %v5927 = vadd.f32 %v5182, %v5833
        %v5928 = vadd.f32 %v5183, %v5838
        %v5929 = vadd.f32 %v5184, %v5841
        %v5930 = vadd.f32 %v5185, %v5846
        %v5931 = vadd.f32 %v5186, %v5849
        %v5932 = vadd.f32 %v5187, %v5854
        %v5933 = vadd.f32 %v5188, %v5857
        %v5934 = vadd.f32 %v5189, %v5862
        %v5935 = vadd.f32 %v5190, %v5865
        %v5936 = vadd.f32 %v5191, %v5870
        %v5937 = vadd.f32 %v5192, %v5873
        %v5938 = vadd.f32 %v5193, %v5878
        %v5939 = vadd.f32 %v5194, %v5881
        %v5940 = vadd.f32 %v5195, %v5886
        %v5941 = vadd.f32 %v5196, %v5889
        %v5942 = vadd.f32 %v5197, %v5894
        %v5943 = vadd.f32 %v5198, %v5897
        %v5944 = vadd.f32 %v5199, %v5902
        %v5945 = vadd.f32 %v5200, %v5905
        %v5946 = vadd.f32 %v5201, %v5910
        %v5947 = vadd.f32 %v5202, %v5913
        %v5948 = vld [vmem:[%s4825] sm:$0xe]
        %v5949 = vld [vmem:[%s4825 + $0xc] sm:$0xe]
        %v5950 = vld [vmem:[%s4825 + $0x18] sm:$0xe]
        %v5951 = vld [vmem:[%s4825 + $0x24] sm:$0xe]
        %v5952 = vld [vmem:[%s4825 + $0x30] sm:$0xe]
        %v5953 = vld [vmem:[%s4825 + $0x3c] sm:$0xe]
        %v5954 = vld [vmem:[%s4825 + $0x48] sm:$0xe]
        %v5955 = vld [vmem:[%s4825 + $0x54] sm:$0xe]
        %v5956 = vld [vmem:[%s4825 + $0x60] sm:$0xe]
        %v5957 = vld [vmem:[%s4825 + $0x6c] sm:$0xe]
        %v5958 = vld [vmem:[%s4825 + $0x78] sm:$0xe]
        %v5959 = vld [vmem:[%s4825 + $0x84] sm:$0xe]
        %v5960 = vld [vmem:[%s4825 + $0x90] sm:$0xe]
        %v5961 = vld [vmem:[%s4825 + $0x9c] sm:$0xe]
        %v5962 = vld [vmem:[%s4825 + $0xa8] sm:$0xe]
        %v5963 = vld [vmem:[%s4825 + $0xb4] sm:$0xe]
        %v6012 = vrot.slane %v5948, 5
        %v6013 = vrot.slane %v6012, 4
        %v6014 = vrot.slane %v5204, 5
        %v6015 = vsel %vm2788, %v6013, %v6014
        %v6016 = vrot.slane %v6014, 4
        %v6017 = vrot.slane %v5205, 5
        %v6018 = vsel %vm2788, %v6016, %v6017
        %v6019 = vrot.slane %v5949, 5
        %v6020 = vrot.slane %v6019, 4
        %v6021 = vrot.slane %v5207, 5
        %v6022 = vsel %vm2788, %v6020, %v6021
        %v6023 = vrot.slane %v6021, 4
        %v6024 = vrot.slane %v5208, 5
        %v6025 = vsel %vm2788, %v6023, %v6024
        %v6026 = vrot.slane %v5950, 5
        %v6027 = vrot.slane %v6026, 4
        %v6028 = vrot.slane %v5210, 5
        %v6029 = vsel %vm2788, %v6027, %v6028
        %v6030 = vrot.slane %v6028, 4
        %v6031 = vrot.slane %v5211, 5
        %v6032 = vsel %vm2788, %v6030, %v6031
        %v6033 = vrot.slane %v5951, 5
        %v6034 = vrot.slane %v6033, 4
        %v6035 = vrot.slane %v5213, 5
        %v6036 = vsel %vm2788, %v6034, %v6035
        %v6037 = vrot.slane %v6035, 4
        %v6038 = vrot.slane %v5214, 5
        %v6039 = vsel %vm2788, %v6037, %v6038
        %v6040 = vrot.slane %v5952, 5
        %v6041 = vrot.slane %v6040, 4
        %v6042 = vrot.slane %v5216, 5
        %v6043 = vsel %vm2788, %v6041, %v6042
        %v6044 = vrot.slane %v6042, 4
        %v6045 = vrot.slane %v5217, 5
        %v6046 = vsel %vm2788, %v6044, %v6045
        %v6047 = vrot.slane %v5953, 5
        %v6048 = vrot.slane %v6047, 4
        %v6049 = vrot.slane %v5219, 5
        %v6050 = vsel %vm2788, %v6048, %v6049
        %v6051 = vrot.slane %v6049, 4
        %v6052 = vrot.slane %v5220, 5
        %v6053 = vsel %vm2788, %v6051, %v6052
        %v6054 = vrot.slane %v5954, 5
        %v6055 = vrot.slane %v6054, 4
        %v6056 = vrot.slane %v5222, 5
        %v6057 = vsel %vm2788, %v6055, %v6056
        %v6058 = vrot.slane %v6056, 4
        %v6059 = vrot.slane %v5223, 5
        %v6060 = vsel %vm2788, %v6058, %v6059
        %v6061 = vrot.slane %v5955, 5
        %v6062 = vrot.slane %v6061, 4
        %v6063 = vrot.slane %v5225, 5
        %v6064 = vsel %vm2788, %v6062, %v6063
        %v6065 = vrot.slane %v6063, 4
        %v6066 = vrot.slane %v5226, 5
        %v6067 = vsel %vm2788, %v6065, %v6066
        %v6068 = vrot.slane %v5956, 5
        %v6069 = vrot.slane %v6068, 4
        %v6070 = vrot.slane %v5228, 5
        %v6071 = vsel %vm2788, %v6069, %v6070
        %v6072 = vrot.slane %v6070, 4
        %v6073 = vrot.slane %v5229, 5
        %v6074 = vsel %vm2788, %v6072, %v6073
        %v6075 = vrot.slane %v5957, 5
        %v6076 = vrot.slane %v6075, 4
        %v6077 = vrot.slane %v5231, 5
        %v6078 = vsel %vm2788, %v6076, %v6077
        %v6079 = vrot.slane %v6077, 4
        %v6080 = vrot.slane %v5232, 5
        %v6081 = vsel %vm2788, %v6079, %v6080
        %v6082 = vrot.slane %v5958, 5
        %v6083 = vrot.slane %v6082, 4
        %v6084 = vrot.slane %v5234, 5
        %v6085 = vsel %vm2788, %v6083, %v6084
        %v6086 = vrot.slane %v6084, 4
        %v6087 = vrot.slane %v5235, 5
        %v6088 = vsel %vm2788, %v6086, %v6087
        %v6089 = vrot.slane %v5959, 5
        %v6090 = vrot.slane %v6089, 4
        %v6091 = vrot.slane %v5237, 5
        %v6092 = vsel %vm2788, %v6090, %v6091
        %v6093 = vrot.slane %v6091, 4
        %v6094 = vrot.slane %v5238, 5
        %v6095 = vsel %vm2788, %v6093, %v6094
        %v6096 = vrot.slane %v5960, 5
        %v6097 = vrot.slane %v6096, 4
        %v6098 = vrot.slane %v5240, 5
        %v6099 = vsel %vm2788, %v6097, %v6098
        %v6100 = vrot.slane %v6098, 4
        %v6101 = vrot.slane %v5241, 5
        %v6102 = vsel %vm2788, %v6100, %v6101
        %v6103 = vrot.slane %v5961, 5
        %v6104 = vrot.slane %v6103, 4
        %v6105 = vrot.slane %v5243, 5
        %v6106 = vsel %vm2788, %v6104, %v6105
        %v6107 = vrot.slane %v6105, 4
        %v6108 = vrot.slane %v5244, 5
        %v6109 = vsel %vm2788, %v6107, %v6108
        %v6110 = vrot.slane %v5962, 5
        %v6111 = vrot.slane %v6110, 4
        %v6112 = vrot.slane %v5246, 5
        %v6113 = vsel %vm2788, %v6111, %v6112
        %v6114 = vrot.slane %v6112, 4
        %v6115 = vrot.slane %v5247, 5
        %v6116 = vsel %vm2788, %v6114, %v6115
        %v6117 = vrot.slane %v5963, 5
        %v6118 = vrot.slane %v6117, 4
        %v6119 = vrot.slane %v5249, 5
        %v6120 = vsel %vm2788, %v6118, %v6119
        %v6121 = vrot.slane %v6119, 4
        %v6122 = vrot.slane %v5250, 5
        %v6123 = vsel %vm2788, %v6121, %v6122
        %s6124 = scalar_lea.vmem %s3, 160
        %v6125 = vld [vmem:[%s6124] sm:$0xf]
        %v6126 = vld [vmem:[%s6124 + $0x4] sm:$0xf]
        %v6127 = vld [vmem:[%s6124 + $0x8] sm:$0xf]
        %v6128 = vld [vmem:[%s6124 + $0xc] sm:$0xf]
        %v6129 = vld [vmem:[%s6124 + $0x10] sm:$0x3]
        %v6130 = vunpack.c.l.b16 %v6015
        %v6131 = vunpack.c.l.b16 %v6018
        %v6132 = vunpack.c.l.b16 %v6022
        %v6133 = vunpack.c.l.b16 %v6025
        %v6134 = vunpack.c.l.b16 %v6029
        %v6135 = vunpack.c.l.b16 %v6032
        %v6136 = vunpack.c.l.b16 %v6036
        %v6137 = vunpack.c.l.b16 %v6039
        %v6138 = vunpack.c.l.b16 %v6043
        %v6139 = vunpack.c.l.b16 %v6046
        %v6140 = vunpack.c.l.b16 %v6050
        %v6141 = vunpack.c.l.b16 %v6053
        %v6142 = vunpack.c.l.b16 %v6057
        %v6143 = vunpack.c.l.b16 %v6060
        %v6144 = vunpack.c.l.b16 %v6064
        %v6145 = vunpack.c.l.b16 %v6067
        %v6146 = vunpack.c.l.b16 %v6071
        %v6147 = vunpack.c.l.b16 %v6074
        %v6148 = vunpack.c.l.b16 %v6078
        %v6149 = vunpack.c.l.b16 %v6081
        %v6150 = vunpack.c.l.b16 %v6085
        %v6151 = vunpack.c.l.b16 %v6088
        %v6152 = vunpack.c.l.b16 %v6092
        %v6153 = vunpack.c.l.b16 %v6095
        %v6154 = vunpack.c.l.b16 %v6099
        %v6155 = vunpack.c.l.b16 %v6102
        %v6156 = vunpack.c.l.b16 %v6106
        %v6157 = vunpack.c.l.b16 %v6109
        %v6158 = vunpack.c.l.b16 %v6113
        %v6159 = vunpack.c.l.b16 %v6116
        %v6160 = vunpack.c.l.b16 %v6120
        %v6161 = vunpack.c.l.b16 %v6123
        %v6162 = vpack.c.b16 %v6131, %v6130
        %v6163 = vpack.c.b16 %v6133, %v6132
        %v6164 = vpack.c.b16 %v6135, %v6134
        %v6165 = vpack.c.b16 %v6137, %v6136
        %v6166 = vpack.c.b16 %v6139, %v6138
        %v6167 = vpack.c.b16 %v6141, %v6140
        %v6168 = vpack.c.b16 %v6143, %v6142
        %v6169 = vpack.c.b16 %v6145, %v6144
        %v6170 = vpack.c.b16 %v6147, %v6146
        %v6171 = vpack.c.b16 %v6149, %v6148
        %v6172 = vpack.c.b16 %v6151, %v6150
        %v6173 = vpack.c.b16 %v6153, %v6152
        %v6174 = vpack.c.b16 %v6155, %v6154
        %v6175 = vpack.c.b16 %v6157, %v6156
        %v6176 = vpack.c.b16 %v6159, %v6158
        %v6177 = vpack.c.b16 %v6161, %v6160
        %v6183 = vunpack.c.l.b16 %v6125
        %v6184 = vunpack.c.l.b16 %v6126
        %v6185 = vunpack.c.l.b16 %v6127
        %v6186 = vunpack.c.l.b16 %v6128
        %v6187 = vunpack.c.l.b16 %v6129
        %v6188 = vpack.c.b16 %v6184, %v6183
        %v6189 = vpack.c.b16 %v6186, %v6185
        %v6190 = vpack.c.b16 %v6187, %v6187
        %v6194 = vsel %vm1728, %v6162, 0
        %v6197 = vsel %vm1728, %v6163, 0
        %v6200 = vsel %vm1728, %v6164, 0
        %v6203 = vsel %vm1728, %v6165, 0
        %v6206 = vsel %vm1728, %v6166, 0
        %v6209 = vsel %vm1728, %v6167, 0
        %v6212 = vsel %vm1728, %v6168, 0
        %v6215 = vsel %vm1728, %v6169, 0
        %v6218 = vsel %vm1728, %v6170, 0
        %v6221 = vsel %vm1728, %v6171, 0
        %v6224 = vsel %vm1728, %v6172, 0
        %v6227 = vsel %vm1728, %v6173, 0
        %v6230 = vsel %vm1728, %v6174, 0
        %v6233 = vsel %vm1728, %v6175, 0
        %v6236 = vsel %vm1728, %v6176, 0
        %v6239 = vsel %vm1728, %v6177, 0
        %v6242 = vsel %vm1777, %v6190, 0
        %6244 = vmatprep.subr.bf16.mxu0 0
        %6245 = vmatpush1.bf16.msra.mxu0 %v6188
        %6246 = vmatprep.subr.bf16.mxu0 0
        %6247 = vmatpush1.bf16.msra.mxu0 %v6189
        %6248 = vmatprep.subr.bf16.mxu0 0
        %6249 = vmatpush1.bf16.msra.mxu0 %v6242
        %6250 = vmatprep.subr.bf16.mxu0 0
        %6251 = vmatpush1.bf16.msra.mxu0 0
        %6252 = vmatprep.subr.bf16.mxu0 0
        %6253 = vmatpush1.bf16.msra.mxu0 0
        %6254 = vmatprep.subr.bf16.mxu0 0
        %6255 = vmatpush1.bf16.msra.mxu0 0
        %6256 = vmatprep.subr.bf16.mxu0 0
        %6257 = vmatpush1.bf16.msra.mxu0 0
        %6258 = vmatprep.subr.bf16.mxu0 0
        %6259 = vmatpush1.bf16.msra.mxu0 0
        %6260 = vmatprep.subr.bf16.mxu0 0
        %6261 = vmatpush1.bf16.msra.mxu0 0
        %6262 = vmatprep.subr.bf16.mxu0 0
        %6263 = vmatpush1.bf16.msra.mxu0 0
        %6264 = vmatprep.subr.bf16.mxu0 0
        %6265 = vmatpush1.bf16.msra.mxu0 0
        %6266 = vmatprep.subr.bf16.mxu0 0
        %6267 = vmatpush1.bf16.msra.mxu0 0
        %6268 = vmatprep.subr.bf16.mxu0 0
        %6269 = vmatpush1.bf16.msra.mxu0 0
        %6270 = vmatprep.subr.bf16.mxu0 0
        %6271 = vmatpush1.bf16.msra.mxu0 0
        %6272 = vmatprep.subr.bf16.mxu0 0
        %6273 = vmatpush1.bf16.msra.mxu0 0
        %6274 = vmatprep.subr.bf16.mxu0 0
        %6275 = vmatpush1.bf16.msra.mxu0 0
        %6276 = vmatprep.mubr.bf16.mxu0 0
        %6277 = vmatmul.mubr.bf16.gmra.mrb[0].mxu0 %v6194
        %v6278 = vpop.f32.mrb[0].mxu0
        %v6279 = vadd.f32 0.0, %v6278
        %v6280 = vpop.f32.mrb[0].mxu0
        %v6281 = vpop.f32.mrb[0].mxu0
        %v6282 = vadd.f32 0.0, %v6281
        %v6283 = vpop.f32.mrb[0].mxu0
        %6284 = vmatprep.mubr.bf16.mxu0 0
        %6285 = vmatmul.mubr.bf16.gmra.mrb[0].mxu0 %v6197
        %v6286 = vpop.f32.mrb[0].mxu0
        %v6287 = vadd.f32 0.0, %v6286
        %v6288 = vpop.f32.mrb[0].mxu0
        %v6289 = vpop.f32.mrb[0].mxu0
        %v6290 = vadd.f32 0.0, %v6289
        %v6291 = vpop.f32.mrb[0].mxu0
        %6292 = vmatprep.mubr.bf16.mxu0 0
        %6293 = vmatmul.mubr.bf16.gmra.mrb[0].mxu0 %v6200
        %v6294 = vpop.f32.mrb[0].mxu0
        %v6295 = vadd.f32 0.0, %v6294
        %v6296 = vpop.f32.mrb[0].mxu0
        %v6297 = vpop.f32.mrb[0].mxu0
        %v6298 = vadd.f32 0.0, %v6297
        %v6299 = vpop.f32.mrb[0].mxu0
        %6300 = vmatprep.mubr.bf16.mxu0 0
        %6301 = vmatmul.mubr.bf16.gmra.mrb[0].mxu0 %v6203
        %v6302 = vpop.f32.mrb[0].mxu0
        %v6303 = vadd.f32 0.0, %v6302
        %v6304 = vpop.f32.mrb[0].mxu0
        %v6305 = vpop.f32.mrb[0].mxu0
        %v6306 = vadd.f32 0.0, %v6305
        %v6307 = vpop.f32.mrb[0].mxu0
        %6308 = vmatprep.mubr.bf16.mxu0 0
        %6309 = vmatmul.mubr.bf16.gmra.mrb[0].mxu0 %v6206
        %v6310 = vpop.f32.mrb[0].mxu0
        %v6311 = vadd.f32 0.0, %v6310
        %v6312 = vpop.f32.mrb[0].mxu0
        %v6313 = vpop.f32.mrb[0].mxu0
        %v6314 = vadd.f32 0.0, %v6313
        %v6315 = vpop.f32.mrb[0].mxu0
        %6316 = vmatprep.mubr.bf16.mxu0 0
        %6317 = vmatmul.mubr.bf16.gmra.mrb[0].mxu0 %v6209
        %v6318 = vpop.f32.mrb[0].mxu0
        %v6319 = vadd.f32 0.0, %v6318
        %v6320 = vpop.f32.mrb[0].mxu0
        %v6321 = vpop.f32.mrb[0].mxu0
        %v6322 = vadd.f32 0.0, %v6321
        %v6323 = vpop.f32.mrb[0].mxu0
        %6324 = vmatprep.mubr.bf16.mxu0 0
        %6325 = vmatmul.mubr.bf16.gmra.mrb[0].mxu0 %v6212
        %v6326 = vpop.f32.mrb[0].mxu0
        %v6327 = vadd.f32 0.0, %v6326
        %v6328 = vpop.f32.mrb[0].mxu0
        %v6329 = vpop.f32.mrb[0].mxu0
        %v6330 = vadd.f32 0.0, %v6329
        %v6331 = vpop.f32.mrb[0].mxu0
        %6332 = vmatprep.mubr.bf16.mxu0 0
        %6333 = vmatmul.mubr.bf16.gmra.mrb[0].mxu0 %v6215
        %v6334 = vpop.f32.mrb[0].mxu0
        %v6335 = vadd.f32 0.0, %v6334
        %v6336 = vpop.f32.mrb[0].mxu0
        %v6337 = vpop.f32.mrb[0].mxu0
        %v6338 = vadd.f32 0.0, %v6337
        %v6339 = vpop.f32.mrb[0].mxu0
        %6340 = vmatprep.mubr.bf16.mxu0 0
        %6341 = vmatmul.mubr.bf16.gmra.mrb[0].mxu0 %v6218
        %v6342 = vpop.f32.mrb[0].mxu0
        %v6343 = vadd.f32 0.0, %v6342
        %v6344 = vpop.f32.mrb[0].mxu0
        %v6345 = vpop.f32.mrb[0].mxu0
        %v6346 = vadd.f32 0.0, %v6345
        %v6347 = vpop.f32.mrb[0].mxu0
        %6348 = vmatprep.mubr.bf16.mxu0 0
        %6349 = vmatmul.mubr.bf16.gmra.mrb[0].mxu0 %v6221
        %v6350 = vpop.f32.mrb[0].mxu0
        %v6351 = vadd.f32 0.0, %v6350
        %v6352 = vpop.f32.mrb[0].mxu0
        %v6353 = vpop.f32.mrb[0].mxu0
        %v6354 = vadd.f32 0.0, %v6353
        %v6355 = vpop.f32.mrb[0].mxu0
        %6356 = vmatprep.mubr.bf16.mxu0 0
        %6357 = vmatmul.mubr.bf16.gmra.mrb[0].mxu0 %v6224
        %v6358 = vpop.f32.mrb[0].mxu0
        %v6359 = vadd.f32 0.0, %v6358
        %v6360 = vpop.f32.mrb[0].mxu0
        %v6361 = vpop.f32.mrb[0].mxu0
        %v6362 = vadd.f32 0.0, %v6361
        %v6363 = vpop.f32.mrb[0].mxu0
        %6364 = vmatprep.mubr.bf16.mxu0 0
        %6365 = vmatmul.mubr.bf16.gmra.mrb[0].mxu0 %v6227
        %v6366 = vpop.f32.mrb[0].mxu0
        %v6367 = vadd.f32 0.0, %v6366
        %v6368 = vpop.f32.mrb[0].mxu0
        %v6369 = vpop.f32.mrb[0].mxu0
        %v6370 = vadd.f32 0.0, %v6369
        %v6371 = vpop.f32.mrb[0].mxu0
        %6372 = vmatprep.mubr.bf16.mxu0 0
        %6373 = vmatmul.mubr.bf16.gmra.mrb[0].mxu0 %v6230
        %v6374 = vpop.f32.mrb[0].mxu0
        %v6375 = vadd.f32 0.0, %v6374
        %v6376 = vpop.f32.mrb[0].mxu0
        %v6377 = vpop.f32.mrb[0].mxu0
        %v6378 = vadd.f32 0.0, %v6377
        %v6379 = vpop.f32.mrb[0].mxu0
        %6380 = vmatprep.mubr.bf16.mxu0 0
        %6381 = vmatmul.mubr.bf16.gmra.mrb[0].mxu0 %v6233
        %v6382 = vpop.f32.mrb[0].mxu0
        %v6383 = vadd.f32 0.0, %v6382
        %v6384 = vpop.f32.mrb[0].mxu0
        %v6385 = vpop.f32.mrb[0].mxu0
        %v6386 = vadd.f32 0.0, %v6385
        %v6387 = vpop.f32.mrb[0].mxu0
        %6388 = vmatprep.mubr.bf16.mxu0 0
        %6389 = vmatmul.mubr.bf16.gmra.mrb[0].mxu0 %v6236
        %v6390 = vpop.f32.mrb[0].mxu0
        %v6391 = vadd.f32 0.0, %v6390
        %v6392 = vpop.f32.mrb[0].mxu0
        %v6393 = vpop.f32.mrb[0].mxu0
        %v6394 = vadd.f32 0.0, %v6393
        %v6395 = vpop.f32.mrb[0].mxu0
        %6396 = vmatprep.mubr.bf16.mxu0 0
        %6397 = vmatmul.mubr.bf16.gmra.mrb[0].mxu0 %v6239
        %v6398 = vpop.f32.mrb[0].mxu0
        %v6399 = vadd.f32 0.0, %v6398
        %v6400 = vpop.f32.mrb[0].mxu0
        %v6401 = vpop.f32.mrb[0].mxu0
        %v6402 = vadd.f32 0.0, %v6401
        %v6403 = vpop.f32.mrb[0].mxu0
        %6404 = vdwg.mxu0
        %v6405 = vadd.f32 %v5916, %v6279
        %v6406 = vadd.f32 %v5917, %v6282
        %v6407 = vadd.f32 %v5918, %v6287
        %v6408 = vadd.f32 %v5919, %v6290
        %v6409 = vadd.f32 %v5920, %v6295
        %v6410 = vadd.f32 %v5921, %v6298
        %v6411 = vadd.f32 %v5922, %v6303
        %v6412 = vadd.f32 %v5923, %v6306
        %v6413 = vadd.f32 %v5924, %v6311
        %v6414 = vadd.f32 %v5925, %v6314
        %v6415 = vadd.f32 %v5926, %v6319
        %v6416 = vadd.f32 %v5927, %v6322
        %v6417 = vadd.f32 %v5928, %v6327
        %v6418 = vadd.f32 %v5929, %v6330
        %v6419 = vadd.f32 %v5930, %v6335
        %v6420 = vadd.f32 %v5931, %v6338
        %v6421 = vadd.f32 %v5932, %v6343
        %v6422 = vadd.f32 %v5933, %v6346
        %v6423 = vadd.f32 %v5934, %v6351
        %v6424 = vadd.f32 %v5935, %v6354
        %v6425 = vadd.f32 %v5936, %v6359
        %v6426 = vadd.f32 %v5937, %v6362
        %v6427 = vadd.f32 %v5938, %v6367
        %v6428 = vadd.f32 %v5939, %v6370
        %v6429 = vadd.f32 %v5940, %v6375
        %v6430 = vadd.f32 %v5941, %v6378
        %v6431 = vadd.f32 %v5942, %v6383
        %v6432 = vadd.f32 %v5943, %v6386
        %v6433 = vadd.f32 %v5944, %v6391
        %v6434 = vadd.f32 %v5945, %v6394
        %v6435 = vadd.f32 %v5946, %v6399
        %v6436 = vadd.f32 %v5947, %v6402
        %v6437 = vxor.u32 %v6405, 2147483648
        %v6438 = vxor.u32 %v6406, 2147483648
        %v6439 = vxor.u32 %v6407, 2147483648
        %v6440 = vxor.u32 %v6408, 2147483648
        %v6441 = vxor.u32 %v6409, 2147483648
        %v6442 = vxor.u32 %v6410, 2147483648
        %v6443 = vxor.u32 %v6411, 2147483648
        %v6444 = vxor.u32 %v6412, 2147483648
        %v6445 = vxor.u32 %v6413, 2147483648
        %v6446 = vxor.u32 %v6414, 2147483648
        %v6447 = vxor.u32 %v6415, 2147483648
        %v6448 = vxor.u32 %v6416, 2147483648
        %v6449 = vxor.u32 %v6417, 2147483648
        %v6450 = vxor.u32 %v6418, 2147483648
        %v6451 = vxor.u32 %v6419, 2147483648
        %v6452 = vxor.u32 %v6420, 2147483648
        %v6453 = vxor.u32 %v6421, 2147483648
        %v6454 = vxor.u32 %v6422, 2147483648
        %v6455 = vxor.u32 %v6423, 2147483648
        %v6456 = vxor.u32 %v6424, 2147483648
        %v6457 = vxor.u32 %v6425, 2147483648
        %v6458 = vxor.u32 %v6426, 2147483648
        %v6459 = vxor.u32 %v6427, 2147483648
        %v6460 = vxor.u32 %v6428, 2147483648
        %v6461 = vxor.u32 %v6429, 2147483648
        %v6462 = vxor.u32 %v6430, 2147483648
        %v6463 = vxor.u32 %v6431, 2147483648
        %v6464 = vxor.u32 %v6432, 2147483648
        %v6465 = vxor.u32 %v6433, 2147483648
        %v6466 = vxor.u32 %v6434, 2147483648
        %v6467 = vxor.u32 %v6435, 2147483648
        %v6468 = vxor.u32 %v6436, 2147483648
        %v6469 = vmul.f32 %v6437, 1.442695
        %v6470 = vpow.pop %v6469
        %v6471 = vmul.f32 %v6438, 1.442695
        %v6472 = vpow.pop %v6471
        %v6473 = vmul.f32 %v6439, 1.442695
        %v6474 = vpow.pop %v6473
        %v6475 = vmul.f32 %v6440, 1.442695
        %v6476 = vpow.pop %v6475
        %v6477 = vmul.f32 %v6441, 1.442695
        %v6478 = vpow.pop %v6477
        %v6479 = vmul.f32 %v6442, 1.442695
        %v6480 = vpow.pop %v6479
        %v6481 = vmul.f32 %v6443, 1.442695
        %v6482 = vpow.pop %v6481
        %v6483 = vmul.f32 %v6444, 1.442695
        %v6484 = vpow.pop %v6483
        %v6485 = vmul.f32 %v6445, 1.442695
        %v6486 = vpow.pop %v6485
        %v6487 = vmul.f32 %v6446, 1.442695
        %v6488 = vpow.pop %v6487
        %v6489 = vmul.f32 %v6447, 1.442695
        %v6490 = vpow.pop %v6489
        %v6491 = vmul.f32 %v6448, 1.442695
        %v6492 = vpow.pop %v6491
        %v6493 = vmul.f32 %v6449, 1.442695
        %v6494 = vpow.pop %v6493
        %v6495 = vmul.f32 %v6450, 1.442695
        %v6496 = vpow.pop %v6495
        %v6497 = vmul.f32 %v6451, 1.442695
        %v6498 = vpow.pop %v6497
        %v6499 = vmul.f32 %v6452, 1.442695
        %v6500 = vpow.pop %v6499
        %v6501 = vmul.f32 %v6453, 1.442695
        %v6502 = vpow.pop %v6501
        %v6503 = vmul.f32 %v6454, 1.442695
        %v6504 = vpow.pop %v6503
        %v6505 = vmul.f32 %v6455, 1.442695
        %v6506 = vpow.pop %v6505
        %v6507 = vmul.f32 %v6456, 1.442695
        %v6508 = vpow.pop %v6507
        %v6509 = vmul.f32 %v6457, 1.442695
        %v6510 = vpow.pop %v6509
        %v6511 = vmul.f32 %v6458, 1.442695
        %v6512 = vpow.pop %v6511
        %v6513 = vmul.f32 %v6459, 1.442695
        %v6514 = vpow.pop %v6513
        %v6515 = vmul.f32 %v6460, 1.442695
        %v6516 = vpow.pop %v6515
        %v6517 = vmul.f32 %v6461, 1.442695
        %v6518 = vpow.pop %v6517
        %v6519 = vmul.f32 %v6462, 1.442695
        %v6520 = vpow.pop %v6519
        %v6521 = vmul.f32 %v6463, 1.442695
        %v6522 = vpow.pop %v6521
        %v6523 = vmul.f32 %v6464, 1.442695
        %v6524 = vpow.pop %v6523
        %v6525 = vmul.f32 %v6465, 1.442695
        %v6526 = vpow.pop %v6525
        %v6527 = vmul.f32 %v6466, 1.442695
        %v6528 = vpow.pop %v6527
        %v6529 = vmul.f32 %v6467, 1.442695
        %v6530 = vpow.pop %v6529
        %v6531 = vmul.f32 %v6468, 1.442695
        %v6532 = vpow.pop %v6531
        %v6533 = vadd.f32 %v6470, 1.0
        %v6534 = vadd.f32 %v6472, 1.0
        %v6535 = vadd.f32 %v6474, 1.0
        %v6536 = vadd.f32 %v6476, 1.0
        %v6537 = vadd.f32 %v6478, 1.0
        %v6538 = vadd.f32 %v6480, 1.0
        %v6539 = vadd.f32 %v6482, 1.0
        %v6540 = vadd.f32 %v6484, 1.0
        %v6541 = vadd.f32 %v6486, 1.0
        %v6542 = vadd.f32 %v6488, 1.0
        %v6543 = vadd.f32 %v6490, 1.0
        %v6544 = vadd.f32 %v6492, 1.0
        %v6545 = vadd.f32 %v6494, 1.0
        %v6546 = vadd.f32 %v6496, 1.0
        %v6547 = vadd.f32 %v6498, 1.0
        %v6548 = vadd.f32 %v6500, 1.0
        %v6549 = vadd.f32 %v6502, 1.0
        %v6550 = vadd.f32 %v6504, 1.0
        %v6551 = vadd.f32 %v6506, 1.0
        %v6552 = vadd.f32 %v6508, 1.0
        %v6553 = vadd.f32 %v6510, 1.0
        %v6554 = vadd.f32 %v6512, 1.0
        %v6555 = vadd.f32 %v6514, 1.0
        %v6556 = vadd.f32 %v6516, 1.0
        %v6557 = vadd.f32 %v6518, 1.0
        %v6558 = vadd.f32 %v6520, 1.0
        %v6559 = vadd.f32 %v6522, 1.0
        %v6560 = vadd.f32 %v6524, 1.0
        %v6561 = vadd.f32 %v6526, 1.0
        %v6562 = vadd.f32 %v6528, 1.0
        %v6563 = vadd.f32 %v6530, 1.0
        %v6564 = vadd.f32 %v6532, 1.0
        %v6565 = vrcp.pop %v6533
        %v6566 = vmul.f32 1.0, %v6565
        %v6567 = vrcp.pop %v6534
        %v6568 = vmul.f32 1.0, %v6567
        %v6569 = vrcp.pop %v6535
        %v6570 = vmul.f32 1.0, %v6569
        %v6571 = vrcp.pop %v6536
        %v6572 = vmul.f32 1.0, %v6571
        %v6573 = vrcp.pop %v6537
        %v6574 = vmul.f32 1.0, %v6573
        %v6575 = vrcp.pop %v6538
        %v6576 = vmul.f32 1.0, %v6575
        %v6577 = vrcp.pop %v6539
        %v6578 = vmul.f32 1.0, %v6577
        %v6579 = vrcp.pop %v6540
        %v6580 = vmul.f32 1.0, %v6579
        %v6581 = vrcp.pop %v6541
        %v6582 = vmul.f32 1.0, %v6581
        %v6583 = vrcp.pop %v6542
        %v6584 = vmul.f32 1.0, %v6583
        %v6585 = vrcp.pop %v6543
        %v6586 = vmul.f32 1.0, %v6585
        %v6587 = vrcp.pop %v6544
        %v6588 = vmul.f32 1.0, %v6587
        %v6589 = vrcp.pop %v6545
        %v6590 = vmul.f32 1.0, %v6589
        %v6591 = vrcp.pop %v6546
        %v6592 = vmul.f32 1.0, %v6591
        %v6593 = vrcp.pop %v6547
        %v6594 = vmul.f32 1.0, %v6593
        %v6595 = vrcp.pop %v6548
        %v6596 = vmul.f32 1.0, %v6595
        %v6597 = vrcp.pop %v6549
        %v6598 = vmul.f32 1.0, %v6597
        %v6599 = vrcp.pop %v6550
        %v6600 = vmul.f32 1.0, %v6599
        %v6601 = vrcp.pop %v6551
        %v6602 = vmul.f32 1.0, %v6601
        %v6603 = vrcp.pop %v6552
        %v6604 = vmul.f32 1.0, %v6603
        %v6605 = vrcp.pop %v6553
        %v6606 = vmul.f32 1.0, %v6605
        %v6607 = vrcp.pop %v6554
        %v6608 = vmul.f32 1.0, %v6607
        %v6609 = vrcp.pop %v6555
        %v6610 = vmul.f32 1.0, %v6609
        %v6611 = vrcp.pop %v6556
        %v6612 = vmul.f32 1.0, %v6611
        %v6613 = vrcp.pop %v6557
        %v6614 = vmul.f32 1.0, %v6613
        %v6615 = vrcp.pop %v6558
        %v6616 = vmul.f32 1.0, %v6615
        %v6617 = vrcp.pop %v6559
        %v6618 = vmul.f32 1.0, %v6617
        %v6619 = vrcp.pop %v6560
        %v6620 = vmul.f32 1.0, %v6619
        %v6621 = vrcp.pop %v6561
        %v6622 = vmul.f32 1.0, %v6621
        %v6623 = vrcp.pop %v6562
        %v6624 = vmul.f32 1.0, %v6623
        %v6625 = vrcp.pop %v6563
        %v6626 = vmul.f32 1.0, %v6625
        %v6627 = vrcp.pop %v6564
        %v6628 = vmul.f32 1.0, %v6627
        %v6629 = vtanh.pop %v6405
        %v6630 = vtanh.pop %v6406
        %v6631 = vtanh.pop %v6407
        %v6632 = vtanh.pop %v6408
        %v6633 = vtanh.pop %v6409
        %v6634 = vtanh.pop %v6410
        %v6635 = vtanh.pop %v6411
        %v6636 = vtanh.pop %v6412
        %v6637 = vtanh.pop %v6413
        %v6638 = vtanh.pop %v6414
        %v6639 = vtanh.pop %v6415
        %v6640 = vtanh.pop %v6416
        %v6641 = vtanh.pop %v6417
        %v6642 = vtanh.pop %v6418
        %v6643 = vtanh.pop %v6419
        %v6644 = vtanh.pop %v6420
        %v6645 = vtanh.pop %v6421
        %v6646 = vtanh.pop %v6422
        %v6647 = vtanh.pop %v6423
        %v6648 = vtanh.pop %v6424
        %v6649 = vtanh.pop %v6425
        %v6650 = vtanh.pop %v6426
        %v6651 = vtanh.pop %v6427
        %v6652 = vtanh.pop %v6428
        %v6653 = vtanh.pop %v6429
        %v6654 = vtanh.pop %v6430
        %v6655 = vtanh.pop %v6431
        %v6656 = vtanh.pop %v6432
        %v6657 = vtanh.pop %v6433
        %v6658 = vtanh.pop %v6434
        %v6659 = vtanh.pop %v6435
        %v6660 = vtanh.pop %v6436
        %v6661 = vld [vmem:[%s300] sm:$0xff]
        %v6662 = vld [vmem:[%s300 + $0x8] sm:$0xff]
        %v6663 = vld [vmem:[%s300 + $0x10] sm:$0xff]
        %v6664 = vld [vmem:[%s300 + $0x18] sm:$0xff]
        %v6665 = vld [vmem:[%s300 + $0x20] sm:$0xff]
        %v6666 = vld [vmem:[%s300 + $0x28] sm:$0xff]
        %v6667 = vld [vmem:[%s300 + $0x30] sm:$0xff]
        %v6668 = vld [vmem:[%s300 + $0x38] sm:$0xff]
        %v6669 = vld [vmem:[%s300 + $0x40] sm:$0xff]
        %v6670 = vld [vmem:[%s300 + $0x48] sm:$0xff]
        %v6671 = vld [vmem:[%s300 + $0x50] sm:$0xff]
        %v6672 = vld [vmem:[%s300 + $0x58] sm:$0xff]
        %v6673 = vld [vmem:[%s300 + $0x60] sm:$0xff]
        %v6674 = vld [vmem:[%s300 + $0x68] sm:$0xff]
        %v6675 = vld [vmem:[%s300 + $0x70] sm:$0xff]
        %v6676 = vld [vmem:[%s300 + $0x78] sm:$0xff]
        %v6677 = vld [vmem:[%s300 + $0x80] sm:$0xff]
        %v6678 = vld [vmem:[%s300 + $0x88] sm:$0xff]
        %v6679 = vld [vmem:[%s300 + $0x90] sm:$0xff]
        %v6680 = vld [vmem:[%s300 + $0x98] sm:$0xff]
        %v6681 = vld [vmem:[%s300 + $0xa0] sm:$0xff]
        %v6682 = vld [vmem:[%s300 + $0xa8] sm:$0xff]
        %v6683 = vld [vmem:[%s300 + $0xb0] sm:$0xff]
        %v6684 = vld [vmem:[%s300 + $0xb8] sm:$0xff]
        %v6685 = vld [vmem:[%s300 + $0xc0] sm:$0xff]
        %v6686 = vld [vmem:[%s300 + $0xc8] sm:$0xff]
        %v6687 = vld [vmem:[%s300 + $0xd0] sm:$0xff]
        %v6688 = vld [vmem:[%s300 + $0xd8] sm:$0xff]
        %v6689 = vld [vmem:[%s300 + $0xe0] sm:$0xff]
        %v6690 = vld [vmem:[%s300 + $0xe8] sm:$0xff]
        %v6691 = vld [vmem:[%s300 + $0xf0] sm:$0xff]
        %v6692 = vld [vmem:[%s300 + $0xf8] sm:$0xff]
        %v6693 = vmul.f32 %v6566, %v6661
        %v6694 = vmul.f32 %v6568, %v6662
        %v6695 = vmul.f32 %v6570, %v6663
        %v6696 = vmul.f32 %v6572, %v6664
        %v6697 = vmul.f32 %v6574, %v6665
        %v6698 = vmul.f32 %v6576, %v6666
        %v6699 = vmul.f32 %v6578, %v6667
        %v6700 = vmul.f32 %v6580, %v6668
        %v6701 = vmul.f32 %v6582, %v6669
        %v6702 = vmul.f32 %v6584, %v6670
        %v6703 = vmul.f32 %v6586, %v6671
        %v6704 = vmul.f32 %v6588, %v6672
        %v6705 = vmul.f32 %v6590, %v6673
        %v6706 = vmul.f32 %v6592, %v6674
        %v6707 = vmul.f32 %v6594, %v6675
        %v6708 = vmul.f32 %v6596, %v6676
        %v6709 = vmul.f32 %v6598, %v6677
        %v6710 = vmul.f32 %v6600, %v6678
        %v6711 = vmul.f32 %v6602, %v6679
        %v6712 = vmul.f32 %v6604, %v6680
        %v6713 = vmul.f32 %v6606, %v6681
        %v6714 = vmul.f32 %v6608, %v6682
        %v6715 = vmul.f32 %v6610, %v6683
        %v6716 = vmul.f32 %v6612, %v6684
        %v6717 = vmul.f32 %v6614, %v6685
        %v6718 = vmul.f32 %v6616, %v6686
        %v6719 = vmul.f32 %v6618, %v6687
        %v6720 = vmul.f32 %v6620, %v6688
        %v6721 = vmul.f32 %v6622, %v6689
        %v6722 = vmul.f32 %v6624, %v6690
        %v6723 = vmul.f32 %v6626, %v6691
        %v6724 = vmul.f32 %v6628, %v6692
        %6757 = vrot.lane.b32.xlu0 %v6629, 64
        %v6758 = vpop.permute.xlu0 %6757
        %6759 = vrot.lane.b32.xlu0 %v6630, 64
        %v6760 = vpop.permute.xlu0 %6759
        %6761 = vrot.lane.b32.xlu0 %v6631, 64
        %v6762 = vpop.permute.xlu0 %6761
        %6763 = vrot.lane.b32.xlu0 %v6632, 64
        %v6764 = vpop.permute.xlu0 %6763
        %6765 = vrot.lane.b32.xlu0 %v6633, 64
        %v6766 = vpop.permute.xlu0 %6765
        %6767 = vrot.lane.b32.xlu0 %v6634, 64
        %v6768 = vpop.permute.xlu0 %6767
        %6769 = vrot.lane.b32.xlu0 %v6635, 64
        %v6770 = vpop.permute.xlu0 %6769
        %6771 = vrot.lane.b32.xlu0 %v6636, 64
        %v6772 = vpop.permute.xlu0 %6771
        %6773 = vrot.lane.b32.xlu0 %v6637, 64
        %v6774 = vpop.permute.xlu0 %6773
        %6775 = vrot.lane.b32.xlu0 %v6638, 64
        %v6776 = vpop.permute.xlu0 %6775
        %6777 = vrot.lane.b32.xlu0 %v6639, 64
        %v6778 = vpop.permute.xlu0 %6777
        %6779 = vrot.lane.b32.xlu0 %v6640, 64
        %v6780 = vpop.permute.xlu0 %6779
        %6781 = vrot.lane.b32.xlu0 %v6641, 64
        %v6782 = vpop.permute.xlu0 %6781
        %6783 = vrot.lane.b32.xlu0 %v6642, 64
        %v6784 = vpop.permute.xlu0 %6783
        %6785 = vrot.lane.b32.xlu0 %v6643, 64
        %v6786 = vpop.permute.xlu0 %6785
        %6787 = vrot.lane.b32.xlu0 %v6644, 64
        %v6788 = vpop.permute.xlu0 %6787
        %6789 = vrot.lane.b32.xlu0 %v6645, 64
        %v6790 = vpop.permute.xlu0 %6789
        %6791 = vrot.lane.b32.xlu0 %v6646, 64
        %v6792 = vpop.permute.xlu0 %6791
        %6793 = vrot.lane.b32.xlu0 %v6647, 64
        %v6794 = vpop.permute.xlu0 %6793
        %6795 = vrot.lane.b32.xlu0 %v6648, 64
        %v6796 = vpop.permute.xlu0 %6795
        %6797 = vrot.lane.b32.xlu0 %v6649, 64
        %v6798 = vpop.permute.xlu0 %6797
        %6799 = vrot.lane.b32.xlu0 %v6650, 64
        %v6800 = vpop.permute.xlu0 %6799
        %6801 = vrot.lane.b32.xlu0 %v6651, 64
        %v6802 = vpop.permute.xlu0 %6801
        %6803 = vrot.lane.b32.xlu0 %v6652, 64
        %v6804 = vpop.permute.xlu0 %6803
        %6805 = vrot.lane.b32.xlu0 %v6653, 64
        %v6806 = vpop.permute.xlu0 %6805
        %6807 = vrot.lane.b32.xlu0 %v6654, 64
        %v6808 = vpop.permute.xlu0 %6807
        %6809 = vrot.lane.b32.xlu0 %v6655, 64
        %v6810 = vpop.permute.xlu0 %6809
        %6811 = vrot.lane.b32.xlu0 %v6656, 64
        %v6812 = vpop.permute.xlu0 %6811
        %6813 = vrot.lane.b32.xlu0 %v6657, 64
        %v6814 = vpop.permute.xlu0 %6813
        %6815 = vrot.lane.b32.xlu0 %v6658, 64
        %v6816 = vpop.permute.xlu0 %6815
        %6817 = vrot.lane.b32.xlu0 %v6659, 64
        %v6818 = vpop.permute.xlu0 %6817
        %6819 = vrot.lane.b32.xlu0 %v6660, 64
        %v6820 = vpop.permute.xlu0 %6819
        %v6853 = vmul.f32 %v6566, %v6758
        %v6854 = vmul.f32 %v6568, %v6760
        %v6855 = vmul.f32 %v6570, %v6762
        %v6856 = vmul.f32 %v6572, %v6764
        %v6857 = vmul.f32 %v6574, %v6766
        %v6858 = vmul.f32 %v6576, %v6768
        %v6859 = vmul.f32 %v6578, %v6770
        %v6860 = vmul.f32 %v6580, %v6772
        %v6861 = vmul.f32 %v6582, %v6774
        %v6862 = vmul.f32 %v6584, %v6776
        %v6863 = vmul.f32 %v6586, %v6778
        %v6864 = vmul.f32 %v6588, %v6780
        %v6865 = vmul.f32 %v6590, %v6782
        %v6866 = vmul.f32 %v6592, %v6784
        %v6867 = vmul.f32 %v6594, %v6786
        %v6868 = vmul.f32 %v6596, %v6788
        %v6869 = vmul.f32 %v6598, %v6790
        %v6870 = vmul.f32 %v6600, %v6792
        %v6871 = vmul.f32 %v6602, %v6794
        %v6872 = vmul.f32 %v6604, %v6796
        %v6873 = vmul.f32 %v6606, %v6798
        %v6874 = vmul.f32 %v6608, %v6800
        %v6875 = vmul.f32 %v6610, %v6802
        %v6876 = vmul.f32 %v6612, %v6804
        %v6877 = vmul.f32 %v6614, %v6806
        %v6878 = vmul.f32 %v6616, %v6808
        %v6879 = vmul.f32 %v6618, %v6810
        %v6880 = vmul.f32 %v6620, %v6812
        %v6881 = vmul.f32 %v6622, %v6814
        %v6882 = vmul.f32 %v6624, %v6816
        %v6883 = vmul.f32 %v6626, %v6818
        %v6884 = vmul.f32 %v6628, %v6820
        %6917 = vrot.lane.b32.xlu0 %v6853, 96
        %v6918 = vpop.permute.xlu0 %6917
        %6919 = vrot.lane.b32.xlu0 %v6854, 96
        %v6920 = vpop.permute.xlu0 %6919
        %6921 = vrot.lane.b32.xlu0 %v6855, 96
        %v6922 = vpop.permute.xlu0 %6921
        %6923 = vrot.lane.b32.xlu0 %v6856, 96
        %v6924 = vpop.permute.xlu0 %6923
        %6925 = vrot.lane.b32.xlu0 %v6857, 96
        %v6926 = vpop.permute.xlu0 %6925
        %6927 = vrot.lane.b32.xlu0 %v6858, 96
        %v6928 = vpop.permute.xlu0 %6927
        %6929 = vrot.lane.b32.xlu0 %v6859, 96
        %v6930 = vpop.permute.xlu0 %6929
        %6931 = vrot.lane.b32.xlu0 %v6860, 96
        %v6932 = vpop.permute.xlu0 %6931
        %6933 = vrot.lane.b32.xlu0 %v6861, 96
        %v6934 = vpop.permute.xlu0 %6933
        %6935 = vrot.lane.b32.xlu0 %v6862, 96
        %v6936 = vpop.permute.xlu0 %6935
        %6937 = vrot.lane.b32.xlu0 %v6863, 96
        %v6938 = vpop.permute.xlu0 %6937
        %6939 = vrot.lane.b32.xlu0 %v6864, 96
        %v6940 = vpop.permute.xlu0 %6939
        %6941 = vrot.lane.b32.xlu0 %v6865, 96
        %v6942 = vpop.permute.xlu0 %6941
        %6943 = vrot.lane.b32.xlu0 %v6866, 96
        %v6944 = vpop.permute.xlu0 %6943
        %6945 = vrot.lane.b32.xlu0 %v6867, 96
        %v6946 = vpop.permute.xlu0 %6945
        %6947 = vrot.lane.b32.xlu0 %v6868, 96
        %v6948 = vpop.permute.xlu0 %6947
        %6949 = vrot.lane.b32.xlu0 %v6869, 96
        %v6950 = vpop.permute.xlu0 %6949
        %6951 = vrot.lane.b32.xlu0 %v6870, 96
        %v6952 = vpop.permute.xlu0 %6951
        %6953 = vrot.lane.b32.xlu0 %v6871, 96
        %v6954 = vpop.permute.xlu0 %6953
        %6955 = vrot.lane.b32.xlu0 %v6872, 96
        %v6956 = vpop.permute.xlu0 %6955
        %6957 = vrot.lane.b32.xlu0 %v6873, 96
        %v6958 = vpop.permute.xlu0 %6957
        %6959 = vrot.lane.b32.xlu0 %v6874, 96
        %v6960 = vpop.permute.xlu0 %6959
        %6961 = vrot.lane.b32.xlu0 %v6875, 96
        %v6962 = vpop.permute.xlu0 %6961
        %6963 = vrot.lane.b32.xlu0 %v6876, 96
        %v6964 = vpop.permute.xlu0 %6963
        %6965 = vrot.lane.b32.xlu0 %v6877, 96
        %v6966 = vpop.permute.xlu0 %6965
        %6967 = vrot.lane.b32.xlu0 %v6878, 96
        %v6968 = vpop.permute.xlu0 %6967
        %6969 = vrot.lane.b32.xlu0 %v6879, 96
        %v6970 = vpop.permute.xlu0 %6969
        %6971 = vrot.lane.b32.xlu0 %v6880, 96
        %v6972 = vpop.permute.xlu0 %6971
        %6973 = vrot.lane.b32.xlu0 %v6881, 96
        %v6974 = vpop.permute.xlu0 %6973
        %6975 = vrot.lane.b32.xlu0 %v6882, 96
        %v6976 = vpop.permute.xlu0 %6975
        %6977 = vrot.lane.b32.xlu0 %v6883, 96
        %v6978 = vpop.permute.xlu0 %6977
        %6979 = vrot.lane.b32.xlu0 %v6884, 96
        %v6980 = vpop.permute.xlu0 %6979
        %v7013 = vadd.f32 %v6693, %v6918
        %v7014 = vadd.f32 %v6694, %v6920
        %v7015 = vadd.f32 %v6695, %v6922
        %v7016 = vadd.f32 %v6696, %v6924
        %v7017 = vadd.f32 %v6697, %v6926
        %v7018 = vadd.f32 %v6698, %v6928
        %v7019 = vadd.f32 %v6699, %v6930
        %v7020 = vadd.f32 %v6700, %v6932
        %v7021 = vadd.f32 %v6701, %v6934
        %v7022 = vadd.f32 %v6702, %v6936
        %v7023 = vadd.f32 %v6703, %v6938
        %v7024 = vadd.f32 %v6704, %v6940
        %v7025 = vadd.f32 %v6705, %v6942
        %v7026 = vadd.f32 %v6706, %v6944
        %v7027 = vadd.f32 %v6707, %v6946
        %v7028 = vadd.f32 %v6708, %v6948
        %v7029 = vadd.f32 %v6709, %v6950
        %v7030 = vadd.f32 %v6710, %v6952
        %v7031 = vadd.f32 %v6711, %v6954
        %v7032 = vadd.f32 %v6712, %v6956
        %v7033 = vadd.f32 %v6713, %v6958
        %v7034 = vadd.f32 %v6714, %v6960
        %v7035 = vadd.f32 %v6715, %v6962
        %v7036 = vadd.f32 %v6716, %v6964
        %v7037 = vadd.f32 %v6717, %v6966
        %v7038 = vadd.f32 %v6718, %v6968
        %v7039 = vadd.f32 %v6719, %v6970
        %v7040 = vadd.f32 %v6720, %v6972
        %v7041 = vadd.f32 %v6721, %v6974
        %v7042 = vadd.f32 %v6722, %v6976
        %v7043 = vadd.f32 %v6723, %v6978
        %v7044 = vadd.f32 %v6724, %v6980
        %v7045 = vtanh.pop %v7013
        %v7046 = vtanh.pop %v7014
        %v7047 = vtanh.pop %v7015
        %v7048 = vtanh.pop %v7016
        %v7049 = vtanh.pop %v7017
        %v7050 = vtanh.pop %v7018
        %v7051 = vtanh.pop %v7019
        %v7052 = vtanh.pop %v7020
        %v7053 = vtanh.pop %v7021
        %v7054 = vtanh.pop %v7022
        %v7055 = vtanh.pop %v7023
        %v7056 = vtanh.pop %v7024
        %v7057 = vtanh.pop %v7025
        %v7058 = vtanh.pop %v7026
        %v7059 = vtanh.pop %v7027
        %v7060 = vtanh.pop %v7028
        %v7061 = vtanh.pop %v7029
        %v7062 = vtanh.pop %v7030
        %v7063 = vtanh.pop %v7031
        %v7064 = vtanh.pop %v7032
        %v7065 = vtanh.pop %v7033
        %v7066 = vtanh.pop %v7034
        %v7067 = vtanh.pop %v7035
        %v7068 = vtanh.pop %v7036
        %v7069 = vtanh.pop %v7037
        %v7070 = vtanh.pop %v7038
        %v7071 = vtanh.pop %v7039
        %v7072 = vtanh.pop %v7040
        %v7073 = vtanh.pop %v7041
        %v7074 = vtanh.pop %v7042
        %v7075 = vtanh.pop %v7043
        %v7076 = vtanh.pop %v7044
        %7109 = vrot.lane.b32.xlu0 %v7045, 64
        %v7110 = vpop.permute.xlu0 %7109
        %7111 = vrot.lane.b32.xlu0 %v7046, 64
        %v7112 = vpop.permute.xlu0 %7111
        %7113 = vrot.lane.b32.xlu0 %v7047, 64
        %v7114 = vpop.permute.xlu0 %7113
        %7115 = vrot.lane.b32.xlu0 %v7048, 64
        %v7116 = vpop.permute.xlu0 %7115
        %7117 = vrot.lane.b32.xlu0 %v7049, 64
        %v7118 = vpop.permute.xlu0 %7117
        %7119 = vrot.lane.b32.xlu0 %v7050, 64
        %v7120 = vpop.permute.xlu0 %7119
        %7121 = vrot.lane.b32.xlu0 %v7051, 64
        %v7122 = vpop.permute.xlu0 %7121
        %7123 = vrot.lane.b32.xlu0 %v7052, 64
        %v7124 = vpop.permute.xlu0 %7123
        %7125 = vrot.lane.b32.xlu0 %v7053, 64
        %v7126 = vpop.permute.xlu0 %7125
        %7127 = vrot.lane.b32.xlu0 %v7054, 64
        %v7128 = vpop.permute.xlu0 %7127
        %7129 = vrot.lane.b32.xlu0 %v7055, 64
        %v7130 = vpop.permute.xlu0 %7129
        %7131 = vrot.lane.b32.xlu0 %v7056, 64
        %v7132 = vpop.permute.xlu0 %7131
        %7133 = vrot.lane.b32.xlu0 %v7057, 64
        %v7134 = vpop.permute.xlu0 %7133
        %7135 = vrot.lane.b32.xlu0 %v7058, 64
        %v7136 = vpop.permute.xlu0 %7135
        %7137 = vrot.lane.b32.xlu0 %v7059, 64
        %v7138 = vpop.permute.xlu0 %7137
        %7139 = vrot.lane.b32.xlu0 %v7060, 64
        %v7140 = vpop.permute.xlu0 %7139
        %7141 = vrot.lane.b32.xlu0 %v7061, 64
        %v7142 = vpop.permute.xlu0 %7141
        %7143 = vrot.lane.b32.xlu0 %v7062, 64
        %v7144 = vpop.permute.xlu0 %7143
        %7145 = vrot.lane.b32.xlu0 %v7063, 64
        %v7146 = vpop.permute.xlu0 %7145
        %7147 = vrot.lane.b32.xlu0 %v7064, 64
        %v7148 = vpop.permute.xlu0 %7147
        %7149 = vrot.lane.b32.xlu0 %v7065, 64
        %v7150 = vpop.permute.xlu0 %7149
        %7151 = vrot.lane.b32.xlu0 %v7066, 64
        %v7152 = vpop.permute.xlu0 %7151
        %7153 = vrot.lane.b32.xlu0 %v7067, 64
        %v7154 = vpop.permute.xlu0 %7153
        %7155 = vrot.lane.b32.xlu0 %v7068, 64
        %v7156 = vpop.permute.xlu0 %7155
        %7157 = vrot.lane.b32.xlu0 %v7069, 64
        %v7158 = vpop.permute.xlu0 %7157
        %7159 = vrot.lane.b32.xlu0 %v7070, 64
        %v7160 = vpop.permute.xlu0 %7159
        %7161 = vrot.lane.b32.xlu0 %v7071, 64
        %v7162 = vpop.permute.xlu0 %7161
        %7163 = vrot.lane.b32.xlu0 %v7072, 64
        %v7164 = vpop.permute.xlu0 %7163
        %7165 = vrot.lane.b32.xlu0 %v7073, 64
        %v7166 = vpop.permute.xlu0 %7165
        %7167 = vrot.lane.b32.xlu0 %v7074, 64
        %v7168 = vpop.permute.xlu0 %7167
        %7169 = vrot.lane.b32.xlu0 %v7075, 64
        %v7170 = vpop.permute.xlu0 %7169
        %7171 = vrot.lane.b32.xlu0 %v7076, 64
        %v7172 = vpop.permute.xlu0 %7171
        %v7205 = vmul.f32 %v6566, %v7110
        %v7206 = vmul.f32 %v6568, %v7112
        %v7207 = vmul.f32 %v6570, %v7114
        %v7208 = vmul.f32 %v6572, %v7116
        %v7209 = vmul.f32 %v6574, %v7118
        %v7210 = vmul.f32 %v6576, %v7120
        %v7211 = vmul.f32 %v6578, %v7122
        %v7212 = vmul.f32 %v6580, %v7124
        %v7213 = vmul.f32 %v6582, %v7126
        %v7214 = vmul.f32 %v6584, %v7128
        %v7215 = vmul.f32 %v6586, %v7130
        %v7216 = vmul.f32 %v6588, %v7132
        %v7217 = vmul.f32 %v6590, %v7134
        %v7218 = vmul.f32 %v6592, %v7136
        %v7219 = vmul.f32 %v6594, %v7138
        %v7220 = vmul.f32 %v6596, %v7140
        %v7221 = vmul.f32 %v6598, %v7142
        %v7222 = vmul.f32 %v6600, %v7144
        %v7223 = vmul.f32 %v6602, %v7146
        %v7224 = vmul.f32 %v6604, %v7148
        %v7225 = vmul.f32 %v6606, %v7150
        %v7226 = vmul.f32 %v6608, %v7152
        %v7227 = vmul.f32 %v6610, %v7154
        %v7228 = vmul.f32 %v6612, %v7156
        %v7229 = vmul.f32 %v6614, %v7158
        %v7230 = vmul.f32 %v6616, %v7160
        %v7231 = vmul.f32 %v6618, %v7162
        %v7232 = vmul.f32 %v6620, %v7164
        %v7233 = vmul.f32 %v6622, %v7166
        %v7234 = vmul.f32 %v6624, %v7168
        %v7235 = vmul.f32 %v6626, %v7170
        %v7236 = vmul.f32 %v6628, %v7172
        %7269 = vrot.lane.b32.xlu0 %v7205, 64
        %v7270 = vpop.permute.xlu0 %7269
        %7271 = vrot.lane.b32.xlu0 %v7206, 64
        %v7272 = vpop.permute.xlu0 %7271
        %7273 = vrot.lane.b32.xlu0 %v7207, 64
        %v7274 = vpop.permute.xlu0 %7273
        %7275 = vrot.lane.b32.xlu0 %v7208, 64
        %v7276 = vpop.permute.xlu0 %7275
        %7277 = vrot.lane.b32.xlu0 %v7209, 64
        %v7278 = vpop.permute.xlu0 %7277
        %7279 = vrot.lane.b32.xlu0 %v7210, 64
        %v7280 = vpop.permute.xlu0 %7279
        %7281 = vrot.lane.b32.xlu0 %v7211, 64
        %v7282 = vpop.permute.xlu0 %7281
        %7283 = vrot.lane.b32.xlu0 %v7212, 64
        %v7284 = vpop.permute.xlu0 %7283
        %7285 = vrot.lane.b32.xlu0 %v7213, 64
        %v7286 = vpop.permute.xlu0 %7285
        %7287 = vrot.lane.b32.xlu0 %v7214, 64
        %v7288 = vpop.permute.xlu0 %7287
        %7289 = vrot.lane.b32.xlu0 %v7215, 64
        %v7290 = vpop.permute.xlu0 %7289
        %7291 = vrot.lane.b32.xlu0 %v7216, 64
        %v7292 = vpop.permute.xlu0 %7291
        %7293 = vrot.lane.b32.xlu0 %v7217, 64
        %v7294 = vpop.permute.xlu0 %7293
        %7295 = vrot.lane.b32.xlu0 %v7218, 64
        %v7296 = vpop.permute.xlu0 %7295
        %7297 = vrot.lane.b32.xlu0 %v7219, 64
        %v7298 = vpop.permute.xlu0 %7297
        %7299 = vrot.lane.b32.xlu0 %v7220, 64
        %v7300 = vpop.permute.xlu0 %7299
        %7301 = vrot.lane.b32.xlu0 %v7221, 64
        %v7302 = vpop.permute.xlu0 %7301
        %7303 = vrot.lane.b32.xlu0 %v7222, 64
        %v7304 = vpop.permute.xlu0 %7303
        %7305 = vrot.lane.b32.xlu0 %v7223, 64
        %v7306 = vpop.permute.xlu0 %7305
        %7307 = vrot.lane.b32.xlu0 %v7224, 64
        %v7308 = vpop.permute.xlu0 %7307
        %7309 = vrot.lane.b32.xlu0 %v7225, 64
        %v7310 = vpop.permute.xlu0 %7309
        %7311 = vrot.lane.b32.xlu0 %v7226, 64
        %v7312 = vpop.permute.xlu0 %7311
        %7313 = vrot.lane.b32.xlu0 %v7227, 64
        %v7314 = vpop.permute.xlu0 %7313
        %7315 = vrot.lane.b32.xlu0 %v7228, 64
        %v7316 = vpop.permute.xlu0 %7315
        %7317 = vrot.lane.b32.xlu0 %v7229, 64
        %v7318 = vpop.permute.xlu0 %7317
        %7319 = vrot.lane.b32.xlu0 %v7230, 64
        %v7320 = vpop.permute.xlu0 %7319
        %7321 = vrot.lane.b32.xlu0 %v7231, 64
        %v7322 = vpop.permute.xlu0 %7321
        %7323 = vrot.lane.b32.xlu0 %v7232, 64
        %v7324 = vpop.permute.xlu0 %7323
        %7325 = vrot.lane.b32.xlu0 %v7233, 64
        %v7326 = vpop.permute.xlu0 %7325
        %7327 = vrot.lane.b32.xlu0 %v7234, 64
        %v7328 = vpop.permute.xlu0 %7327
        %7329 = vrot.lane.b32.xlu0 %v7235, 64
        %v7330 = vpop.permute.xlu0 %7329
        %7331 = vrot.lane.b32.xlu0 %v7236, 64
        %v7332 = vpop.permute.xlu0 %7331
        %vm7365 = vcmask 261120
        %7366 = vst.msk [vmem:[%s278] sm:$0xff] %vm7365, %v7270
        %7367 = vst.msk [vmem:[%s278 + $0x8] sm:$0xff] %vm7365, %v7272
        %7368 = vst.msk [vmem:[%s278 + $0x10] sm:$0xff] %vm7365, %v7274
        %7369 = vst.msk [vmem:[%s278 + $0x18] sm:$0xff] %vm7365, %v7276
        %7370 = vst.msk [vmem:[%s278 + $0x20] sm:$0xff] %vm7365, %v7278
        %7371 = vst.msk [vmem:[%s278 + $0x28] sm:$0xff] %vm7365, %v7280
        %7372 = vst.msk [vmem:[%s278 + $0x30] sm:$0xff] %vm7365, %v7282
        %7373 = vst.msk [vmem:[%s278 + $0x38] sm:$0xff] %vm7365, %v7284
        %7374 = vst.msk [vmem:[%s278 + $0x40] sm:$0xff] %vm7365, %v7286
        %7375 = vst.msk [vmem:[%s278 + $0x48] sm:$0xff] %vm7365, %v7288
        %7376 = vst.msk [vmem:[%s278 + $0x50] sm:$0xff] %vm7365, %v7290
        %7377 = vst.msk [vmem:[%s278 + $0x58] sm:$0xff] %vm7365, %v7292
        %7378 = vst.msk [vmem:[%s278 + $0x60] sm:$0xff] %vm7365, %v7294
        %7379 = vst.msk [vmem:[%s278 + $0x68] sm:$0xff] %vm7365, %v7296
        %7380 = vst.msk [vmem:[%s278 + $0x70] sm:$0xff] %vm7365, %v7298
        %7381 = vst.msk [vmem:[%s278 + $0x78] sm:$0xff] %vm7365, %v7300
        %7382 = vst.msk [vmem:[%s278 + $0x80] sm:$0xff] %vm7365, %v7302
        %7383 = vst.msk [vmem:[%s278 + $0x88] sm:$0xff] %vm7365, %v7304
        %7384 = vst.msk [vmem:[%s278 + $0x90] sm:$0xff] %vm7365, %v7306
        %7385 = vst.msk [vmem:[%s278 + $0x98] sm:$0xff] %vm7365, %v7308
        %7386 = vst.msk [vmem:[%s278 + $0xa0] sm:$0xff] %vm7365, %v7310
        %7387 = vst.msk [vmem:[%s278 + $0xa8] sm:$0xff] %vm7365, %v7312
        %7388 = vst.msk [vmem:[%s278 + $0xb0] sm:$0xff] %vm7365, %v7314
        %7389 = vst.msk [vmem:[%s278 + $0xb8] sm:$0xff] %vm7365, %v7316
        %7390 = vst.msk [vmem:[%s278 + $0xc0] sm:$0xff] %vm7365, %v7318
        %7391 = vst.msk [vmem:[%s278 + $0xc8] sm:$0xff] %vm7365, %v7320
        %7392 = vst.msk [vmem:[%s278 + $0xd0] sm:$0xff] %vm7365, %v7322
        %7393 = vst.msk [vmem:[%s278 + $0xd8] sm:$0xff] %vm7365, %v7324
        %7394 = vst.msk [vmem:[%s278 + $0xe0] sm:$0xff] %vm7365, %v7326
        %7395 = vst.msk [vmem:[%s278 + $0xe8] sm:$0xff] %vm7365, %v7328
        %7396 = vst.msk [vmem:[%s278 + $0xf0] sm:$0xff] %vm7365, %v7330
        %7397 = vst.msk [vmem:[%s278 + $0xf8] sm:$0xff] %vm7365, %v7332
        %7398 = vst.msk [vmem:[%s285] sm:$0xff] %vm7365, %v7013
        %7399 = vst.msk [vmem:[%s285 + $0x8] sm:$0xff] %vm7365, %v7014
        %7400 = vst.msk [vmem:[%s285 + $0x10] sm:$0xff] %vm7365, %v7015
        %7401 = vst.msk [vmem:[%s285 + $0x18] sm:$0xff] %vm7365, %v7016
        %7402 = vst.msk [vmem:[%s285 + $0x20] sm:$0xff] %vm7365, %v7017
        %7403 = vst.msk [vmem:[%s285 + $0x28] sm:$0xff] %vm7365, %v7018
        %7404 = vst.msk [vmem:[%s285 + $0x30] sm:$0xff] %vm7365, %v7019
        %7405 = vst.msk [vmem:[%s285 + $0x38] sm:$0xff] %vm7365, %v7020
        %7406 = vst.msk [vmem:[%s285 + $0x40] sm:$0xff] %vm7365, %v7021
        %7407 = vst.msk [vmem:[%s285 + $0x48] sm:$0xff] %vm7365, %v7022
        %7408 = vst.msk [vmem:[%s285 + $0x50] sm:$0xff] %vm7365, %v7023
        %7409 = vst.msk [vmem:[%s285 + $0x58] sm:$0xff] %vm7365, %v7024
        %7410 = vst.msk [vmem:[%s285 + $0x60] sm:$0xff] %vm7365, %v7025
        %7411 = vst.msk [vmem:[%s285 + $0x68] sm:$0xff] %vm7365, %v7026
        %7412 = vst.msk [vmem:[%s285 + $0x70] sm:$0xff] %vm7365, %v7027
        %7413 = vst.msk [vmem:[%s285 + $0x78] sm:$0xff] %vm7365, %v7028
        %7414 = vst.msk [vmem:[%s285 + $0x80] sm:$0xff] %vm7365, %v7029
        %7415 = vst.msk [vmem:[%s285 + $0x88] sm:$0xff] %vm7365, %v7030
        %7416 = vst.msk [vmem:[%s285 + $0x90] sm:$0xff] %vm7365, %v7031
        %7417 = vst.msk [vmem:[%s285 + $0x98] sm:$0xff] %vm7365, %v7032
        %7418 = vst.msk [vmem:[%s285 + $0xa0] sm:$0xff] %vm7365, %v7033
        %7419 = vst.msk [vmem:[%s285 + $0xa8] sm:$0xff] %vm7365, %v7034
        %7420 = vst.msk [vmem:[%s285 + $0xb0] sm:$0xff] %vm7365, %v7035
        %7421 = vst.msk [vmem:[%s285 + $0xb8] sm:$0xff] %vm7365, %v7036
        %7422 = vst.msk [vmem:[%s285 + $0xc0] sm:$0xff] %vm7365, %v7037
        %7423 = vst.msk [vmem:[%s285 + $0xc8] sm:$0xff] %vm7365, %v7038
        %7424 = vst.msk [vmem:[%s285 + $0xd0] sm:$0xff] %vm7365, %v7039
        %7425 = vst.msk [vmem:[%s285 + $0xd8] sm:$0xff] %vm7365, %v7040
        %7426 = vst.msk [vmem:[%s285 + $0xe0] sm:$0xff] %vm7365, %v7041
        %7427 = vst.msk [vmem:[%s285 + $0xe8] sm:$0xff] %vm7365, %v7042
        %7428 = vst.msk [vmem:[%s285 + $0xf0] sm:$0xff] %vm7365, %v7043
        %7429 = vst.msk [vmem:[%s285 + $0xf8] sm:$0xff] %vm7365, %v7044
        %s7430 = sand.u32 %s152, 1
        %s7431 = scalar_lea.sflag [#allocation4], %s7430
        %s7432 = sand.u32 %s152, 1
        %s7433 = smul.addr %s7432, 256
        %s7434 = scalar_lea.vmem [#allocation3], %s7433
        %s7435 = sand.u32 %s178, 1
        %s7436 = scalar_lea.sflag [#allocation6], %s7435
        %s7437 = sand.u32 %s178, 1
        %s7438 = smul.addr %s7437, 256
        %s7439 = scalar_lea.vmem [#allocation5], %s7438
        // Predicated region
        $region41: #{unit_conv_lstm_nhwc.1} parent=39 // pred_check
          %p7440 = pneg %p162
        $region42: #{unit_conv_lstm_nhwc.1} parent=39 // pred_check_branch
          %7442 = sbr.rel (%p7440) target = $region44
        $region43: #{unit_conv_lstm_nhwc.1} parent=39 // pred_region
          %s7444 = ssub.s32 4096, 4096
          %7445 = vsyncadd %s7431, %s7444
          %s7446 = smul.addr %s24, 32
          %s7447 = smul.addr %s7446, 128
          %s7448 = scalar_lea.hbm %s5, %s7447
          %s7449 = sshll.u32 %s7434, 4
          %s7450 = int_to_ptr.vmem [resolvable:$true] %s7449
          %7455 = dma.vmem_to_hbm [thread:$0]  %s7450, 4096, %s7448, %s7431, 128, 128, 8
        $region44: #{unit_conv_lstm_nhwc.1} parent=39 // pred_fallthru
          _
        // Predicated region
        $region45: #{unit_conv_lstm_nhwc.1} parent=39 // pred_check
          %p7456 = pneg %p188
        $region46: #{unit_conv_lstm_nhwc.1} parent=39 // pred_check_branch
          %7458 = sbr.rel (%p7456) target = $region48
        $region47: #{unit_conv_lstm_nhwc.1} parent=39 // pred_region
          %s7460 = ssub.s32 4096, 4096
          %7461 = vsyncadd %s7436, %s7460
          %s7462 = smul.addr %s24, 32
          %s7463 = smul.addr %s7462, 128
          %s7464 = scalar_lea.hbm %s6, %s7463
          %s7465 = sshll.u32 %s7439, 4
          %s7466 = int_to_ptr.vmem [resolvable:$true] %s7465
          %7471 = dma.vmem_to_hbm [thread:$0]  %s7466, 4096, %s7464, %s7436, 128, 128, 8
        $region48: #{unit_conv_lstm_nhwc.1} parent=39 // pred_fallthru
          _
      $region40: #{unit_conv_lstm_nhwc.1} parent=5 // pred_fallthru
        _
      %p7472 = scmp.le.s32.totalorder 2, %s19
      // Predicated region
      $region49: #{unit_conv_lstm_nhwc.1} parent=5 // pred_check
        %p7473 = pneg %p7472
      $region50: #{unit_conv_lstm_nhwc.1} parent=5 // pred_check_branch
        %7475 = sbr.rel (%p7473) target = $region52
      $region51: #{unit_conv_lstm_nhwc.1} parent=5 // pred_region
        %s7476 = ssub.s32 %s19, 2
        // Predicated region
        $region53: #{unit_conv_lstm_nhwc.1} parent=51 // pred_check
          %p7477 = pneg %p168
        $region54: #{unit_conv_lstm_nhwc.1} parent=51 // pred_check_branch
          %7479 = sbr.rel (%p7477) target = $region56
        $region55: #{unit_conv_lstm_nhwc.1} parent=51 // pred_region
          %s7480 = sand.u32 %s153, 1
          %s7481 = scalar_lea.sflag [#allocation4], %s7480
          %s7482 = sand.u32 %s153, 1
          %s7483 = smul.addr %s7482, 256
          %s7484 = scalar_lea.vmem [#allocation3], %s7483
          %7485 = dma.done %s7481, 4096
        $region56: #{unit_conv_lstm_nhwc.1} parent=51 // pred_fallthru
          _
        // Predicated region
        $region57: #{unit_conv_lstm_nhwc.1} parent=51 // pred_check
          %p7486 = pneg %p194
        $region58: #{unit_conv_lstm_nhwc.1} parent=51 // pred_check_branch
          %7488 = sbr.rel (%p7486) target = $region60
        $region59: #{unit_conv_lstm_nhwc.1} parent=51 // pred_region
          %s7489 = sand.u32 %s179, 1
          %s7490 = scalar_lea.sflag [#allocation6], %s7489
          %s7491 = sand.u32 %s179, 1
          %s7492 = smul.addr %s7491, 256
          %s7493 = scalar_lea.vmem [#allocation5], %s7492
          %7494 = dma.done %s7490, 4096
        $region60: #{unit_conv_lstm_nhwc.1} parent=51 // pred_fallthru
          _
      $region52: #{unit_conv_lstm_nhwc.1} parent=5 // pred_fallthru
        _
    $region6: #{unit_conv_lstm_nhwc.1} parent=1 // loop_footer
      %s23 = sadd.s32 1, %s19
    $region7: #{unit_conv_lstm_nhwc.1} parent=1 // loop_footer_branch
      %18 = sbr.rel target = $region3
    $region8: #{unit_conv_lstm_nhwc.1} parent=1 // loop_exit
      _
    %7495 = vsyncpa [#allocation4], 1
    %s7496 = scalar_lea.sflag [#allocation4], 1
    %7497 = vsyncpa %s7496, 1
    %7498 = vsyncpa [#allocation6], 1
    %s7499 = scalar_lea.sflag [#allocation6], 1
    %7500 = vsyncpa %s7499, 1

</llo_original>
